<compile_context>
chip_gen: v6e
topology: v6e:2x2x1
jax: 0.10.0
libtpu: 0.0.40
codegen_flags: <defaults>
</compile_context>

<pallas_src>
import numpy as np
import jax
import jax.numpy as jnp
from jax import lax
from jax.experimental import pallas as pl
from jax.experimental.pallas import tpu as pltpu


# ----------------------------------------------------------------------------
# Pallas kernel (B batch samples per grid step).
# ----------------------------------------------------------------------------
def _make_kernel(H, W, C, levels, batch_block):
    HW = H * W
    Hq, Wq = H // 2, W // 2
    HWq = Hq * Wq

    def kernel(x_ref, wblk_ref, wd_ref, bd_ref, psel_ref, o_ref, im2col_ref):
        # Boundary masks, shape (1, HW): broadcast over channels inside jnp.where
        # instead of materializing (C, HW) masks.
        lane = lax.broadcasted_iota(jnp.int32, (1, HW), 1)
        if (W & (W - 1)) == 0:
            col = lane & (W - 1)
        else:
            col = lane % W
        col_first = col == 0
        col_last = col == (W - 1)
        row_first = lane < W
        row_last = lane >= (H - 1) * W

        def w_taps(a):
            # a[h, refl(w + dw)] for dw = -1, 0, +1 in the flat (C, HW) layout.
            right = pltpu.roll(a, 1, 1)       # a[h, w-1]  (wrong at w == 0)
            left = pltpu.roll(a, HW - 1, 1)   # a[h, w+1]  (wrong at w == W-1)
            return (jnp.where(col_first, left, right),   # dw = -1, reflect -> a[h, 1]
                    a,                                    # dw =  0
                    jnp.where(col_last, right, left))    # dw = +1, reflect -> a[h, W-2]

        def h_taps(a):
            # a[refl(h + dh), w] for dh = -1, 0, +1.
            down = pltpu.roll(a, W, 1)        # a[h-1, w]  (wrong at h == 0)
            up = pltpu.roll(a, HW - W, 1)     # a[h+1, w]  (wrong at h == H-1)
            return (jnp.where(row_first, up, down),      # dh = -1, reflect -> a[1, w]
                    a,                                    # dh =  0
                    jnp.where(row_last, down, up))       # dh = +1, reflect -> a[H-2, w]

        def fill_im2col(a):
            # Incrementally fill the (9C, HW) f32 VMEM scratch; tap block index is
            # (ki*3 + kj) to match the host-side weight packing.
            wv = w_taps(a)                                # j indexes dw = -1, 0, +1
            for j in range(3):
                hv = h_taps(wv[j])                        # i indexes dh = -1, 0, +1
                for i in range(3):
                    im2col_ref[pl.ds((i * 3 + j) * C, C), :] = hv[i]

        def conv3x3(a, w):
            # a: (Cin, HW) f32, w: (Cout, 9*Cin) bf16 -> (Cout, HW) f32.
            fill_im2col(a)
            return jnp.dot(w, im2col_ref[...].astype(jnp.bfloat16),
                           preferred_element_type=jnp.float32)

        def instance_norm(y, eps):
            # Single-pass stats: sum and sum-of-squares together; f32 accumulation.
            inv_n = 1.0 / HW
            mu = jnp.sum(y, axis=1, keepdims=True) * inv_n
            ex2 = jnp.sum(y * y, axis=1, keepdims=True) * inv_n
            var = jnp.maximum(ex2 - mu * mu, 0.0)
            return (y - mu) * lax.rsqrt(var + eps)

        for b in range(batch_block):
            x = x_ref[b]                                   # (C, HW) f32
            h = x
            for lvl in range(levels):
                # Conv biases omitted: InstanceNorm(affine=False) cancels them exactly.
                y = instance_norm(conv3x3(h, wblk_ref[2 * lvl]), 1e-5)
                y = jnp.where(y >= 0, y, 0.01 * y)         # LeakyReLU(0.01)
                z = instance_norm(conv3x3(y, wblk_ref[2 * lvl + 1]), 1e-5)
                h = h + z
            out = instance_norm(x + h, 1e-6)               # ResnetBlock skip + head IN

            # Downsample head: build the full-res im2col once, compact its columns to
            # the stride-2 output positions with a one-hot selection matmul (exact in
            # bf16), then one (2C, 9C) x (9C, HWq) matmul + bias.
            fill_im2col(out)
            im2c = jnp.dot(im2col_ref[...].astype(jnp.bfloat16), psel_ref[...],
                           preferred_element_type=jnp.float32)        # (9C, HWq)
            yd = jnp.dot(wd_ref[...], im2c.astype(jnp.bfloat16),
                         preferred_element_type=jnp.float32) + bd_ref[...]
            o_ref[b] = yd.astype(o_ref.dtype)              # (2C, HWq)

    return kernel


# ----------------------------------------------------------------------------
# Host-side helpers.
# ----------------------------------------------------------------------------
def _pack_conv_weight(w):
    # (Cout, Cin, 3, 3) -> (Cout, 9*Cin), tap-major / channel-minor, matching the
    # kernel's im2col stacking order (index = (ki*3 + kj)*Cin + ci).
    co, ci, kh, kw = w.shape
    return jnp.transpose(w, (0, 2, 3, 1)).reshape(co, kh * kw * ci)


def _build_stride2_selector(H, W):
    # One-hot (HW, HWq) selector: column q picks flat source index 2*h2*W + 2*w2.
    HW = H * W
    Hq, Wq = H // 2, W // 2
    HWq = Hq * Wq
    q = np.arange(HWq)
    src = 2 * (q // Wq) * W + 2 * (q % Wq)
    sel = np.zeros((HW, HWq), np.float32)
    sel[src, q] = 1.0
    return jnp.asarray(sel, dtype=jnp.bfloat16)   # 0/1 values are exact in bf16


def resnet_block_forward(x_nchw, block_w1, block_w2, wd, bd, samples_per_step=None):
    """ResnetBlock(dim=C, levels=len(block_w1), down=True, first=False, bn=False).

    block_w1/block_w2: per-Block first/second 3x3 conv weights (their biases are
    mathematically cancelled by the following InstanceNorm and therefore not taken).
    wd: (2C, C, 3, 3) downsample conv weight, bd: (2C,) its bias.
    """
    N, C, H, W = x_nchw.shape
    assert H % 2 == 0 and W % 2 == 0, "stride-2 downsample expects even H, W"
    HW = H * W
    Hq, Wq = H // 2, W // 2
    HWq = Hq * Wq
    levels = len(block_w1)

    # Samples per grid step: amortize per-step overhead while keeping >= 2 grid steps
    # (so dimension_semantics=('parallel',) can feed both v7x TensorCores), and keep
    # the double-buffered input block comfortably inside VMEM.
    if samples_per_step is None:
        B = max(1, N // 2)
        while N % B:
            B -= 1
        while B > 1 and B * C * HW * 4 > (4 << 20):
            B -= 1
            while N % B:
                B -= 1
    else:
        B = int(samples_per_step)
    assert N % B == 0
    grid_len = N // B

    x_flat = x_nchw.reshape(N, C, HW)                      # pure reshape, no transpose

    w_blocks = jnp.stack(
        [_pack_conv_weight(w) for pair in zip(block_w1, block_w2) for w in pair],
        axis=0).astype(jnp.bfloat16)                       # (2*levels, C, 9C)
    wd_p = _pack_conv_weight(wd).astype(jnp.bfloat16)      # (2C, 9C)
    bd_p = bd.reshape(2 * C, 1).astype(jnp.float32)        # (2C, 1)
    p_sel = _build_stride2_selector(H, W)                  # (HW, HWq) one-hot

    kernel = _make_kernel(H, W, C, levels, B)
    out_flat = pl.pallas_call(
        kernel,
        out_shape=jax.ShapeDtypeStruct((N, 2 * C, HWq), jnp.float32),
        grid=(grid_len,),
        in_specs=[
            pl.BlockSpec((B, C, HW), lambda g: (g, 0, 0)),              # B samples/step
            pl.BlockSpec((2 * levels, C, 9 * C), lambda g: (0, 0, 0)),  # block weights
            pl.BlockSpec((2 * C, 9 * C), lambda g: (0, 0)),             # downsample w
            pl.BlockSpec((2 * C, 1), lambda g: (0, 0)),                 # downsample b
            pl.BlockSpec((HW, HWq), lambda g: (0, 0)),                  # stride-2 selector
        ],
        out_specs=pl.BlockSpec((B, 2 * C, HWq), lambda g: (g, 0, 0)),
        scratch_shapes=[pltpu.VMEM((9 * C, HW), jnp.float32)],          # im2col scratch
        compiler_params=pltpu.CompilerParams(
            dimension_semantics=("parallel",),
            vmem_limit_bytes=32 * 1024 * 1024),
    )(x_flat, w_blocks, wd_p, bd_p, p_sel)

    return out_flat.reshape(N, 2 * C, Hq, Wq)              # pure reshape


# ----------------------------------------------------------------------------
# Pure-JAX reference (validation only; includes the cancelled block biases).
# ----------------------------------------------------------------------------
def resnet_block_reference(x, block_w1, block_b1, block_w2, block_b2, wd, bd):
    def conv(a, w, b, stride=1):
        ap = jnp.pad(a, ((0, 0), (0, 0), (1, 1), (1, 1)), mode="reflect")
        y = lax.conv_general_dilated(
            ap, w, (stride, stride), "VALID",
            dimension_numbers=("NCHW", "OIHW", "NCHW"),
            precision=lax.Precision.HIGHEST)
        return y + b[None, :, None, None]

    def inorm(y, eps):
        mu = y.mean(axis=(2, 3), keepdims=True)
        var = ((y - mu) ** 2).mean(axis=(2, 3), keepdims=True)
        return (y - mu) * lax.rsqrt(var + eps)

    h = x
    for w1, b1, w2, b2 in zip(block_w1, block_b1, block_w2, block_b2):
        y = inorm(conv(h, w1, b1), 1e-5)
        y = jnp.where(y >= 0, y, 0.01 * y)
        z = inorm(conv(y, w2, b2), 1e-5)
        h = h + z
    out = x + h
    out = inorm(out, 1e-6)
    return conv(out, wd, bd, stride=2)


if __name__ == "__main__":
    N, C, H, W = 4, 8, 16, 16          # ResnetBlock(dim=8), defaults: levels=3, down=True
    levels = 3

    key = jax.random.PRNGKey(0)
    keys = jax.random.split(key, 4 * levels + 3)
    x = jax.random.normal(keys[0], (N, C, H, W), dtype=jnp.float32)

    scale = 1.0 / np.sqrt(C * 9)
    block_w1, block_b1, block_w2, block_b2 = [], [], [], []
    for i in range(levels):
        k = keys[1 + 4 * i: 1 + 4 * (i + 1)]
        block_w1.append(scale * jax.random.normal(k[0], (C, C, 3, 3), jnp.float32))
        block_b1.append(scale * jax.random.normal(k[1], (C,), jnp.float32))
        block_w2.append(scale * jax.random.normal(k[2], (C, C, 3, 3), jnp.float32))
        block_b2.append(scale * jax.random.normal(k[3], (C,), jnp.float32))
    wd = scale * jax.random.normal(keys[-2], (2 * C, C, 3, 3), jnp.float32)
    bd = scale * jax.random.normal(keys[-1], (2 * C,), jnp.float32)

    out = jax.block_until_ready(resnet_block_forward(x, block_w1, block_w2, wd, bd))
    ref = jax.block_until_ready(
        resnet_block_reference(x, block_w1, block_b1, block_w2, block_b2, wd, bd))

    assert out.shape == (N, 2 * C, H // 2, W // 2), out.shape
    # bf16 MXU operands (f32 accumulation, f32 InstanceNorm statistics): expected max
    # abs error over this 7-conv chain is ~1e-2 on O(1)-scale outputs.
    np.testing.assert_allclose(np.asarray(out), np.asarray(ref), rtol=2e-2, atol=3e-2)

    print("KERNEL_OK")
</pallas_src>

<mosaic_0001>
module attributes {stable_mosaic.version = 11 : i64} {
  func.func @kernel(%arg0: i32, %arg1: memref<2x8x256xf32, #tpu.memory_space<vmem>>, %arg2: memref<6x8x72xbf16, #tpu.memory_space<vmem>>, %arg3: memref<16x72xbf16, #tpu.memory_space<vmem>>, %arg4: memref<16x1xf32, #tpu.memory_space<vmem>>, %arg5: memref<256x64xbf16, #tpu.memory_space<vmem>>, %arg6: memref<2x16x64xf32, #tpu.memory_space<vmem>>, %arg7: memref<72x256xf32, #tpu.memory_space<vmem>>) attributes {dimension_semantics = [#tpu.dimension_semantics<parallel>], iteration_bounds = array<i64: 2>, scalar_prefetch = 0 : i64, scratch_operands = 1 : i64, tpu.core_type = #tpu.core_type<tc>, window_params = [{transform_indices = @transform_0, window_bounds = array<i64: 2, 8, 256>}, {pipeline_mode = #tpu.pipeline_mode<synchronous>, transform_indices = @transform_1, window_bounds = array<i64: 6, 8, 72>}, {pipeline_mode = #tpu.pipeline_mode<synchronous>, transform_indices = @transform_2, window_bounds = array<i64: 16, 72>}, {pipeline_mode = #tpu.pipeline_mode<synchronous>, transform_indices = @transform_3, window_bounds = array<i64: 16, 1>}, {pipeline_mode = #tpu.pipeline_mode<synchronous>, transform_indices = @transform_4, window_bounds = array<i64: 256, 64>}, {transform_indices = @transform_5, window_bounds = array<i64: 2, 16, 64>}]} {
    %0 = tpu.iota {dimensions = array<i32: 1>} : vector<1x256xi32>
    %c15_i32 = arith.constant 15 : i32
    %1 = vector.broadcast %c15_i32 : i32 to vector<1x256xi32>
    %2 = arith.andi %0, %1 : vector<1x256xi32>
    %c0_i32 = arith.constant 0 : i32
    %3 = vector.broadcast %c0_i32 : i32 to vector<1x256xi32>
    %4 = arith.cmpi eq, %2, %3 : vector<1x256xi32>
    %c15_i32_0 = arith.constant 15 : i32
    %5 = vector.broadcast %c15_i32_0 : i32 to vector<1x256xi32>
    %6 = arith.cmpi eq, %2, %5 : vector<1x256xi32>
    %c16_i32 = arith.constant 16 : i32
    %7 = vector.broadcast %c16_i32 : i32 to vector<1x256xi32>
    %8 = arith.cmpi slt, %0, %7 : vector<1x256xi32>
    %c240_i32 = arith.constant 240 : i32
    %9 = vector.broadcast %c240_i32 : i32 to vector<1x256xi32>
    %10 = arith.cmpi sge, %0, %9 : vector<1x256xi32>
    %c0 = arith.constant 0 : index
    %c0_1 = arith.constant 0 : index
    %c0_2 = arith.constant 0 : index
    %11 = vector.load %arg1[%c0, %c0_1, %c0_2] : memref<2x8x256xf32, #tpu.memory_space<vmem>>, vector<1x8x256xf32>
    %12 = vector.shape_cast %11 : vector<1x8x256xf32> to vector<8x256xf32>
    %c0_3 = arith.constant 0 : index
    %c0_4 = arith.constant 0 : index
    %c0_5 = arith.constant 0 : index
    %13 = vector.load %arg2[%c0_3, %c0_4, %c0_5] : memref<6x8x72xbf16, #tpu.memory_space<vmem>>, vector<1x8x72xbf16>
    %14 = vector.shape_cast %13 : vector<1x8x72xbf16> to vector<8x72xbf16>
    %c1_i32 = arith.constant 1 : i32
    %15 = tpu.dynamic_rotate %12 by %c1_i32 dim 1 : vector<8x256xf32>, i32 -> vector<8x256xf32>
    %c255_i32 = arith.constant 255 : i32
    %16 = tpu.dynamic_rotate %12 by %c255_i32 dim 1 : vector<8x256xf32>, i32 -> vector<8x256xf32>
    %17 = vector.shape_cast %4 : vector<1x256xi1> to vector<1x256xi1>
    %18 = vector.broadcast %17 : vector<1x256xi1> to vector<8x256xi1>
    %19 = arith.select %18, %16, %15 : vector<8x256xi1>, vector<8x256xf32>
    %20 = vector.shape_cast %6 : vector<1x256xi1> to vector<1x256xi1>
    %21 = vector.broadcast %20 : vector<1x256xi1> to vector<8x256xi1>
    %22 = arith.select %21, %15, %16 : vector<8x256xi1>, vector<8x256xf32>
    %c16_i32_6 = arith.constant 16 : i32
    %23 = tpu.dynamic_rotate %19 by %c16_i32_6 dim 1 : vector<8x256xf32>, i32 -> vector<8x256xf32>
    %c240_i32_7 = arith.constant 240 : i32
    %24 = tpu.dynamic_rotate %19 by %c240_i32_7 dim 1 : vector<8x256xf32>, i32 -> vector<8x256xf32>
    %25 = vector.shape_cast %8 : vector<1x256xi1> to vector<1x256xi1>
    %26 = vector.broadcast %25 : vector<1x256xi1> to vector<8x256xi1>
    %27 = arith.select %26, %24, %23 : vector<8x256xi1>, vector<8x256xf32>
    %28 = vector.shape_cast %10 : vector<1x256xi1> to vector<1x256xi1>
    %29 = vector.broadcast %28 : vector<1x256xi1> to vector<8x256xi1>
    %30 = arith.select %29, %23, %24 : vector<8x256xi1>, vector<8x256xf32>
    %c0_8 = arith.constant 0 : index
    %c0_9 = arith.constant 0 : index
    %31 = vector.load %arg7[%c0_8, %c0_9] : memref<72x256xf32, #tpu.memory_space<vmem>>, vector<8x256xf32>
    tpu.vector_store %arg7[%c0_8, %c0_9], %27 {strides = array<i32>} : memref<72x256xf32, #tpu.memory_space<vmem>>, vector<8x256xf32>,
    %c24 = arith.constant 24 : index
    %c0_10 = arith.constant 0 : index
    %32 = vector.load %arg7[%c24, %c0_10] : memref<72x256xf32, #tpu.memory_space<vmem>>, vector<8x256xf32>
    tpu.vector_store %arg7[%c24, %c0_10], %19 {strides = array<i32>} : memref<72x256xf32, #tpu.memory_space<vmem>>, vector<8x256xf32>,
    %c48 = arith.constant 48 : index
    %c0_11 = arith.constant 0 : index
    %33 = vector.load %arg7[%c48, %c0_11] : memref<72x256xf32, #tpu.memory_space<vmem>>, vector<8x256xf32>
    tpu.vector_store %arg7[%c48, %c0_11], %30 {strides = array<i32>} : memref<72x256xf32, #tpu.memory_space<vmem>>, vector<8x256xf32>,
    %c16_i32_12 = arith.constant 16 : i32
    %34 = tpu.dynamic_rotate %12 by %c16_i32_12 dim 1 : vector<8x256xf32>, i32 -> vector<8x256xf32>
    %c240_i32_13 = arith.constant 240 : i32
    %35 = tpu.dynamic_rotate %12 by %c240_i32_13 dim 1 : vector<8x256xf32>, i32 -> vector<8x256xf32>
    %36 = vector.shape_cast %8 : vector<1x256xi1> to vector<1x256xi1>
    %37 = vector.broadcast %36 : vector<1x256xi1> to vector<8x256xi1>
    %38 = arith.select %37, %35, %34 : vector<8x256xi1>, vector<8x256xf32>
    %39 = vector.shape_cast %10 : vector<1x256xi1> to vector<1x256xi1>
    %40 = vector.broadcast %39 : vector<1x256xi1> to vector<8x256xi1>
    %41 = arith.select %40, %34, %35 : vector<8x256xi1>, vector<8x256xf32>
    %c8 = arith.constant 8 : index
    %c0_14 = arith.constant 0 : index
    %42 = vector.load %arg7[%c8, %c0_14] : memref<72x256xf32, #tpu.memory_space<vmem>>, vector<8x256xf32>
    tpu.vector_store %arg7[%c8, %c0_14], %38 {strides = array<i32>} : memref<72x256xf32, #tpu.memory_space<vmem>>, vector<8x256xf32>,
    %c32 = arith.constant 32 : index
    %c0_15 = arith.constant 0 : index
    %43 = vector.load %arg7[%c32, %c0_15] : memref<72x256xf32, #tpu.memory_space<vmem>>, vector<8x256xf32>
    tpu.vector_store %arg7[%c32, %c0_15], %12 {strides = array<i32>} : memref<72x256xf32, #tpu.memory_space<vmem>>, vector<8x256xf32>,
    %c56 = arith.constant 56 : index
    %c0_16 = arith.constant 0 : index
    %44 = vector.load %arg7[%c56, %c0_16] : memref<72x256xf32, #tpu.memory_space<vmem>>, vector<8x256xf32>
    tpu.vector_store %arg7[%c56, %c0_16], %41 {strides = array<i32>} : memref<72x256xf32, #tpu.memory_space<vmem>>, vector<8x256xf32>,
    %c16_i32_17 = arith.constant 16 : i32
    %45 = tpu.dynamic_rotate %22 by %c16_i32_17 dim 1 : vector<8x256xf32>, i32 -> vector<8x256xf32>
    %c240_i32_18 = arith.constant 240 : i32
    %46 = tpu.dynamic_rotate %22 by %c240_i32_18 dim 1 : vector<8x256xf32>, i32 -> vector<8x256xf32>
    %47 = vector.shape_cast %8 : vector<1x256xi1> to vector<1x256xi1>
    %48 = vector.broadcast %47 : vector<1x256xi1> to vector<8x256xi1>
    %49 = arith.select %48, %46, %45 : vector<8x256xi1>, vector<8x256xf32>
    %50 = vector.shape_cast %10 : vector<1x256xi1> to vector<1x256xi1>
    %51 = vector.broadcast %50 : vector<1x256xi1> to vector<8x256xi1>
    %52 = arith.select %51, %45, %46 : vector<8x256xi1>, vector<8x256xf32>
    %c16 = arith.constant 16 : index
    %c0_19 = arith.constant 0 : index
    %53 = vector.load %arg7[%c16, %c0_19] : memref<72x256xf32, #tpu.memory_space<vmem>>, vector<8x256xf32>
    tpu.vector_store %arg7[%c16, %c0_19], %49 {strides = array<i32>} : memref<72x256xf32, #tpu.memory_space<vmem>>, vector<8x256xf32>,
    %c40 = arith.constant 40 : index
    %c0_20 = arith.constant 0 : index
    %54 = vector.load %arg7[%c40, %c0_20] : memref<72x256xf32, #tpu.memory_space<vmem>>, vector<8x256xf32>
    tpu.vector_store %arg7[%c40, %c0_20], %22 {strides = array<i32>} : memref<72x256xf32, #tpu.memory_space<vmem>>, vector<8x256xf32>,
    %c64 = arith.constant 64 : index
    %c0_21 = arith.constant 0 : index
    %55 = vector.load %arg7[%c64, %c0_21] : memref<72x256xf32, #tpu.memory_space<vmem>>, vector<8x256xf32>
    tpu.vector_store %arg7[%c64, %c0_21], %52 {strides = array<i32>} : memref<72x256xf32, #tpu.memory_space<vmem>>, vector<8x256xf32>,
    %c0_22 = arith.constant 0 : index
    %c0_23 = arith.constant 0 : index
    %56 = vector.load %arg7[%c0_22, %c0_23] : memref<72x256xf32, #tpu.memory_space<vmem>>, vector<72x256xf32>
    %57 = arith.truncf %56 : vector<72x256xf32> to vector<72x256xbf16>
    %cst = arith.constant dense<0.000000e+00> : vector<8x256xf32>
    %58 = tpu.matmul %14, %57, %cst {dimension_numbers = #tpu.dot_dimension_numbers<[1], [0], [0], [1], [0, 0, 1, 1], [], []>} : vector<8x72xbf16>, vector<72x256xbf16>, vector<8x256xf32> -> vector<8x256xf32>
    %cst_24 = arith.constant dense<0.000000e+00> : vector<8xf32>
    %59 = vector.multi_reduction <add>, %58, %cst_24 [1] : vector<8x256xf32> to vector<8xf32>
    %60 = vector.shape_cast %59 : vector<8xf32> to vector<8x1xf32>
    %cst_25 = arith.constant 3.906250e-03 : f32
    %61 = vector.broadcast %cst_25 : f32 to vector<8x1xf32>
    %62 = arith.mulf %60, %61 : vector<8x1xf32>
    %63 = arith.mulf %58, %58 : vector<8x256xf32>
    %cst_26 = arith.constant dense<0.000000e+00> : vector<8xf32>
    %64 = vector.multi_reduction <add>, %63, %cst_26 [1] : vector<8x256xf32> to vector<8xf32>
    %65 = vector.shape_cast %64 : vector<8xf32> to vector<8x1xf32>
    %cst_27 = arith.constant 3.906250e-03 : f32
    %66 = vector.broadcast %cst_27 : f32 to vector<8x1xf32>
    %67 = arith.mulf %65, %66 : vector<8x1xf32>
    %68 = arith.mulf %62, %62 : vector<8x1xf32>
    %69 = arith.subf %67, %68 : vector<8x1xf32>
    %cst_28 = arith.constant 0.000000e+00 : f32
    %70 = vector.broadcast %cst_28 : f32 to vector<8x1xf32>
    %71 = arith.maximumf %69, %70 : vector<8x1xf32>
    %72 = vector.broadcast %62 : vector<8x1xf32> to vector<8x256xf32>
    %73 = arith.subf %58, %72 : vector<8x256xf32>
    %cst_29 = arith.constant 9.99999974E-6 : f32
    %74 = vector.broadcast %cst_29 : f32 to vector<8x1xf32>
    %75 = arith.addf %71, %74 : vector<8x1xf32>
    %76 = math.rsqrt %75 : vector<8x1xf32>
    %77 = vector.broadcast %76 : vector<8x1xf32> to vector<8x256xf32>
    %78 = arith.mulf %73, %77 : vector<8x256xf32>
    %cst_30 = arith.constant 0.000000e+00 : f32
    %79 = vector.broadcast %cst_30 : f32 to vector<8x256xf32>
    %80 = arith.cmpf oge, %78, %79 : vector<8x256xf32>
    %cst_31 = arith.constant 0.00999999977 : f32
    %81 = vector.broadcast %cst_31 : f32 to vector<8x256xf32>
    %82 = arith.mulf %81, %78 : vector<8x256xf32>
    %83 = arith.select %80, %78, %82 : vector<8x256xi1>, vector<8x256xf32>
    %c1 = arith.constant 1 : index
    %c0_32 = arith.constant 0 : index
    %c0_33 = arith.constant 0 : index
    %84 = vector.load %arg2[%c1, %c0_32, %c0_33] : memref<6x8x72xbf16, #tpu.memory_space<vmem>>, vector<1x8x72xbf16>
    %85 = vector.shape_cast %84 : vector<1x8x72xbf16> to vector<8x72xbf16>
    %c1_i32_34 = arith.constant 1 : i32
    %86 = tpu.dynamic_rotate %83 by %c1_i32_34 dim 1 : vector<8x256xf32>, i32 -> vector<8x256xf32>
    %c255_i32_35 = arith.constant 255 : i32
    %87 = tpu.dynamic_rotate %83 by %c255_i32_35 dim 1 : vector<8x256xf32>, i32 -> vector<8x256xf32>
    %88 = vector.shape_cast %4 : vector<1x256xi1> to vector<1x256xi1>
    %89 = vector.broadcast %88 : vector<1x256xi1> to vector<8x256xi1>
    %90 = arith.select %89, %87, %86 : vector<8x256xi1>, vector<8x256xf32>
    %91 = vector.shape_cast %6 : vector<1x256xi1> to vector<1x256xi1>
    %92 = vector.broadcast %91 : vector<1x256xi1> to vector<8x256xi1>
    %93 = arith.select %92, %86, %87 : vector<8x256xi1>, vector<8x256xf32>
    %c16_i32_36 = arith.constant 16 : i32
    %94 = tpu.dynamic_rotate %90 by %c16_i32_36 dim 1 : vector<8x256xf32>, i32 -> vector<8x256xf32>
    %c240_i32_37 = arith.constant 240 : i32
    %95 = tpu.dynamic_rotate %90 by %c240_i32_37 dim 1 : vector<8x256xf32>, i32 -> vector<8x256xf32>
    %96 = vector.shape_cast %8 : vector<1x256xi1> to vector<1x256xi1>
    %97 = vector.broadcast %96 : vector<1x256xi1> to vector<8x256xi1>
    %98 = arith.select %97, %95, %94 : vector<8x256xi1>, vector<8x256xf32>
    %99 = vector.shape_cast %10 : vector<1x256xi1> to vector<1x256xi1>
    %100 = vector.broadcast %99 : vector<1x256xi1> to vector<8x256xi1>
    %101 = arith.select %100, %94, %95 : vector<8x256xi1>, vector<8x256xf32>
    %c0_38 = arith.constant 0 : index
    %c0_39 = arith.constant 0 : index
    %102 = vector.load %arg7[%c0_38, %c0_39] : memref<72x256xf32, #tpu.memory_space<vmem>>, vector<8x256xf32>
    tpu.vector_store %arg7[%c0_38, %c0_39], %98 {strides = array<i32>} : memref<72x256xf32, #tpu.memory_space<vmem>>, vector<8x256xf32>,
    %c24_40 = arith.constant 24 : index
    %c0_41 = arith.constant 0 : index
    %103 = vector.load %arg7[%c24_40, %c0_41] : memref<72x256xf32, #tpu.memory_space<vmem>>, vector<8x256xf32>
    tpu.vector_store %arg7[%c24_40, %c0_41], %90 {strides = array<i32>} : memref<72x256xf32, #tpu.memory_space<vmem>>, vector<8x256xf32>,
    %c48_42 = arith.constant 48 : index
    %c0_43 = arith.constant 0 : index
    %104 = vector.load %arg7[%c48_42, %c0_43] : memref<72x256xf32, #tpu.memory_space<vmem>>, vector<8x256xf32>
    tpu.vector_store %arg7[%c48_42, %c0_43], %101 {strides = array<i32>} : memref<72x256xf32, #tpu.memory_space<vmem>>, vector<8x256xf32>,
    %c16_i32_44 = arith.constant 16 : i32
    %105 = tpu.dynamic_rotate %83 by %c16_i32_44 dim 1 : vector<8x256xf32>, i32 -> vector<8x256xf32>
    %c240_i32_45 = arith.constant 240 : i32
    %106 = tpu.dynamic_rotate %83 by %c240_i32_45 dim 1 : vector<8x256xf32>, i32 -> vector<8x256xf32>
    %107 = vector.shape_cast %8 : vector<1x256xi1> to vector<1x256xi1>
    %108 = vector.broadcast %107 : vector<1x256xi1> to vector<8x256xi1>
    %109 = arith.select %108, %106, %105 : vector<8x256xi1>, vector<8x256xf32>
    %110 = vector.shape_cast %10 : vector<1x256xi1> to vector<1x256xi1>
    %111 = vector.broadcast %110 : vector<1x256xi1> to vector<8x256xi1>
    %112 = arith.select %111, %105, %106 : vector<8x256xi1>, vector<8x256xf32>
    %c8_46 = arith.constant 8 : index
    %c0_47 = arith.constant 0 : index
    %113 = vector.load %arg7[%c8_46, %c0_47] : memref<72x256xf32, #tpu.memory_space<vmem>>, vector<8x256xf32>
    tpu.vector_store %arg7[%c8_46, %c0_47], %109 {strides = array<i32>} : memref<72x256xf32, #tpu.memory_space<vmem>>, vector<8x256xf32>,
    %c32_48 = arith.constant 32 : index
    %c0_49 = arith.constant 0 : index
    %114 = vector.load %arg7[%c32_48, %c0_49] : memref<72x256xf32, #tpu.memory_space<vmem>>, vector<8x256xf32>
    tpu.vector_store %arg7[%c32_48, %c0_49], %83 {strides = array<i32>} : memref<72x256xf32, #tpu.memory_space<vmem>>, vector<8x256xf32>,
    %c56_50 = arith.constant 56 : index
    %c0_51 = arith.constant 0 : index
    %115 = vector.load %arg7[%c56_50, %c0_51] : memref<72x256xf32, #tpu.memory_space<vmem>>, vector<8x256xf32>
    tpu.vector_store %arg7[%c56_50, %c0_51], %112 {strides = array<i32>} : memref<72x256xf32, #tpu.memory_space<vmem>>, vector<8x256xf32>,
    %c16_i32_52 = arith.constant 16 : i32
    %116 = tpu.dynamic_rotate %93 by %c16_i32_52 dim 1 : vector<8x256xf32>, i32 -> vector<8x256xf32>
    %c240_i32_53 = arith.constant 240 : i32
    %117 = tpu.dynamic_rotate %93 by %c240_i32_53 dim 1 : vector<8x256xf32>, i32 -> vector<8x256xf32>
    %118 = vector.shape_cast %8 : vector<1x256xi1> to vector<1x256xi1>
    %119 = vector.broadcast %118 : vector<1x256xi1> to vector<8x256xi1>
    %120 = arith.select %119, %117, %116 : vector<8x256xi1>, vector<8x256xf32>
    %121 = vector.shape_cast %10 : vector<1x256xi1> to vector<1x256xi1>
    %122 = vector.broadcast %121 : vector<1x256xi1> to vector<8x256xi1>
    %123 = arith.select %122, %116, %117 : vector<8x256xi1>, vector<8x256xf32>
    %c16_54 = arith.constant 16 : index
    %c0_55 = arith.constant 0 : index
    %124 = vector.load %arg7[%c16_54, %c0_55] : memref<72x256xf32, #tpu.memory_space<vmem>>, vector<8x256xf32>
    tpu.vector_store %arg7[%c16_54, %c0_55], %120 {strides = array<i32>} : memref<72x256xf32, #tpu.memory_space<vmem>>, vector<8x256xf32>,
    %c40_56 = arith.constant 40 : index
    %c0_57 = arith.constant 0 : index
    %125 = vector.load %arg7[%c40_56, %c0_57] : memref<72x256xf32, #tpu.memory_space<vmem>>, vector<8x256xf32>
    tpu.vector_store %arg7[%c40_56, %c0_57], %93 {strides = array<i32>} : memref<72x256xf32, #tpu.memory_space<vmem>>, vector<8x256xf32>,
    %c64_58 = arith.constant 64 : index
    %c0_59 = arith.constant 0 : index
    %126 = vector.load %arg7[%c64_58, %c0_59] : memref<72x256xf32, #tpu.memory_space<vmem>>, vector<8x256xf32>
    tpu.vector_store %arg7[%c64_58, %c0_59], %123 {strides = array<i32>} : memref<72x256xf32, #tpu.memory_space<vmem>>, vector<8x256xf32>,
    %c0_60 = arith.constant 0 : index
    %c0_61 = arith.constant 0 : index
    %127 = vector.load %arg7[%c0_60, %c0_61] : memref<72x256xf32, #tpu.memory_space<vmem>>, vector<72x256xf32>
    %128 = arith.truncf %127 : vector<72x256xf32> to vector<72x256xbf16>
    %cst_62 = arith.constant dense<0.000000e+00> : vector<8x256xf32>
    %129 = tpu.matmul %85, %128, %cst_62 {dimension_numbers = #tpu.dot_dimension_numbers<[1], [0], [0], [1], [0, 0, 1, 1], [], []>} : vector<8x72xbf16>, vector<72x256xbf16>, vector<8x256xf32> -> vector<8x256xf32>
    %cst_63 = arith.constant dense<0.000000e+00> : vector<8xf32>
    %130 = vector.multi_reduction <add>, %129, %cst_63 [1] : vector<8x256xf32> to vector<8xf32>
    %131 = vector.shape_cast %130 : vector<8xf32> to vector<8x1xf32>
    %cst_64 = arith.constant 3.906250e-03 : f32
    %132 = vector.broadcast %cst_64 : f32 to vector<8x1xf32>
    %133 = arith.mulf %131, %132 : vector<8x1xf32>
    %134 = arith.mulf %129, %129 : vector<8x256xf32>
    %cst_65 = arith.constant dense<0.000000e+00> : vector<8xf32>
    %135 = vector.multi_reduction <add>, %134, %cst_65 [1] : vector<8x256xf32> to vector<8xf32>
    %136 = vector.shape_cast %135 : vector<8xf32> to vector<8x1xf32>
    %cst_66 = arith.constant 3.906250e-03 : f32
    %137 = vector.broadcast %cst_66 : f32 to vector<8x1xf32>
    %138 = arith.mulf %136, %137 : vector<8x1xf32>
    %139 = arith.mulf %133, %133 : vector<8x1xf32>
    %140 = arith.subf %138, %139 : vector<8x1xf32>
    %cst_67 = arith.constant 0.000000e+00 : f32
    %141 = vector.broadcast %cst_67 : f32 to vector<8x1xf32>
    %142 = arith.maximumf %140, %141 : vector<8x1xf32>
    %143 = vector.broadcast %133 : vector<8x1xf32> to vector<8x256xf32>
    %144 = arith.subf %129, %143 : vector<8x256xf32>
    %cst_68 = arith.constant 9.99999974E-6 : f32
    %145 = vector.broadcast %cst_68 : f32 to vector<8x1xf32>
    %146 = arith.addf %142, %145 : vector<8x1xf32>
    %147 = math.rsqrt %146 : vector<8x1xf32>
    %148 = vector.broadcast %147 : vector<8x1xf32> to vector<8x256xf32>
    %149 = arith.mulf %144, %148 : vector<8x256xf32>
    %150 = arith.addf %12, %149 : vector<8x256xf32>
    %c2 = arith.constant 2 : index
    %c0_69 = arith.constant 0 : index
    %c0_70 = arith.constant 0 : index
    %151 = vector.load %arg2[%c2, %c0_69, %c0_70] : memref<6x8x72xbf16, #tpu.memory_space<vmem>>, vector<1x8x72xbf16>
    %152 = vector.shape_cast %151 : vector<1x8x72xbf16> to vector<8x72xbf16>
    %c1_i32_71 = arith.constant 1 : i32
    %153 = tpu.dynamic_rotate %150 by %c1_i32_71 dim 1 : vector<8x256xf32>, i32 -> vector<8x256xf32>
    %c255_i32_72 = arith.constant 255 : i32
    %154 = tpu.dynamic_rotate %150 by %c255_i32_72 dim 1 : vector<8x256xf32>, i32 -> vector<8x256xf32>
    %155 = vector.shape_cast %4 : vector<1x256xi1> to vector<1x256xi1>
    %156 = vector.broadcast %155 : vector<1x256xi1> to vector<8x256xi1>
    %157 = arith.select %156, %154, %153 : vector<8x256xi1>, vector<8x256xf32>
    %158 = vector.shape_cast %6 : vector<1x256xi1> to vector<1x256xi1>
    %159 = vector.broadcast %158 : vector<1x256xi1> to vector<8x256xi1>
    %160 = arith.select %159, %153, %154 : vector<8x256xi1>, vector<8x256xf32>
    %c16_i32_73 = arith.constant 16 : i32
    %161 = tpu.dynamic_rotate %157 by %c16_i32_73 dim 1 : vector<8x256xf32>, i32 -> vector<8x256xf32>
    %c240_i32_74 = arith.constant 240 : i32
    %162 = tpu.dynamic_rotate %157 by %c240_i32_74 dim 1 : vector<8x256xf32>, i32 -> vector<8x256xf32>
    %163 = vector.shape_cast %8 : vector<1x256xi1> to vector<1x256xi1>
    %164 = vector.broadcast %163 : vector<1x256xi1> to vector<8x256xi1>
    %165 = arith.select %164, %162, %161 : vector<8x256xi1>, vector<8x256xf32>
    %166 = vector.shape_cast %10 : vector<1x256xi1> to vector<1x256xi1>
    %167 = vector.broadcast %166 : vector<1x256xi1> to vector<8x256xi1>
    %168 = arith.select %167, %161, %162 : vector<8x256xi1>, vector<8x256xf32>
    %c0_75 = arith.constant 0 : index
    %c0_76 = arith.constant 0 : index
    %169 = vector.load %arg7[%c0_75, %c0_76] : memref<72x256xf32, #tpu.memory_space<vmem>>, vector<8x256xf32>
    tpu.vector_store %arg7[%c0_75, %c0_76], %165 {strides = array<i32>} : memref<72x256xf32, #tpu.memory_space<vmem>>, vector<8x256xf32>,
    %c24_77 = arith.constant 24 : index
    %c0_78 = arith.constant 0 : index
    %170 = vector.load %arg7[%c24_77, %c0_78] : memref<72x256xf32, #tpu.memory_space<vmem>>, vector<8x256xf32>
    tpu.vector_store %arg7[%c24_77, %c0_78], %157 {strides = array<i32>} : memref<72x256xf32, #tpu.memory_space<vmem>>, vector<8x256xf32>,
    %c48_79 = arith.constant 48 : index
    %c0_80 = arith.constant 0 : index
    %171 = vector.load %arg7[%c48_79, %c0_80] : memref<72x256xf32, #tpu.memory_space<vmem>>, vector<8x256xf32>
    tpu.vector_store %arg7[%c48_79, %c0_80], %168 {strides = array<i32>} : memref<72x256xf32, #tpu.memory_space<vmem>>, vector<8x256xf32>,
    %c16_i32_81 = arith.constant 16 : i32
    %172 = tpu.dynamic_rotate %150 by %c16_i32_81 dim 1 : vector<8x256xf32>, i32 -> vector<8x256xf32>
    %c240_i32_82 = arith.constant 240 : i32
    %173 = tpu.dynamic_rotate %150 by %c240_i32_82 dim 1 : vector<8x256xf32>, i32 -> vector<8x256xf32>
    %174 = vector.shape_cast %8 : vector<1x256xi1> to vector<1x256xi1>
    %175 = vector.broadcast %174 : vector<1x256xi1> to vector<8x256xi1>
    %176 = arith.select %175, %173, %172 : vector<8x256xi1>, vector<8x256xf32>
    %177 = vector.shape_cast %10 : vector<1x256xi1> to vector<1x256xi1>
    %178 = vector.broadcast %177 : vector<1x256xi1> to vector<8x256xi1>
    %179 = arith.select %178, %172, %173 : vector<8x256xi1>, vector<8x256xf32>
    %c8_83 = arith.constant 8 : index
    %c0_84 = arith.constant 0 : index
    %180 = vector.load %arg7[%c8_83, %c0_84] : memref<72x256xf32, #tpu.memory_space<vmem>>, vector<8x256xf32>
    tpu.vector_store %arg7[%c8_83, %c0_84], %176 {strides = array<i32>} : memref<72x256xf32, #tpu.memory_space<vmem>>, vector<8x256xf32>,
    %c32_85 = arith.constant 32 : index
    %c0_86 = arith.constant 0 : index
    %181 = vector.load %arg7[%c32_85, %c0_86] : memref<72x256xf32, #tpu.memory_space<vmem>>, vector<8x256xf32>
    tpu.vector_store %arg7[%c32_85, %c0_86], %150 {strides = array<i32>} : memref<72x256xf32, #tpu.memory_space<vmem>>, vector<8x256xf32>,
    %c56_87 = arith.constant 56 : index
    %c0_88 = arith.constant 0 : index
    %182 = vector.load %arg7[%c56_87, %c0_88] : memref<72x256xf32, #tpu.memory_space<vmem>>, vector<8x256xf32>
    tpu.vector_store %arg7[%c56_87, %c0_88], %179 {strides = array<i32>} : memref<72x256xf32, #tpu.memory_space<vmem>>, vector<8x256xf32>,
    %c16_i32_89 = arith.constant 16 : i32
    %183 = tpu.dynamic_rotate %160 by %c16_i32_89 dim 1 : vector<8x256xf32>, i32 -> vector<8x256xf32>
    %c240_i32_90 = arith.constant 240 : i32
    %184 = tpu.dynamic_rotate %160 by %c240_i32_90 dim 1 : vector<8x256xf32>, i32 -> vector<8x256xf32>
    %185 = vector.shape_cast %8 : vector<1x256xi1> to vector<1x256xi1>
    %186 = vector.broadcast %185 : vector<1x256xi1> to vector<8x256xi1>
    %187 = arith.select %186, %184, %183 : vector<8x256xi1>, vector<8x256xf32>
    %188 = vector.shape_cast %10 : vector<1x256xi1> to vector<1x256xi1>
    %189 = vector.broadcast %188 : vector<1x256xi1> to vector<8x256xi1>
    %190 = arith.select %189, %183, %184 : vector<8x256xi1>, vector<8x256xf32>
    %c16_91 = arith.constant 16 : index
    %c0_92 = arith.constant 0 : index
    %191 = vector.load %arg7[%c16_91, %c0_92] : memref<72x256xf32, #tpu.memory_space<vmem>>, vector<8x256xf32>
    tpu.vector_store %arg7[%c16_91, %c0_92], %187 {strides = array<i32>} : memref<72x256xf32, #tpu.memory_space<vmem>>, vector<8x256xf32>,
    %c40_93 = arith.constant 40 : index
    %c0_94 = arith.constant 0 : index
    %192 = vector.load %arg7[%c40_93, %c0_94] : memref<72x256xf32, #tpu.memory_space<vmem>>, vector<8x256xf32>
    tpu.vector_store %arg7[%c40_93, %c0_94], %160 {strides = array<i32>} : memref<72x256xf32, #tpu.memory_space<vmem>>, vector<8x256xf32>,
    %c64_95 = arith.constant 64 : index
    %c0_96 = arith.constant 0 : index
    %193 = vector.load %arg7[%c64_95, %c0_96] : memref<72x256xf32, #tpu.memory_space<vmem>>, vector<8x256xf32>
    tpu.vector_store %arg7[%c64_95, %c0_96], %190 {strides = array<i32>} : memref<72x256xf32, #tpu.memory_space<vmem>>, vector<8x256xf32>,
    %c0_97 = arith.constant 0 : index
    %c0_98 = arith.constant 0 : index
    %194 = vector.load %arg7[%c0_97, %c0_98] : memref<72x256xf32, #tpu.memory_space<vmem>>, vector<72x256xf32>
    %195 = arith.truncf %194 : vector<72x256xf32> to vector<72x256xbf16>
    %cst_99 = arith.constant dense<0.000000e+00> : vector<8x256xf32>
    %196 = tpu.matmul %152, %195, %cst_99 {dimension_numbers = #tpu.dot_dimension_numbers<[1], [0], [0], [1], [0, 0, 1, 1], [], []>} : vector<8x72xbf16>, vector<72x256xbf16>, vector<8x256xf32> -> vector<8x256xf32>
    %cst_100 = arith.constant dense<0.000000e+00> : vector<8xf32>
    %197 = vector.multi_reduction <add>, %196, %cst_100 [1] : vector<8x256xf32> to vector<8xf32>
    %198 = vector.shape_cast %197 : vector<8xf32> to vector<8x1xf32>
    %cst_101 = arith.constant 3.906250e-03 : f32
    %199 = vector.broadcast %cst_101 : f32 to vector<8x1xf32>
    %200 = arith.mulf %198, %199 : vector<8x1xf32>
    %201 = arith.mulf %196, %196 : vector<8x256xf32>
    %cst_102 = arith.constant dense<0.000000e+00> : vector<8xf32>
    %202 = vector.multi_reduction <add>, %201, %cst_102 [1] : vector<8x256xf32> to vector<8xf32>
    %203 = vector.shape_cast %202 : vector<8xf32> to vector<8x1xf32>
    %cst_103 = arith.constant 3.906250e-03 : f32
    %204 = vector.broadcast %cst_103 : f32 to vector<8x1xf32>
    %205 = arith.mulf %203, %204 : vector<8x1xf32>
    %206 = arith.mulf %200, %200 : vector<8x1xf32>
    %207 = arith.subf %205, %206 : vector<8x1xf32>
    %cst_104 = arith.constant 0.000000e+00 : f32
    %208 = vector.broadcast %cst_104 : f32 to vector<8x1xf32>
    %209 = arith.maximumf %207, %208 : vector<8x1xf32>
    %210 = vector.broadcast %200 : vector<8x1xf32> to vector<8x256xf32>
    %211 = arith.subf %196, %210 : vector<8x256xf32>
    %cst_105 = arith.constant 9.99999974E-6 : f32
    %212 = vector.broadcast %cst_105 : f32 to vector<8x1xf32>
    %213 = arith.addf %209, %212 : vector<8x1xf32>
    %214 = math.rsqrt %213 : vector<8x1xf32>
    %215 = vector.broadcast %214 : vector<8x1xf32> to vector<8x256xf32>
    %216 = arith.mulf %211, %215 : vector<8x256xf32>
    %cst_106 = arith.constant 0.000000e+00 : f32
    %217 = vector.broadcast %cst_106 : f32 to vector<8x256xf32>
    %218 = arith.cmpf oge, %216, %217 : vector<8x256xf32>
    %cst_107 = arith.constant 0.00999999977 : f32
    %219 = vector.broadcast %cst_107 : f32 to vector<8x256xf32>
    %220 = arith.mulf %219, %216 : vector<8x256xf32>
    %221 = arith.select %218, %216, %220 : vector<8x256xi1>, vector<8x256xf32>
    %c3 = arith.constant 3 : index
    %c0_108 = arith.constant 0 : index
    %c0_109 = arith.constant 0 : index
    %222 = vector.load %arg2[%c3, %c0_108, %c0_109] : memref<6x8x72xbf16, #tpu.memory_space<vmem>>, vector<1x8x72xbf16>
    %223 = vector.shape_cast %222 : vector<1x8x72xbf16> to vector<8x72xbf16>
    %c1_i32_110 = arith.constant 1 : i32
    %224 = tpu.dynamic_rotate %221 by %c1_i32_110 dim 1 : vector<8x256xf32>, i32 -> vector<8x256xf32>
    %c255_i32_111 = arith.constant 255 : i32
    %225 = tpu.dynamic_rotate %221 by %c255_i32_111 dim 1 : vector<8x256xf32>, i32 -> vector<8x256xf32>
    %226 = vector.shape_cast %4 : vector<1x256xi1> to vector<1x256xi1>
    %227 = vector.broadcast %226 : vector<1x256xi1> to vector<8x256xi1>
    %228 = arith.select %227, %225, %224 : vector<8x256xi1>, vector<8x256xf32>
    %229 = vector.shape_cast %6 : vector<1x256xi1> to vector<1x256xi1>
    %230 = vector.broadcast %229 : vector<1x256xi1> to vector<8x256xi1>
    %231 = arith.select %230, %224, %225 : vector<8x256xi1>, vector<8x256xf32>
    %c16_i32_112 = arith.constant 16 : i32
    %232 = tpu.dynamic_rotate %228 by %c16_i32_112 dim 1 : vector<8x256xf32>, i32 -> vector<8x256xf32>
    %c240_i32_113 = arith.constant 240 : i32
    %233 = tpu.dynamic_rotate %228 by %c240_i32_113 dim 1 : vector<8x256xf32>, i32 -> vector<8x256xf32>
    %234 = vector.shape_cast %8 : vector<1x256xi1> to vector<1x256xi1>
    %235 = vector.broadcast %234 : vector<1x256xi1> to vector<8x256xi1>
    %236 = arith.select %235, %233, %232 : vector<8x256xi1>, vector<8x256xf32>
    %237 = vector.shape_cast %10 : vector<1x256xi1> to vector<1x256xi1>
    %238 = vector.broadcast %237 : vector<1x256xi1> to vector<8x256xi1>
    %239 = arith.select %238, %232, %233 : vector<8x256xi1>, vector<8x256xf32>
    %c0_114 = arith.constant 0 : index
    %c0_115 = arith.constant 0 : index
    %240 = vector.load %arg7[%c0_114, %c0_115] : memref<72x256xf32, #tpu.memory_space<vmem>>, vector<8x256xf32>
    tpu.vector_store %arg7[%c0_114, %c0_115], %236 {strides = array<i32>} : memref<72x256xf32, #tpu.memory_space<vmem>>, vector<8x256xf32>,
    %c24_116 = arith.constant 24 : index
    %c0_117 = arith.constant 0 : index
    %241 = vector.load %arg7[%c24_116, %c0_117] : memref<72x256xf32, #tpu.memory_space<vmem>>, vector<8x256xf32>
    tpu.vector_store %arg7[%c24_116, %c0_117], %228 {strides = array<i32>} : memref<72x256xf32, #tpu.memory_space<vmem>>, vector<8x256xf32>,
    %c48_118 = arith.constant 48 : index
    %c0_119 = arith.constant 0 : index
    %242 = vector.load %arg7[%c48_118, %c0_119] : memref<72x256xf32, #tpu.memory_space<vmem>>, vector<8x256xf32>
    tpu.vector_store %arg7[%c48_118, %c0_119], %239 {strides = array<i32>} : memref<72x256xf32, #tpu.memory_space<vmem>>, vector<8x256xf32>,
    %c16_i32_120 = arith.constant 16 : i32
    %243 = tpu.dynamic_rotate %221 by %c16_i32_120 dim 1 : vector<8x256xf32>, i32 -> vector<8x256xf32>
    %c240_i32_121 = arith.constant 240 : i32
    %244 = tpu.dynamic_rotate %221 by %c240_i32_121 dim 1 : vector<8x256xf32>, i32 -> vector<8x256xf32>
    %245 = vector.shape_cast %8 : vector<1x256xi1> to vector<1x256xi1>
    %246 = vector.broadcast %245 : vector<1x256xi1> to vector<8x256xi1>
    %247 = arith.select %246, %244, %243 : vector<8x256xi1>, vector<8x256xf32>
    %248 = vector.shape_cast %10 : vector<1x256xi1> to vector<1x256xi1>
    %249 = vector.broadcast %248 : vector<1x256xi1> to vector<8x256xi1>
    %250 = arith.select %249, %243, %244 : vector<8x256xi1>, vector<8x256xf32>
    %c8_122 = arith.constant 8 : index
    %c0_123 = arith.constant 0 : index
    %251 = vector.load %arg7[%c8_122, %c0_123] : memref<72x256xf32, #tpu.memory_space<vmem>>, vector<8x256xf32>
    tpu.vector_store %arg7[%c8_122, %c0_123], %247 {strides = array<i32>} : memref<72x256xf32, #tpu.memory_space<vmem>>, vector<8x256xf32>,
    %c32_124 = arith.constant 32 : index
    %c0_125 = arith.constant 0 : index
    %252 = vector.load %arg7[%c32_124, %c0_125] : memref<72x256xf32, #tpu.memory_space<vmem>>, vector<8x256xf32>
    tpu.vector_store %arg7[%c32_124, %c0_125], %221 {strides = array<i32>} : memref<72x256xf32, #tpu.memory_space<vmem>>, vector<8x256xf32>,
    %c56_126 = arith.constant 56 : index
    %c0_127 = arith.constant 0 : index
    %253 = vector.load %arg7[%c56_126, %c0_127] : memref<72x256xf32, #tpu.memory_space<vmem>>, vector<8x256xf32>
    tpu.vector_store %arg7[%c56_126, %c0_127], %250 {strides = array<i32>} : memref<72x256xf32, #tpu.memory_space<vmem>>, vector<8x256xf32>,
    %c16_i32_128 = arith.constant 16 : i32
    %254 = tpu.dynamic_rotate %231 by %c16_i32_128 dim 1 : vector<8x256xf32>, i32 -> vector<8x256xf32>
    %c240_i32_129 = arith.constant 240 : i32
    %255 = tpu.dynamic_rotate %231 by %c240_i32_129 dim 1 : vector<8x256xf32>, i32 -> vector<8x256xf32>
    %256 = vector.shape_cast %8 : vector<1x256xi1> to vector<1x256xi1>
    %257 = vector.broadcast %256 : vector<1x256xi1> to vector<8x256xi1>
    %258 = arith.select %257, %255, %254 : vector<8x256xi1>, vector<8x256xf32>
    %259 = vector.shape_cast %10 : vector<1x256xi1> to vector<1x256xi1>
    %260 = vector.broadcast %259 : vector<1x256xi1> to vector<8x256xi1>
    %261 = arith.select %260, %254, %255 : vector<8x256xi1>, vector<8x256xf32>
    %c16_130 = arith.constant 16 : index
    %c0_131 = arith.constant 0 : index
    %262 = vector.load %arg7[%c16_130, %c0_131] : memref<72x256xf32, #tpu.memory_space<vmem>>, vector<8x256xf32>
    tpu.vector_store %arg7[%c16_130, %c0_131], %258 {strides = array<i32>} : memref<72x256xf32, #tpu.memory_space<vmem>>, vector<8x256xf32>,
    %c40_132 = arith.constant 40 : index
    %c0_133 = arith.constant 0 : index
    %263 = vector.load %arg7[%c40_132, %c0_133] : memref<72x256xf32, #tpu.memory_space<vmem>>, vector<8x256xf32>
    tpu.vector_store %arg7[%c40_132, %c0_133], %231 {strides = array<i32>} : memref<72x256xf32, #tpu.memory_space<vmem>>, vector<8x256xf32>,
    %c64_134 = arith.constant 64 : index
    %c0_135 = arith.constant 0 : index
    %264 = vector.load %arg7[%c64_134, %c0_135] : memref<72x256xf32, #tpu.memory_space<vmem>>, vector<8x256xf32>
    tpu.vector_store %arg7[%c64_134, %c0_135], %261 {strides = array<i32>} : memref<72x256xf32, #tpu.memory_space<vmem>>, vector<8x256xf32>,
    %c0_136 = arith.constant 0 : index
    %c0_137 = arith.constant 0 : index
    %265 = vector.load %arg7[%c0_136, %c0_137] : memref<72x256xf32, #tpu.memory_space<vmem>>, vector<72x256xf32>
    %266 = arith.truncf %265 : vector<72x256xf32> to vector<72x256xbf16>
    %cst_138 = arith.constant dense<0.000000e+00> : vector<8x256xf32>
    %267 = tpu.matmul %223, %266, %cst_138 {dimension_numbers = #tpu.dot_dimension_numbers<[1], [0], [0], [1], [0, 0, 1, 1], [], []>} : vector<8x72xbf16>, vector<72x256xbf16>, vector<8x256xf32> -> vector<8x256xf32>
    %cst_139 = arith.constant dense<0.000000e+00> : vector<8xf32>
    %268 = vector.multi_reduction <add>, %267, %cst_139 [1] : vector<8x256xf32> to vector<8xf32>
    %269 = vector.shape_cast %268 : vector<8xf32> to vector<8x1xf32>
    %cst_140 = arith.constant 3.906250e-03 : f32
    %270 = vector.broadcast %cst_140 : f32 to vector<8x1xf32>
    %271 = arith.mulf %269, %270 : vector<8x1xf32>
    %272 = arith.mulf %267, %267 : vector<8x256xf32>
    %cst_141 = arith.constant dense<0.000000e+00> : vector<8xf32>
    %273 = vector.multi_reduction <add>, %272, %cst_141 [1] : vector<8x256xf32> to vector<8xf32>
    %274 = vector.shape_cast %273 : vector<8xf32> to vector<8x1xf32>
    %cst_142 = arith.constant 3.906250e-03 : f32
    %275 = vector.broadcast %cst_142 : f32 to vector<8x1xf32>
    %276 = arith.mulf %274, %275 : vector<8x1xf32>
    %277 = arith.mulf %271, %271 : vector<8x1xf32>
    %278 = arith.subf %276, %277 : vector<8x1xf32>
    %cst_143 = arith.constant 0.000000e+00 : f32
    %279 = vector.broadcast %cst_143 : f32 to vector<8x1xf32>
    %280 = arith.maximumf %278, %279 : vector<8x1xf32>
    %281 = vector.broadcast %271 : vector<8x1xf32> to vector<8x256xf32>
    %282 = arith.subf %267, %281 : vector<8x256xf32>
    %cst_144 = arith.constant 9.99999974E-6 : f32
    %283 = vector.broadcast %cst_144 : f32 to vector<8x1xf32>
    %284 = arith.addf %280, %283 : vector<8x1xf32>
    %285 = math.rsqrt %284 : vector<8x1xf32>
    %286 = vector.broadcast %285 : vector<8x1xf32> to vector<8x256xf32>
    %287 = arith.mulf %282, %286 : vector<8x256xf32>
    %288 = arith.addf %150, %287 : vector<8x256xf32>
    %c4 = arith.constant 4 : index
    %c0_145 = arith.constant 0 : index
    %c0_146 = arith.constant 0 : index
    %289 = vector.load %arg2[%c4, %c0_145, %c0_146] : memref<6x8x72xbf16, #tpu.memory_space<vmem>>, vector<1x8x72xbf16>
    %290 = vector.shape_cast %289 : vector<1x8x72xbf16> to vector<8x72xbf16>
    %c1_i32_147 = arith.constant 1 : i32
    %291 = tpu.dynamic_rotate %288 by %c1_i32_147 dim 1 : vector<8x256xf32>, i32 -> vector<8x256xf32>
    %c255_i32_148 = arith.constant 255 : i32
    %292 = tpu.dynamic_rotate %288 by %c255_i32_148 dim 1 : vector<8x256xf32>, i32 -> vector<8x256xf32>
    %293 = vector.shape_cast %4 : vector<1x256xi1> to vector<1x256xi1>
    %294 = vector.broadcast %293 : vector<1x256xi1> to vector<8x256xi1>
    %295 = arith.select %294, %292, %291 : vector<8x256xi1>, vector<8x256xf32>
    %296 = vector.shape_cast %6 : vector<1x256xi1> to vector<1x256xi1>
    %297 = vector.broadcast %296 : vector<1x256xi1> to vector<8x256xi1>
    %298 = arith.select %297, %291, %292 : vector<8x256xi1>, vector<8x256xf32>
    %c16_i32_149 = arith.constant 16 : i32
    %299 = tpu.dynamic_rotate %295 by %c16_i32_149 dim 1 : vector<8x256xf32>, i32 -> vector<8x256xf32>
    %c240_i32_150 = arith.constant 240 : i32
    %300 = tpu.dynamic_rotate %295 by %c240_i32_150 dim 1 : vector<8x256xf32>, i32 -> vector<8x256xf32>
    %301 = vector.shape_cast %8 : vector<1x256xi1> to vector<1x256xi1>
    %302 = vector.broadcast %301 : vector<1x256xi1> to vector<8x256xi1>
    %303 = arith.select %302, %300, %299 : vector<8x256xi1>, vector<8x256xf32>
    %304 = vector.shape_cast %10 : vector<1x256xi1> to vector<1x256xi1>
    %305 = vector.broadcast %304 : vector<1x256xi1> to vector<8x256xi1>
    %306 = arith.select %305, %299, %300 : vector<8x256xi1>, vector<8x256xf32>
    %c0_151 = arith.constant 0 : index
    %c0_152 = arith.constant 0 : index
    %307 = vector.load %arg7[%c0_151, %c0_152] : memref<72x256xf32, #tpu.memory_space<vmem>>, vector<8x256xf32>
    tpu.vector_store %arg7[%c0_151, %c0_152], %303 {strides = array<i32>} : memref<72x256xf32, #tpu.memory_space<vmem>>, vector<8x256xf32>,
    %c24_153 = arith.constant 24 : index
    %c0_154 = arith.constant 0 : index
    %308 = vector.load %arg7[%c24_153, %c0_154] : memref<72x256xf32, #tpu.memory_space<vmem>>, vector<8x256xf32>
    tpu.vector_store %arg7[%c24_153, %c0_154], %295 {strides = array<i32>} : memref<72x256xf32, #tpu.memory_space<vmem>>, vector<8x256xf32>,
    %c48_155 = arith.constant 48 : index
    %c0_156 = arith.constant 0 : index
    %309 = vector.load %arg7[%c48_155, %c0_156] : memref<72x256xf32, #tpu.memory_space<vmem>>, vector<8x256xf32>
    tpu.vector_store %arg7[%c48_155, %c0_156], %306 {strides = array<i32>} : memref<72x256xf32, #tpu.memory_space<vmem>>, vector<8x256xf32>,
    %c16_i32_157 = arith.constant 16 : i32
    %310 = tpu.dynamic_rotate %288 by %c16_i32_157 dim 1 : vector<8x256xf32>, i32 -> vector<8x256xf32>
    %c240_i32_158 = arith.constant 240 : i32
    %311 = tpu.dynamic_rotate %288 by %c240_i32_158 dim 1 : vector<8x256xf32>, i32 -> vector<8x256xf32>
    %312 = vector.shape_cast %8 : vector<1x256xi1> to vector<1x256xi1>
    %313 = vector.broadcast %312 : vector<1x256xi1> to vector<8x256xi1>
    %314 = arith.select %313, %311, %310 : vector<8x256xi1>, vector<8x256xf32>
    %315 = vector.shape_cast %10 : vector<1x256xi1> to vector<1x256xi1>
    %316 = vector.broadcast %315 : vector<1x256xi1> to vector<8x256xi1>
    %317 = arith.select %316, %310, %311 : vector<8x256xi1>, vector<8x256xf32>
    %c8_159 = arith.constant 8 : index
    %c0_160 = arith.constant 0 : index
    %318 = vector.load %arg7[%c8_159, %c0_160] : memref<72x256xf32, #tpu.memory_space<vmem>>, vector<8x256xf32>
    tpu.vector_store %arg7[%c8_159, %c0_160], %314 {strides = array<i32>} : memref<72x256xf32, #tpu.memory_space<vmem>>, vector<8x256xf32>,
    %c32_161 = arith.constant 32 : index
    %c0_162 = arith.constant 0 : index
    %319 = vector.load %arg7[%c32_161, %c0_162] : memref<72x256xf32, #tpu.memory_space<vmem>>, vector<8x256xf32>
    tpu.vector_store %arg7[%c32_161, %c0_162], %288 {strides = array<i32>} : memref<72x256xf32, #tpu.memory_space<vmem>>, vector<8x256xf32>,
    %c56_163 = arith.constant 56 : index
    %c0_164 = arith.constant 0 : index
    %320 = vector.load %arg7[%c56_163, %c0_164] : memref<72x256xf32, #tpu.memory_space<vmem>>, vector<8x256xf32>
    tpu.vector_store %arg7[%c56_163, %c0_164], %317 {strides = array<i32>} : memref<72x256xf32, #tpu.memory_space<vmem>>, vector<8x256xf32>,
    %c16_i32_165 = arith.constant 16 : i32
    %321 = tpu.dynamic_rotate %298 by %c16_i32_165 dim 1 : vector<8x256xf32>, i32 -> vector<8x256xf32>
    %c240_i32_166 = arith.constant 240 : i32
    %322 = tpu.dynamic_rotate %298 by %c240_i32_166 dim 1 : vector<8x256xf32>, i32 -> vector<8x256xf32>
    %323 = vector.shape_cast %8 : vector<1x256xi1> to vector<1x256xi1>
    %324 = vector.broadcast %323 : vector<1x256xi1> to vector<8x256xi1>
    %325 = arith.select %324, %322, %321 : vector<8x256xi1>, vector<8x256xf32>
    %326 = vector.shape_cast %10 : vector<1x256xi1> to vector<1x256xi1>
    %327 = vector.broadcast %326 : vector<1x256xi1> to vector<8x256xi1>
    %328 = arith.select %327, %321, %322 : vector<8x256xi1>, vector<8x256xf32>
    %c16_167 = arith.constant 16 : index
    %c0_168 = arith.constant 0 : index
    %329 = vector.load %arg7[%c16_167, %c0_168] : memref<72x256xf32, #tpu.memory_space<vmem>>, vector<8x256xf32>
    tpu.vector_store %arg7[%c16_167, %c0_168], %325 {strides = array<i32>} : memref<72x256xf32, #tpu.memory_space<vmem>>, vector<8x256xf32>,
    %c40_169 = arith.constant 40 : index
    %c0_170 = arith.constant 0 : index
    %330 = vector.load %arg7[%c40_169, %c0_170] : memref<72x256xf32, #tpu.memory_space<vmem>>, vector<8x256xf32>
    tpu.vector_store %arg7[%c40_169, %c0_170], %298 {strides = array<i32>} : memref<72x256xf32, #tpu.memory_space<vmem>>, vector<8x256xf32>,
    %c64_171 = arith.constant 64 : index
    %c0_172 = arith.constant 0 : index
    %331 = vector.load %arg7[%c64_171, %c0_172] : memref<72x256xf32, #tpu.memory_space<vmem>>, vector<8x256xf32>
    tpu.vector_store %arg7[%c64_171, %c0_172], %328 {strides = array<i32>} : memref<72x256xf32, #tpu.memory_space<vmem>>, vector<8x256xf32>,
    %c0_173 = arith.constant 0 : index
    %c0_174 = arith.constant 0 : index
    %332 = vector.load %arg7[%c0_173, %c0_174] : memref<72x256xf32, #tpu.memory_space<vmem>>, vector<72x256xf32>
    %333 = arith.truncf %332 : vector<72x256xf32> to vector<72x256xbf16>
    %cst_175 = arith.constant dense<0.000000e+00> : vector<8x256xf32>
    %334 = tpu.matmul %290, %333, %cst_175 {dimension_numbers = #tpu.dot_dimension_numbers<[1], [0], [0], [1], [0, 0, 1, 1], [], []>} : vector<8x72xbf16>, vector<72x256xbf16>, vector<8x256xf32> -> vector<8x256xf32>
    %cst_176 = arith.constant dense<0.000000e+00> : vector<8xf32>
    %335 = vector.multi_reduction <add>, %334, %cst_176 [1] : vector<8x256xf32> to vector<8xf32>
    %336 = vector.shape_cast %335 : vector<8xf32> to vector<8x1xf32>
    %cst_177 = arith.constant 3.906250e-03 : f32
    %337 = vector.broadcast %cst_177 : f32 to vector<8x1xf32>
    %338 = arith.mulf %336, %337 : vector<8x1xf32>
    %339 = arith.mulf %334, %334 : vector<8x256xf32>
    %cst_178 = arith.constant dense<0.000000e+00> : vector<8xf32>
    %340 = vector.multi_reduction <add>, %339, %cst_178 [1] : vector<8x256xf32> to vector<8xf32>
    %341 = vector.shape_cast %340 : vector<8xf32> to vector<8x1xf32>
    %cst_179 = arith.constant 3.906250e-03 : f32
    %342 = vector.broadcast %cst_179 : f32 to vector<8x1xf32>
    %343 = arith.mulf %341, %342 : vector<8x1xf32>
    %344 = arith.mulf %338, %338 : vector<8x1xf32>
    %345 = arith.subf %343, %344 : vector<8x1xf32>
    %cst_180 = arith.constant 0.000000e+00 : f32
    %346 = vector.broadcast %cst_180 : f32 to vector<8x1xf32>
    %347 = arith.maximumf %345, %346 : vector<8x1xf32>
    %348 = vector.broadcast %338 : vector<8x1xf32> to vector<8x256xf32>
    %349 = arith.subf %334, %348 : vector<8x256xf32>
    %cst_181 = arith.constant 9.99999974E-6 : f32
    %350 = vector.broadcast %cst_181 : f32 to vector<8x1xf32>
    %351 = arith.addf %347, %350 : vector<8x1xf32>
    %352 = math.rsqrt %351 : vector<8x1xf32>
    %353 = vector.broadcast %352 : vector<8x1xf32> to vector<8x256xf32>
    %354 = arith.mulf %349, %353 : vector<8x256xf32>
    %cst_182 = arith.constant 0.000000e+00 : f32
    %355 = vector.broadcast %cst_182 : f32 to vector<8x256xf32>
    %356 = arith.cmpf oge, %354, %355 : vector<8x256xf32>
    %cst_183 = arith.constant 0.00999999977 : f32
    %357 = vector.broadcast %cst_183 : f32 to vector<8x256xf32>
    %358 = arith.mulf %357, %354 : vector<8x256xf32>
    %359 = arith.select %356, %354, %358 : vector<8x256xi1>, vector<8x256xf32>
    %c5 = arith.constant 5 : index
    %c0_184 = arith.constant 0 : index
    %c0_185 = arith.constant 0 : index
    %360 = vector.load %arg2[%c5, %c0_184, %c0_185] : memref<6x8x72xbf16, #tpu.memory_space<vmem>>, vector<1x8x72xbf16>
    %361 = vector.shape_cast %360 : vector<1x8x72xbf16> to vector<8x72xbf16>
    %c1_i32_186 = arith.constant 1 : i32
    %362 = tpu.dynamic_rotate %359 by %c1_i32_186 dim 1 : vector<8x256xf32>, i32 -> vector<8x256xf32>
    %c255_i32_187 = arith.constant 255 : i32
    %363 = tpu.dynamic_rotate %359 by %c255_i32_187 dim 1 : vector<8x256xf32>, i32 -> vector<8x256xf32>
    %364 = vector.shape_cast %4 : vector<1x256xi1> to vector<1x256xi1>
    %365 = vector.broadcast %364 : vector<1x256xi1> to vector<8x256xi1>
    %366 = arith.select %365, %363, %362 : vector<8x256xi1>, vector<8x256xf32>
    %367 = vector.shape_cast %6 : vector<1x256xi1> to vector<1x256xi1>
    %368 = vector.broadcast %367 : vector<1x256xi1> to vector<8x256xi1>
    %369 = arith.select %368, %362, %363 : vector<8x256xi1>, vector<8x256xf32>
    %c16_i32_188 = arith.constant 16 : i32
    %370 = tpu.dynamic_rotate %366 by %c16_i32_188 dim 1 : vector<8x256xf32>, i32 -> vector<8x256xf32>
    %c240_i32_189 = arith.constant 240 : i32
    %371 = tpu.dynamic_rotate %366 by %c240_i32_189 dim 1 : vector<8x256xf32>, i32 -> vector<8x256xf32>
    %372 = vector.shape_cast %8 : vector<1x256xi1> to vector<1x256xi1>
    %373 = vector.broadcast %372 : vector<1x256xi1> to vector<8x256xi1>
    %374 = arith.select %373, %371, %370 : vector<8x256xi1>, vector<8x256xf32>
    %375 = vector.shape_cast %10 : vector<1x256xi1> to vector<1x256xi1>
    %376 = vector.broadcast %375 : vector<1x256xi1> to vector<8x256xi1>
    %377 = arith.select %376, %370, %371 : vector<8x256xi1>, vector<8x256xf32>
    %c0_190 = arith.constant 0 : index
    %c0_191 = arith.constant 0 : index
    %378 = vector.load %arg7[%c0_190, %c0_191] : memref<72x256xf32, #tpu.memory_space<vmem>>, vector<8x256xf32>
    tpu.vector_store %arg7[%c0_190, %c0_191], %374 {strides = array<i32>} : memref<72x256xf32, #tpu.memory_space<vmem>>, vector<8x256xf32>,
    %c24_192 = arith.constant 24 : index
    %c0_193 = arith.constant 0 : index
    %379 = vector.load %arg7[%c24_192, %c0_193] : memref<72x256xf32, #tpu.memory_space<vmem>>, vector<8x256xf32>
    tpu.vector_store %arg7[%c24_192, %c0_193], %366 {strides = array<i32>} : memref<72x256xf32, #tpu.memory_space<vmem>>, vector<8x256xf32>,
    %c48_194 = arith.constant 48 : index
    %c0_195 = arith.constant 0 : index
    %380 = vector.load %arg7[%c48_194, %c0_195] : memref<72x256xf32, #tpu.memory_space<vmem>>, vector<8x256xf32>
    tpu.vector_store %arg7[%c48_194, %c0_195], %377 {strides = array<i32>} : memref<72x256xf32, #tpu.memory_space<vmem>>, vector<8x256xf32>,
    %c16_i32_196 = arith.constant 16 : i32
    %381 = tpu.dynamic_rotate %359 by %c16_i32_196 dim 1 : vector<8x256xf32>, i32 -> vector<8x256xf32>
    %c240_i32_197 = arith.constant 240 : i32
    %382 = tpu.dynamic_rotate %359 by %c240_i32_197 dim 1 : vector<8x256xf32>, i32 -> vector<8x256xf32>
    %383 = vector.shape_cast %8 : vector<1x256xi1> to vector<1x256xi1>
    %384 = vector.broadcast %383 : vector<1x256xi1> to vector<8x256xi1>
    %385 = arith.select %384, %382, %381 : vector<8x256xi1>, vector<8x256xf32>
    %386 = vector.shape_cast %10 : vector<1x256xi1> to vector<1x256xi1>
    %387 = vector.broadcast %386 : vector<1x256xi1> to vector<8x256xi1>
    %388 = arith.select %387, %381, %382 : vector<8x256xi1>, vector<8x256xf32>
    %c8_198 = arith.constant 8 : index
    %c0_199 = arith.constant 0 : index
    %389 = vector.load %arg7[%c8_198, %c0_199] : memref<72x256xf32, #tpu.memory_space<vmem>>, vector<8x256xf32>
    tpu.vector_store %arg7[%c8_198, %c0_199], %385 {strides = array<i32>} : memref<72x256xf32, #tpu.memory_space<vmem>>, vector<8x256xf32>,
    %c32_200 = arith.constant 32 : index
    %c0_201 = arith.constant 0 : index
    %390 = vector.load %arg7[%c32_200, %c0_201] : memref<72x256xf32, #tpu.memory_space<vmem>>, vector<8x256xf32>
    tpu.vector_store %arg7[%c32_200, %c0_201], %359 {strides = array<i32>} : memref<72x256xf32, #tpu.memory_space<vmem>>, vector<8x256xf32>,
    %c56_202 = arith.constant 56 : index
    %c0_203 = arith.constant 0 : index
    %391 = vector.load %arg7[%c56_202, %c0_203] : memref<72x256xf32, #tpu.memory_space<vmem>>, vector<8x256xf32>
    tpu.vector_store %arg7[%c56_202, %c0_203], %388 {strides = array<i32>} : memref<72x256xf32, #tpu.memory_space<vmem>>, vector<8x256xf32>,
    %c16_i32_204 = arith.constant 16 : i32
    %392 = tpu.dynamic_rotate %369 by %c16_i32_204 dim 1 : vector<8x256xf32>, i32 -> vector<8x256xf32>
    %c240_i32_205 = arith.constant 240 : i32
    %393 = tpu.dynamic_rotate %369 by %c240_i32_205 dim 1 : vector<8x256xf32>, i32 -> vector<8x256xf32>
    %394 = vector.shape_cast %8 : vector<1x256xi1> to vector<1x256xi1>
    %395 = vector.broadcast %394 : vector<1x256xi1> to vector<8x256xi1>
    %396 = arith.select %395, %393, %392 : vector<8x256xi1>, vector<8x256xf32>
    %397 = vector.shape_cast %10 : vector<1x256xi1> to vector<1x256xi1>
    %398 = vector.broadcast %397 : vector<1x256xi1> to vector<8x256xi1>
    %399 = arith.select %398, %392, %393 : vector<8x256xi1>, vector<8x256xf32>
    %c16_206 = arith.constant 16 : index
    %c0_207 = arith.constant 0 : index
    %400 = vector.load %arg7[%c16_206, %c0_207] : memref<72x256xf32, #tpu.memory_space<vmem>>, vector<8x256xf32>
    tpu.vector_store %arg7[%c16_206, %c0_207], %396 {strides = array<i32>} : memref<72x256xf32, #tpu.memory_space<vmem>>, vector<8x256xf32>,
    %c40_208 = arith.constant 40 : index
    %c0_209 = arith.constant 0 : index
    %401 = vector.load %arg7[%c40_208, %c0_209] : memref<72x256xf32, #tpu.memory_space<vmem>>, vector<8x256xf32>
    tpu.vector_store %arg7[%c40_208, %c0_209], %369 {strides = array<i32>} : memref<72x256xf32, #tpu.memory_space<vmem>>, vector<8x256xf32>,
    %c64_210 = arith.constant 64 : index
    %c0_211 = arith.constant 0 : index
    %402 = vector.load %arg7[%c64_210, %c0_211] : memref<72x256xf32, #tpu.memory_space<vmem>>, vector<8x256xf32>
    tpu.vector_store %arg7[%c64_210, %c0_211], %399 {strides = array<i32>} : memref<72x256xf32, #tpu.memory_space<vmem>>, vector<8x256xf32>,
    %c0_212 = arith.constant 0 : index
    %c0_213 = arith.constant 0 : index
    %403 = vector.load %arg7[%c0_212, %c0_213] : memref<72x256xf32, #tpu.memory_space<vmem>>, vector<72x256xf32>
    %404 = arith.truncf %403 : vector<72x256xf32> to vector<72x256xbf16>
    %cst_214 = arith.constant dense<0.000000e+00> : vector<8x256xf32>
    %405 = tpu.matmul %361, %404, %cst_214 {dimension_numbers = #tpu.dot_dimension_numbers<[1], [0], [0], [1], [0, 0, 1, 1], [], []>} : vector<8x72xbf16>, vector<72x256xbf16>, vector<8x256xf32> -> vector<8x256xf32>
    %cst_215 = arith.constant dense<0.000000e+00> : vector<8xf32>
    %406 = vector.multi_reduction <add>, %405, %cst_215 [1] : vector<8x256xf32> to vector<8xf32>
    %407 = vector.shape_cast %406 : vector<8xf32> to vector<8x1xf32>
    %cst_216 = arith.constant 3.906250e-03 : f32
    %408 = vector.broadcast %cst_216 : f32 to vector<8x1xf32>
    %409 = arith.mulf %407, %408 : vector<8x1xf32>
    %410 = arith.mulf %405, %405 : vector<8x256xf32>
    %cst_217 = arith.constant dense<0.000000e+00> : vector<8xf32>
    %411 = vector.multi_reduction <add>, %410, %cst_217 [1] : vector<8x256xf32> to vector<8xf32>
    %412 = vector.shape_cast %411 : vector<8xf32> to vector<8x1xf32>
    %cst_218 = arith.constant 3.906250e-03 : f32
    %413 = vector.broadcast %cst_218 : f32 to vector<8x1xf32>
    %414 = arith.mulf %412, %413 : vector<8x1xf32>
    %415 = arith.mulf %409, %409 : vector<8x1xf32>
    %416 = arith.subf %414, %415 : vector<8x1xf32>
    %cst_219 = arith.constant 0.000000e+00 : f32
    %417 = vector.broadcast %cst_219 : f32 to vector<8x1xf32>
    %418 = arith.maximumf %416, %417 : vector<8x1xf32>
    %419 = vector.broadcast %409 : vector<8x1xf32> to vector<8x256xf32>
    %420 = arith.subf %405, %419 : vector<8x256xf32>
    %cst_220 = arith.constant 9.99999974E-6 : f32
    %421 = vector.broadcast %cst_220 : f32 to vector<8x1xf32>
    %422 = arith.addf %418, %421 : vector<8x1xf32>
    %423 = math.rsqrt %422 : vector<8x1xf32>
    %424 = vector.broadcast %423 : vector<8x1xf32> to vector<8x256xf32>
    %425 = arith.mulf %420, %424 : vector<8x256xf32>
    %426 = arith.addf %288, %425 : vector<8x256xf32>
    %427 = arith.addf %12, %426 : vector<8x256xf32>
    %cst_221 = arith.constant dense<0.000000e+00> : vector<8xf32>
    %428 = vector.multi_reduction <add>, %427, %cst_221 [1] : vector<8x256xf32> to vector<8xf32>
    %429 = vector.shape_cast %428 : vector<8xf32> to vector<8x1xf32>
    %cst_222 = arith.constant 3.906250e-03 : f32
    %430 = vector.broadcast %cst_222 : f32 to vector<8x1xf32>
    %431 = arith.mulf %429, %430 : vector<8x1xf32>
    %432 = arith.mulf %427, %427 : vector<8x256xf32>
    %cst_223 = arith.constant dense<0.000000e+00> : vector<8xf32>
    %433 = vector.multi_reduction <add>, %432, %cst_223 [1] : vector<8x256xf32> to vector<8xf32>
    %434 = vector.shape_cast %433 : vector<8xf32> to vector<8x1xf32>
    %cst_224 = arith.constant 3.906250e-03 : f32
    %435 = vector.broadcast %cst_224 : f32 to vector<8x1xf32>
    %436 = arith.mulf %434, %435 : vector<8x1xf32>
    %437 = arith.mulf %431, %431 : vector<8x1xf32>
    %438 = arith.subf %436, %437 : vector<8x1xf32>
    %cst_225 = arith.constant 0.000000e+00 : f32
    %439 = vector.broadcast %cst_225 : f32 to vector<8x1xf32>
    %440 = arith.maximumf %438, %439 : vector<8x1xf32>
    %441 = vector.broadcast %431 : vector<8x1xf32> to vector<8x256xf32>
    %442 = arith.subf %427, %441 : vector<8x256xf32>
    %cst_226 = arith.constant 9.99999997E-7 : f32
    %443 = vector.broadcast %cst_226 : f32 to vector<8x1xf32>
    %444 = arith.addf %440, %443 : vector<8x1xf32>
    %445 = math.rsqrt %444 : vector<8x1xf32>
    %446 = vector.broadcast %445 : vector<8x1xf32> to vector<8x256xf32>
    %447 = arith.mulf %442, %446 : vector<8x256xf32>
    %c1_i32_227 = arith.constant 1 : i32
    %448 = tpu.dynamic_rotate %447 by %c1_i32_227 dim 1 : vector<8x256xf32>, i32 -> vector<8x256xf32>
    %c255_i32_228 = arith.constant 255 : i32
    %449 = tpu.dynamic_rotate %447 by %c255_i32_228 dim 1 : vector<8x256xf32>, i32 -> vector<8x256xf32>
    %450 = vector.shape_cast %4 : vector<1x256xi1> to vector<1x256xi1>
    %451 = vector.broadcast %450 : vector<1x256xi1> to vector<8x256xi1>
    %452 = arith.select %451, %449, %448 : vector<8x256xi1>, vector<8x256xf32>
    %453 = vector.shape_cast %6 : vector<1x256xi1> to vector<1x256xi1>
    %454 = vector.broadcast %453 : vector<1x256xi1> to vector<8x256xi1>
    %455 = arith.select %454, %448, %449 : vector<8x256xi1>, vector<8x256xf32>
    %c16_i32_229 = arith.constant 16 : i32
    %456 = tpu.dynamic_rotate %452 by %c16_i32_229 dim 1 : vector<8x256xf32>, i32 -> vector<8x256xf32>
    %c240_i32_230 = arith.constant 240 : i32
    %457 = tpu.dynamic_rotate %452 by %c240_i32_230 dim 1 : vector<8x256xf32>, i32 -> vector<8x256xf32>
    %458 = vector.shape_cast %8 : vector<1x256xi1> to vector<1x256xi1>
    %459 = vector.broadcast %458 : vector<1x256xi1> to vector<8x256xi1>
    %460 = arith.select %459, %457, %456 : vector<8x256xi1>, vector<8x256xf32>
    %461 = vector.shape_cast %10 : vector<1x256xi1> to vector<1x256xi1>
    %462 = vector.broadcast %461 : vector<1x256xi1> to vector<8x256xi1>
    %463 = arith.select %462, %456, %457 : vector<8x256xi1>, vector<8x256xf32>
    %c0_231 = arith.constant 0 : index
    %c0_232 = arith.constant 0 : index
    %464 = vector.load %arg7[%c0_231, %c0_232] : memref<72x256xf32, #tpu.memory_space<vmem>>, vector<8x256xf32>
    tpu.vector_store %arg7[%c0_231, %c0_232], %460 {strides = array<i32>} : memref<72x256xf32, #tpu.memory_space<vmem>>, vector<8x256xf32>,
    %c24_233 = arith.constant 24 : index
    %c0_234 = arith.constant 0 : index
    %465 = vector.load %arg7[%c24_233, %c0_234] : memref<72x256xf32, #tpu.memory_space<vmem>>, vector<8x256xf32>
    tpu.vector_store %arg7[%c24_233, %c0_234], %452 {strides = array<i32>} : memref<72x256xf32, #tpu.memory_space<vmem>>, vector<8x256xf32>,
    %c48_235 = arith.constant 48 : index
    %c0_236 = arith.constant 0 : index
    %466 = vector.load %arg7[%c48_235, %c0_236] : memref<72x256xf32, #tpu.memory_space<vmem>>, vector<8x256xf32>
    tpu.vector_store %arg7[%c48_235, %c0_236], %463 {strides = array<i32>} : memref<72x256xf32, #tpu.memory_space<vmem>>, vector<8x256xf32>,
    %c16_i32_237 = arith.constant 16 : i32
    %467 = tpu.dynamic_rotate %447 by %c16_i32_237 dim 1 : vector<8x256xf32>, i32 -> vector<8x256xf32>
    %c240_i32_238 = arith.constant 240 : i32
    %468 = tpu.dynamic_rotate %447 by %c240_i32_238 dim 1 : vector<8x256xf32>, i32 -> vector<8x256xf32>
    %469 = vector.shape_cast %8 : vector<1x256xi1> to vector<1x256xi1>
    %470 = vector.broadcast %469 : vector<1x256xi1> to vector<8x256xi1>
    %471 = arith.select %470, %468, %467 : vector<8x256xi1>, vector<8x256xf32>
    %472 = vector.shape_cast %10 : vector<1x256xi1> to vector<1x256xi1>
    %473 = vector.broadcast %472 : vector<1x256xi1> to vector<8x256xi1>
    %474 = arith.select %473, %467, %468 : vector<8x256xi1>, vector<8x256xf32>
    %c8_239 = arith.constant 8 : index
    %c0_240 = arith.constant 0 : index
    %475 = vector.load %arg7[%c8_239, %c0_240] : memref<72x256xf32, #tpu.memory_space<vmem>>, vector<8x256xf32>
    tpu.vector_store %arg7[%c8_239, %c0_240], %471 {strides = array<i32>} : memref<72x256xf32, #tpu.memory_space<vmem>>, vector<8x256xf32>,
    %c32_241 = arith.constant 32 : index
    %c0_242 = arith.constant 0 : index
    %476 = vector.load %arg7[%c32_241, %c0_242] : memref<72x256xf32, #tpu.memory_space<vmem>>, vector<8x256xf32>
    tpu.vector_store %arg7[%c32_241, %c0_242], %447 {strides = array<i32>} : memref<72x256xf32, #tpu.memory_space<vmem>>, vector<8x256xf32>,
    %c56_243 = arith.constant 56 : index
    %c0_244 = arith.constant 0 : index
    %477 = vector.load %arg7[%c56_243, %c0_244] : memref<72x256xf32, #tpu.memory_space<vmem>>, vector<8x256xf32>
    tpu.vector_store %arg7[%c56_243, %c0_244], %474 {strides = array<i32>} : memref<72x256xf32, #tpu.memory_space<vmem>>, vector<8x256xf32>,
    %c16_i32_245 = arith.constant 16 : i32
    %478 = tpu.dynamic_rotate %455 by %c16_i32_245 dim 1 : vector<8x256xf32>, i32 -> vector<8x256xf32>
    %c240_i32_246 = arith.constant 240 : i32
    %479 = tpu.dynamic_rotate %455 by %c240_i32_246 dim 1 : vector<8x256xf32>, i32 -> vector<8x256xf32>
    %480 = vector.shape_cast %8 : vector<1x256xi1> to vector<1x256xi1>
    %481 = vector.broadcast %480 : vector<1x256xi1> to vector<8x256xi1>
    %482 = arith.select %481, %479, %478 : vector<8x256xi1>, vector<8x256xf32>
    %483 = vector.shape_cast %10 : vector<1x256xi1> to vector<1x256xi1>
    %484 = vector.broadcast %483 : vector<1x256xi1> to vector<8x256xi1>
    %485 = arith.select %484, %478, %479 : vector<8x256xi1>, vector<8x256xf32>
    %c16_247 = arith.constant 16 : index
    %c0_248 = arith.constant 0 : index
    %486 = vector.load %arg7[%c16_247, %c0_248] : memref<72x256xf32, #tpu.memory_space<vmem>>, vector<8x256xf32>
    tpu.vector_store %arg7[%c16_247, %c0_248], %482 {strides = array<i32>} : memref<72x256xf32, #tpu.memory_space<vmem>>, vector<8x256xf32>,
    %c40_249 = arith.constant 40 : index
    %c0_250 = arith.constant 0 : index
    %487 = vector.load %arg7[%c40_249, %c0_250] : memref<72x256xf32, #tpu.memory_space<vmem>>, vector<8x256xf32>
    tpu.vector_store %arg7[%c40_249, %c0_250], %455 {strides = array<i32>} : memref<72x256xf32, #tpu.memory_space<vmem>>, vector<8x256xf32>,
    %c64_251 = arith.constant 64 : index
    %c0_252 = arith.constant 0 : index
    %488 = vector.load %arg7[%c64_251, %c0_252] : memref<72x256xf32, #tpu.memory_space<vmem>>, vector<8x256xf32>
    tpu.vector_store %arg7[%c64_251, %c0_252], %485 {strides = array<i32>} : memref<72x256xf32, #tpu.memory_space<vmem>>, vector<8x256xf32>,
    %c0_253 = arith.constant 0 : index
    %c0_254 = arith.constant 0 : index
    %489 = vector.load %arg7[%c0_253, %c0_254] : memref<72x256xf32, #tpu.memory_space<vmem>>, vector<72x256xf32>
    %490 = arith.truncf %489 : vector<72x256xf32> to vector<72x256xbf16>
    %c0_255 = arith.constant 0 : index
    %c0_256 = arith.constant 0 : index
    %491 = vector.load %arg5[%c0_255, %c0_256] : memref<256x64xbf16, #tpu.memory_space<vmem>>, vector<256x64xbf16>
    %cst_257 = arith.constant dense<0.000000e+00> : vector<72x64xf32>
    %492 = tpu.matmul %490, %491, %cst_257 {dimension_numbers = #tpu.dot_dimension_numbers<[1], [0], [0], [1], [0, 0, 1, 1], [], []>} : vector<72x256xbf16>, vector<256x64xbf16>, vector<72x64xf32> -> vector<72x64xf32>
    %c0_258 = arith.constant 0 : index
    %c0_259 = arith.constant 0 : index
    %493 = vector.load %arg3[%c0_258, %c0_259] : memref<16x72xbf16, #tpu.memory_space<vmem>>, vector<16x72xbf16>
    %494 = arith.truncf %492 : vector<72x64xf32> to vector<72x64xbf16>
    %cst_260 = arith.constant dense<0.000000e+00> : vector<16x64xf32>
    %495 = tpu.matmul %493, %494, %cst_260 {dimension_numbers = #tpu.dot_dimension_numbers<[1], [0], [0], [1], [0, 0, 1, 1], [], []>} : vector<16x72xbf16>, vector<72x64xbf16>, vector<16x64xf32> -> vector<16x64xf32>
    %c0_261 = arith.constant 0 : index
    %c0_262 = arith.constant 0 : index
    %496 = vector.load %arg4[%c0_261, %c0_262] : memref<16x1xf32, #tpu.memory_space<vmem>>, vector<16x1xf32>
    %497 = vector.broadcast %496 : vector<16x1xf32> to vector<16x64xf32>
    %498 = arith.addf %495, %497 : vector<16x64xf32>
    %c0_263 = arith.constant 0 : index
    %c0_264 = arith.constant 0 : index
    %c0_265 = arith.constant 0 : index
    %499 = vector.load %arg6[%c0_263, %c0_264, %c0_265] : memref<2x16x64xf32, #tpu.memory_space<vmem>>, vector<1x16x64xf32>
    %500 = vector.shape_cast %499 : vector<1x16x64xf32> to vector<16x64xf32>
    %501 = vector.shape_cast %498 : vector<16x64xf32> to vector<1x16x64xf32>
    tpu.vector_store %arg6[%c0_263, %c0_264, %c0_265], %501 {strides = array<i32>} : memref<2x16x64xf32, #tpu.memory_space<vmem>>, vector<1x16x64xf32>,
    %c1_266 = arith.constant 1 : index
    %c0_267 = arith.constant 0 : index
    %c0_268 = arith.constant 0 : index
    %502 = vector.load %arg1[%c1_266, %c0_267, %c0_268] : memref<2x8x256xf32, #tpu.memory_space<vmem>>, vector<1x8x256xf32>
    %503 = vector.shape_cast %502 : vector<1x8x256xf32> to vector<8x256xf32>
    %c0_269 = arith.constant 0 : index
    %c0_270 = arith.constant 0 : index
    %c0_271 = arith.constant 0 : index
    %504 = vector.load %arg2[%c0_269, %c0_270, %c0_271] : memref<6x8x72xbf16, #tpu.memory_space<vmem>>, vector<1x8x72xbf16>
    %505 = vector.shape_cast %504 : vector<1x8x72xbf16> to vector<8x72xbf16>
    %c1_i32_272 = arith.constant 1 : i32
    %506 = tpu.dynamic_rotate %503 by %c1_i32_272 dim 1 : vector<8x256xf32>, i32 -> vector<8x256xf32>
    %c255_i32_273 = arith.constant 255 : i32
    %507 = tpu.dynamic_rotate %503 by %c255_i32_273 dim 1 : vector<8x256xf32>, i32 -> vector<8x256xf32>
    %508 = vector.shape_cast %4 : vector<1x256xi1> to vector<1x256xi1>
    %509 = vector.broadcast %508 : vector<1x256xi1> to vector<8x256xi1>
    %510 = arith.select %509, %507, %506 : vector<8x256xi1>, vector<8x256xf32>
    %511 = vector.shape_cast %6 : vector<1x256xi1> to vector<1x256xi1>
    %512 = vector.broadcast %511 : vector<1x256xi1> to vector<8x256xi1>
    %513 = arith.select %512, %506, %507 : vector<8x256xi1>, vector<8x256xf32>
    %c16_i32_274 = arith.constant 16 : i32
    %514 = tpu.dynamic_rotate %510 by %c16_i32_274 dim 1 : vector<8x256xf32>, i32 -> vector<8x256xf32>
    %c240_i32_275 = arith.constant 240 : i32
    %515 = tpu.dynamic_rotate %510 by %c240_i32_275 dim 1 : vector<8x256xf32>, i32 -> vector<8x256xf32>
    %516 = vector.shape_cast %8 : vector<1x256xi1> to vector<1x256xi1>
    %517 = vector.broadcast %516 : vector<1x256xi1> to vector<8x256xi1>
    %518 = arith.select %517, %515, %514 : vector<8x256xi1>, vector<8x256xf32>
    %519 = vector.shape_cast %10 : vector<1x256xi1> to vector<1x256xi1>
    %520 = vector.broadcast %519 : vector<1x256xi1> to vector<8x256xi1>
    %521 = arith.select %520, %514, %515 : vector<8x256xi1>, vector<8x256xf32>
    %c0_276 = arith.constant 0 : index
    %c0_277 = arith.constant 0 : index
    %522 = vector.load %arg7[%c0_276, %c0_277] : memref<72x256xf32, #tpu.memory_space<vmem>>, vector<8x256xf32>
    tpu.vector_store %arg7[%c0_276, %c0_277], %518 {strides = array<i32>} : memref<72x256xf32, #tpu.memory_space<vmem>>, vector<8x256xf32>,
    %c24_278 = arith.constant 24 : index
    %c0_279 = arith.constant 0 : index
    %523 = vector.load %arg7[%c24_278, %c0_279] : memref<72x256xf32, #tpu.memory_space<vmem>>, vector<8x256xf32>
    tpu.vector_store %arg7[%c24_278, %c0_279], %510 {strides = array<i32>} : memref<72x256xf32, #tpu.memory_space<vmem>>, vector<8x256xf32>,
    %c48_280 = arith.constant 48 : index
    %c0_281 = arith.constant 0 : index
    %524 = vector.load %arg7[%c48_280, %c0_281] : memref<72x256xf32, #tpu.memory_space<vmem>>, vector<8x256xf32>
    tpu.vector_store %arg7[%c48_280, %c0_281], %521 {strides = array<i32>} : memref<72x256xf32, #tpu.memory_space<vmem>>, vector<8x256xf32>,
    %c16_i32_282 = arith.constant 16 : i32
    %525 = tpu.dynamic_rotate %503 by %c16_i32_282 dim 1 : vector<8x256xf32>, i32 -> vector<8x256xf32>
    %c240_i32_283 = arith.constant 240 : i32
    %526 = tpu.dynamic_rotate %503 by %c240_i32_283 dim 1 : vector<8x256xf32>, i32 -> vector<8x256xf32>
    %527 = vector.shape_cast %8 : vector<1x256xi1> to vector<1x256xi1>
    %528 = vector.broadcast %527 : vector<1x256xi1> to vector<8x256xi1>
    %529 = arith.select %528, %526, %525 : vector<8x256xi1>, vector<8x256xf32>
    %530 = vector.shape_cast %10 : vector<1x256xi1> to vector<1x256xi1>
    %531 = vector.broadcast %530 : vector<1x256xi1> to vector<8x256xi1>
    %532 = arith.select %531, %525, %526 : vector<8x256xi1>, vector<8x256xf32>
    %c8_284 = arith.constant 8 : index
    %c0_285 = arith.constant 0 : index
    %533 = vector.load %arg7[%c8_284, %c0_285] : memref<72x256xf32, #tpu.memory_space<vmem>>, vector<8x256xf32>
    tpu.vector_store %arg7[%c8_284, %c0_285], %529 {strides = array<i32>} : memref<72x256xf32, #tpu.memory_space<vmem>>, vector<8x256xf32>,
    %c32_286 = arith.constant 32 : index
    %c0_287 = arith.constant 0 : index
    %534 = vector.load %arg7[%c32_286, %c0_287] : memref<72x256xf32, #tpu.memory_space<vmem>>, vector<8x256xf32>
    tpu.vector_store %arg7[%c32_286, %c0_287], %503 {strides = array<i32>} : memref<72x256xf32, #tpu.memory_space<vmem>>, vector<8x256xf32>,
    %c56_288 = arith.constant 56 : index
    %c0_289 = arith.constant 0 : index
    %535 = vector.load %arg7[%c56_288, %c0_289] : memref<72x256xf32, #tpu.memory_space<vmem>>, vector<8x256xf32>
    tpu.vector_store %arg7[%c56_288, %c0_289], %532 {strides = array<i32>} : memref<72x256xf32, #tpu.memory_space<vmem>>, vector<8x256xf32>,
    %c16_i32_290 = arith.constant 16 : i32
    %536 = tpu.dynamic_rotate %513 by %c16_i32_290 dim 1 : vector<8x256xf32>, i32 -> vector<8x256xf32>
    %c240_i32_291 = arith.constant 240 : i32
    %537 = tpu.dynamic_rotate %513 by %c240_i32_291 dim 1 : vector<8x256xf32>, i32 -> vector<8x256xf32>
    %538 = vector.shape_cast %8 : vector<1x256xi1> to vector<1x256xi1>
    %539 = vector.broadcast %538 : vector<1x256xi1> to vector<8x256xi1>
    %540 = arith.select %539, %537, %536 : vector<8x256xi1>, vector<8x256xf32>
    %541 = vector.shape_cast %10 : vector<1x256xi1> to vector<1x256xi1>
    %542 = vector.broadcast %541 : vector<1x256xi1> to vector<8x256xi1>
    %543 = arith.select %542, %536, %537 : vector<8x256xi1>, vector<8x256xf32>
    %c16_292 = arith.constant 16 : index
    %c0_293 = arith.constant 0 : index
    %544 = vector.load %arg7[%c16_292, %c0_293] : memref<72x256xf32, #tpu.memory_space<vmem>>, vector<8x256xf32>
    tpu.vector_store %arg7[%c16_292, %c0_293], %540 {strides = array<i32>} : memref<72x256xf32, #tpu.memory_space<vmem>>, vector<8x256xf32>,
    %c40_294 = arith.constant 40 : index
    %c0_295 = arith.constant 0 : index
    %545 = vector.load %arg7[%c40_294, %c0_295] : memref<72x256xf32, #tpu.memory_space<vmem>>, vector<8x256xf32>
    tpu.vector_store %arg7[%c40_294, %c0_295], %513 {strides = array<i32>} : memref<72x256xf32, #tpu.memory_space<vmem>>, vector<8x256xf32>,
    %c64_296 = arith.constant 64 : index
    %c0_297 = arith.constant 0 : index
    %546 = vector.load %arg7[%c64_296, %c0_297] : memref<72x256xf32, #tpu.memory_space<vmem>>, vector<8x256xf32>
    tpu.vector_store %arg7[%c64_296, %c0_297], %543 {strides = array<i32>} : memref<72x256xf32, #tpu.memory_space<vmem>>, vector<8x256xf32>,
    %c0_298 = arith.constant 0 : index
    %c0_299 = arith.constant 0 : index
    %547 = vector.load %arg7[%c0_298, %c0_299] : memref<72x256xf32, #tpu.memory_space<vmem>>, vector<72x256xf32>
    %548 = arith.truncf %547 : vector<72x256xf32> to vector<72x256xbf16>
    %cst_300 = arith.constant dense<0.000000e+00> : vector<8x256xf32>
    %549 = tpu.matmul %505, %548, %cst_300 {dimension_numbers = #tpu.dot_dimension_numbers<[1], [0], [0], [1], [0, 0, 1, 1], [], []>} : vector<8x72xbf16>, vector<72x256xbf16>, vector<8x256xf32> -> vector<8x256xf32>
    %cst_301 = arith.constant dense<0.000000e+00> : vector<8xf32>
    %550 = vector.multi_reduction <add>, %549, %cst_301 [1] : vector<8x256xf32> to vector<8xf32>
    %551 = vector.shape_cast %550 : vector<8xf32> to vector<8x1xf32>
    %cst_302 = arith.constant 3.906250e-03 : f32
    %552 = vector.broadcast %cst_302 : f32 to vector<8x1xf32>
    %553 = arith.mulf %551, %552 : vector<8x1xf32>
    %554 = arith.mulf %549, %549 : vector<8x256xf32>
    %cst_303 = arith.constant dense<0.000000e+00> : vector<8xf32>
    %555 = vector.multi_reduction <add>, %554, %cst_303 [1] : vector<8x256xf32> to vector<8xf32>
    %556 = vector.shape_cast %555 : vector<8xf32> to vector<8x1xf32>
    %cst_304 = arith.constant 3.906250e-03 : f32
    %557 = vector.broadcast %cst_304 : f32 to vector<8x1xf32>
    %558 = arith.mulf %556, %557 : vector<8x1xf32>
    %559 = arith.mulf %553, %553 : vector<8x1xf32>
    %560 = arith.subf %558, %559 : vector<8x1xf32>
    %cst_305 = arith.constant 0.000000e+00 : f32
    %561 = vector.broadcast %cst_305 : f32 to vector<8x1xf32>
    %562 = arith.maximumf %560, %561 : vector<8x1xf32>
    %563 = vector.broadcast %553 : vector<8x1xf32> to vector<8x256xf32>
    %564 = arith.subf %549, %563 : vector<8x256xf32>
    %cst_306 = arith.constant 9.99999974E-6 : f32
    %565 = vector.broadcast %cst_306 : f32 to vector<8x1xf32>
    %566 = arith.addf %562, %565 : vector<8x1xf32>
    %567 = math.rsqrt %566 : vector<8x1xf32>
    %568 = vector.broadcast %567 : vector<8x1xf32> to vector<8x256xf32>
    %569 = arith.mulf %564, %568 : vector<8x256xf32>
    %cst_307 = arith.constant 0.000000e+00 : f32
    %570 = vector.broadcast %cst_307 : f32 to vector<8x256xf32>
    %571 = arith.cmpf oge, %569, %570 : vector<8x256xf32>
    %cst_308 = arith.constant 0.00999999977 : f32
    %572 = vector.broadcast %cst_308 : f32 to vector<8x256xf32>
    %573 = arith.mulf %572, %569 : vector<8x256xf32>
    %574 = arith.select %571, %569, %573 : vector<8x256xi1>, vector<8x256xf32>
    %c1_309 = arith.constant 1 : index
    %c0_310 = arith.constant 0 : index
    %c0_311 = arith.constant 0 : index
    %575 = vector.load %arg2[%c1_309, %c0_310, %c0_311] : memref<6x8x72xbf16, #tpu.memory_space<vmem>>, vector<1x8x72xbf16>
    %576 = vector.shape_cast %575 : vector<1x8x72xbf16> to vector<8x72xbf16>
    %c1_i32_312 = arith.constant 1 : i32
    %577 = tpu.dynamic_rotate %574 by %c1_i32_312 dim 1 : vector<8x256xf32>, i32 -> vector<8x256xf32>
    %c255_i32_313 = arith.constant 255 : i32
    %578 = tpu.dynamic_rotate %574 by %c255_i32_313 dim 1 : vector<8x256xf32>, i32 -> vector<8x256xf32>
    %579 = vector.shape_cast %4 : vector<1x256xi1> to vector<1x256xi1>
    %580 = vector.broadcast %579 : vector<1x256xi1> to vector<8x256xi1>
    %581 = arith.select %580, %578, %577 : vector<8x256xi1>, vector<8x256xf32>
    %582 = vector.shape_cast %6 : vector<1x256xi1> to vector<1x256xi1>
    %583 = vector.broadcast %582 : vector<1x256xi1> to vector<8x256xi1>
    %584 = arith.select %583, %577, %578 : vector<8x256xi1>, vector<8x256xf32>
    %c16_i32_314 = arith.constant 16 : i32
    %585 = tpu.dynamic_rotate %581 by %c16_i32_314 dim 1 : vector<8x256xf32>, i32 -> vector<8x256xf32>
    %c240_i32_315 = arith.constant 240 : i32
    %586 = tpu.dynamic_rotate %581 by %c240_i32_315 dim 1 : vector<8x256xf32>, i32 -> vector<8x256xf32>
    %587 = vector.shape_cast %8 : vector<1x256xi1> to vector<1x256xi1>
    %588 = vector.broadcast %587 : vector<1x256xi1> to vector<8x256xi1>
    %589 = arith.select %588, %586, %585 : vector<8x256xi1>, vector<8x256xf32>
    %590 = vector.shape_cast %10 : vector<1x256xi1> to vector<1x256xi1>
    %591 = vector.broadcast %590 : vector<1x256xi1> to vector<8x256xi1>
    %592 = arith.select %591, %585, %586 : vector<8x256xi1>, vector<8x256xf32>
    %c0_316 = arith.constant 0 : index
    %c0_317 = arith.constant 0 : index
    %593 = vector.load %arg7[%c0_316, %c0_317] : memref<72x256xf32, #tpu.memory_space<vmem>>, vector<8x256xf32>
    tpu.vector_store %arg7[%c0_316, %c0_317], %589 {strides = array<i32>} : memref<72x256xf32, #tpu.memory_space<vmem>>, vector<8x256xf32>,
    %c24_318 = arith.constant 24 : index
    %c0_319 = arith.constant 0 : index
    %594 = vector.load %arg7[%c24_318, %c0_319] : memref<72x256xf32, #tpu.memory_space<vmem>>, vector<8x256xf32>
    tpu.vector_store %arg7[%c24_318, %c0_319], %581 {strides = array<i32>} : memref<72x256xf32, #tpu.memory_space<vmem>>, vector<8x256xf32>,
    %c48_320 = arith.constant 48 : index
    %c0_321 = arith.constant 0 : index
    %595 = vector.load %arg7[%c48_320, %c0_321] : memref<72x256xf32, #tpu.memory_space<vmem>>, vector<8x256xf32>
    tpu.vector_store %arg7[%c48_320, %c0_321], %592 {strides = array<i32>} : memref<72x256xf32, #tpu.memory_space<vmem>>, vector<8x256xf32>,
    %c16_i32_322 = arith.constant 16 : i32
    %596 = tpu.dynamic_rotate %574 by %c16_i32_322 dim 1 : vector<8x256xf32>, i32 -> vector<8x256xf32>
    %c240_i32_323 = arith.constant 240 : i32
    %597 = tpu.dynamic_rotate %574 by %c240_i32_323 dim 1 : vector<8x256xf32>, i32 -> vector<8x256xf32>
    %598 = vector.shape_cast %8 : vector<1x256xi1> to vector<1x256xi1>
    %599 = vector.broadcast %598 : vector<1x256xi1> to vector<8x256xi1>
    %600 = arith.select %599, %597, %596 : vector<8x256xi1>, vector<8x256xf32>
    %601 = vector.shape_cast %10 : vector<1x256xi1> to vector<1x256xi1>
    %602 = vector.broadcast %601 : vector<1x256xi1> to vector<8x256xi1>
    %603 = arith.select %602, %596, %597 : vector<8x256xi1>, vector<8x256xf32>
    %c8_324 = arith.constant 8 : index
    %c0_325 = arith.constant 0 : index
    %604 = vector.load %arg7[%c8_324, %c0_325] : memref<72x256xf32, #tpu.memory_space<vmem>>, vector<8x256xf32>
    tpu.vector_store %arg7[%c8_324, %c0_325], %600 {strides = array<i32>} : memref<72x256xf32, #tpu.memory_space<vmem>>, vector<8x256xf32>,
    %c32_326 = arith.constant 32 : index
    %c0_327 = arith.constant 0 : index
    %605 = vector.load %arg7[%c32_326, %c0_327] : memref<72x256xf32, #tpu.memory_space<vmem>>, vector<8x256xf32>
    tpu.vector_store %arg7[%c32_326, %c0_327], %574 {strides = array<i32>} : memref<72x256xf32, #tpu.memory_space<vmem>>, vector<8x256xf32>,
    %c56_328 = arith.constant 56 : index
    %c0_329 = arith.constant 0 : index
    %606 = vector.load %arg7[%c56_328, %c0_329] : memref<72x256xf32, #tpu.memory_space<vmem>>, vector<8x256xf32>
    tpu.vector_store %arg7[%c56_328, %c0_329], %603 {strides = array<i32>} : memref<72x256xf32, #tpu.memory_space<vmem>>, vector<8x256xf32>,
    %c16_i32_330 = arith.constant 16 : i32
    %607 = tpu.dynamic_rotate %584 by %c16_i32_330 dim 1 : vector<8x256xf32>, i32 -> vector<8x256xf32>
    %c240_i32_331 = arith.constant 240 : i32
    %608 = tpu.dynamic_rotate %584 by %c240_i32_331 dim 1 : vector<8x256xf32>, i32 -> vector<8x256xf32>
    %609 = vector.shape_cast %8 : vector<1x256xi1> to vector<1x256xi1>
    %610 = vector.broadcast %609 : vector<1x256xi1> to vector<8x256xi1>
    %611 = arith.select %610, %608, %607 : vector<8x256xi1>, vector<8x256xf32>
    %612 = vector.shape_cast %10 : vector<1x256xi1> to vector<1x256xi1>
    %613 = vector.broadcast %612 : vector<1x256xi1> to vector<8x256xi1>
    %614 = arith.select %613, %607, %608 : vector<8x256xi1>, vector<8x256xf32>
    %c16_332 = arith.constant 16 : index
    %c0_333 = arith.constant 0 : index
    %615 = vector.load %arg7[%c16_332, %c0_333] : memref<72x256xf32, #tpu.memory_space<vmem>>, vector<8x256xf32>
    tpu.vector_store %arg7[%c16_332, %c0_333], %611 {strides = array<i32>} : memref<72x256xf32, #tpu.memory_space<vmem>>, vector<8x256xf32>,
    %c40_334 = arith.constant 40 : index
    %c0_335 = arith.constant 0 : index
    %616 = vector.load %arg7[%c40_334, %c0_335] : memref<72x256xf32, #tpu.memory_space<vmem>>, vector<8x256xf32>
    tpu.vector_store %arg7[%c40_334, %c0_335], %584 {strides = array<i32>} : memref<72x256xf32, #tpu.memory_space<vmem>>, vector<8x256xf32>,
    %c64_336 = arith.constant 64 : index
    %c0_337 = arith.constant 0 : index
    %617 = vector.load %arg7[%c64_336, %c0_337] : memref<72x256xf32, #tpu.memory_space<vmem>>, vector<8x256xf32>
    tpu.vector_store %arg7[%c64_336, %c0_337], %614 {strides = array<i32>} : memref<72x256xf32, #tpu.memory_space<vmem>>, vector<8x256xf32>,
    %c0_338 = arith.constant 0 : index
    %c0_339 = arith.constant 0 : index
    %618 = vector.load %arg7[%c0_338, %c0_339] : memref<72x256xf32, #tpu.memory_space<vmem>>, vector<72x256xf32>
    %619 = arith.truncf %618 : vector<72x256xf32> to vector<72x256xbf16>
    %cst_340 = arith.constant dense<0.000000e+00> : vector<8x256xf32>
    %620 = tpu.matmul %576, %619, %cst_340 {dimension_numbers = #tpu.dot_dimension_numbers<[1], [0], [0], [1], [0, 0, 1, 1], [], []>} : vector<8x72xbf16>, vector<72x256xbf16>, vector<8x256xf32> -> vector<8x256xf32>
    %cst_341 = arith.constant dense<0.000000e+00> : vector<8xf32>
    %621 = vector.multi_reduction <add>, %620, %cst_341 [1] : vector<8x256xf32> to vector<8xf32>
    %622 = vector.shape_cast %621 : vector<8xf32> to vector<8x1xf32>
    %cst_342 = arith.constant 3.906250e-03 : f32
    %623 = vector.broadcast %cst_342 : f32 to vector<8x1xf32>
    %624 = arith.mulf %622, %623 : vector<8x1xf32>
    %625 = arith.mulf %620, %620 : vector<8x256xf32>
    %cst_343 = arith.constant dense<0.000000e+00> : vector<8xf32>
    %626 = vector.multi_reduction <add>, %625, %cst_343 [1] : vector<8x256xf32> to vector<8xf32>
    %627 = vector.shape_cast %626 : vector<8xf32> to vector<8x1xf32>
    %cst_344 = arith.constant 3.906250e-03 : f32
    %628 = vector.broadcast %cst_344 : f32 to vector<8x1xf32>
    %629 = arith.mulf %627, %628 : vector<8x1xf32>
    %630 = arith.mulf %624, %624 : vector<8x1xf32>
    %631 = arith.subf %629, %630 : vector<8x1xf32>
    %cst_345 = arith.constant 0.000000e+00 : f32
    %632 = vector.broadcast %cst_345 : f32 to vector<8x1xf32>
    %633 = arith.maximumf %631, %632 : vector<8x1xf32>
    %634 = vector.broadcast %624 : vector<8x1xf32> to vector<8x256xf32>
    %635 = arith.subf %620, %634 : vector<8x256xf32>
    %cst_346 = arith.constant 9.99999974E-6 : f32
    %636 = vector.broadcast %cst_346 : f32 to vector<8x1xf32>
    %637 = arith.addf %633, %636 : vector<8x1xf32>
    %638 = math.rsqrt %637 : vector<8x1xf32>
    %639 = vector.broadcast %638 : vector<8x1xf32> to vector<8x256xf32>
    %640 = arith.mulf %635, %639 : vector<8x256xf32>
    %641 = arith.addf %503, %640 : vector<8x256xf32>
    %c2_347 = arith.constant 2 : index
    %c0_348 = arith.constant 0 : index
    %c0_349 = arith.constant 0 : index
    %642 = vector.load %arg2[%c2_347, %c0_348, %c0_349] : memref<6x8x72xbf16, #tpu.memory_space<vmem>>, vector<1x8x72xbf16>
    %643 = vector.shape_cast %642 : vector<1x8x72xbf16> to vector<8x72xbf16>
    %c1_i32_350 = arith.constant 1 : i32
    %644 = tpu.dynamic_rotate %641 by %c1_i32_350 dim 1 : vector<8x256xf32>, i32 -> vector<8x256xf32>
    %c255_i32_351 = arith.constant 255 : i32
    %645 = tpu.dynamic_rotate %641 by %c255_i32_351 dim 1 : vector<8x256xf32>, i32 -> vector<8x256xf32>
    %646 = vector.shape_cast %4 : vector<1x256xi1> to vector<1x256xi1>
    %647 = vector.broadcast %646 : vector<1x256xi1> to vector<8x256xi1>
    %648 = arith.select %647, %645, %644 : vector<8x256xi1>, vector<8x256xf32>
    %649 = vector.shape_cast %6 : vector<1x256xi1> to vector<1x256xi1>
    %650 = vector.broadcast %649 : vector<1x256xi1> to vector<8x256xi1>
    %651 = arith.select %650, %644, %645 : vector<8x256xi1>, vector<8x256xf32>
    %c16_i32_352 = arith.constant 16 : i32
    %652 = tpu.dynamic_rotate %648 by %c16_i32_352 dim 1 : vector<8x256xf32>, i32 -> vector<8x256xf32>
    %c240_i32_353 = arith.constant 240 : i32
    %653 = tpu.dynamic_rotate %648 by %c240_i32_353 dim 1 : vector<8x256xf32>, i32 -> vector<8x256xf32>
    %654 = vector.shape_cast %8 : vector<1x256xi1> to vector<1x256xi1>
    %655 = vector.broadcast %654 : vector<1x256xi1> to vector<8x256xi1>
    %656 = arith.select %655, %653, %652 : vector<8x256xi1>, vector<8x256xf32>
    %657 = vector.shape_cast %10 : vector<1x256xi1> to vector<1x256xi1>
    %658 = vector.broadcast %657 : vector<1x256xi1> to vector<8x256xi1>
    %659 = arith.select %658, %652, %653 : vector<8x256xi1>, vector<8x256xf32>
    %c0_354 = arith.constant 0 : index
    %c0_355 = arith.constant 0 : index
    %660 = vector.load %arg7[%c0_354, %c0_355] : memref<72x256xf32, #tpu.memory_space<vmem>>, vector<8x256xf32>
    tpu.vector_store %arg7[%c0_354, %c0_355], %656 {strides = array<i32>} : memref<72x256xf32, #tpu.memory_space<vmem>>, vector<8x256xf32>,
    %c24_356 = arith.constant 24 : index
    %c0_357 = arith.constant 0 : index
    %661 = vector.load %arg7[%c24_356, %c0_357] : memref<72x256xf32, #tpu.memory_space<vmem>>, vector<8x256xf32>
    tpu.vector_store %arg7[%c24_356, %c0_357], %648 {strides = array<i32>} : memref<72x256xf32, #tpu.memory_space<vmem>>, vector<8x256xf32>,
    %c48_358 = arith.constant 48 : index
    %c0_359 = arith.constant 0 : index
    %662 = vector.load %arg7[%c48_358, %c0_359] : memref<72x256xf32, #tpu.memory_space<vmem>>, vector<8x256xf32>
    tpu.vector_store %arg7[%c48_358, %c0_359], %659 {strides = array<i32>} : memref<72x256xf32, #tpu.memory_space<vmem>>, vector<8x256xf32>,
    %c16_i32_360 = arith.constant 16 : i32
    %663 = tpu.dynamic_rotate %641 by %c16_i32_360 dim 1 : vector<8x256xf32>, i32 -> vector<8x256xf32>
    %c240_i32_361 = arith.constant 240 : i32
    %664 = tpu.dynamic_rotate %641 by %c240_i32_361 dim 1 : vector<8x256xf32>, i32 -> vector<8x256xf32>
    %665 = vector.shape_cast %8 : vector<1x256xi1> to vector<1x256xi1>
    %666 = vector.broadcast %665 : vector<1x256xi1> to vector<8x256xi1>
    %667 = arith.select %666, %664, %663 : vector<8x256xi1>, vector<8x256xf32>
    %668 = vector.shape_cast %10 : vector<1x256xi1> to vector<1x256xi1>
    %669 = vector.broadcast %668 : vector<1x256xi1> to vector<8x256xi1>
    %670 = arith.select %669, %663, %664 : vector<8x256xi1>, vector<8x256xf32>
    %c8_362 = arith.constant 8 : index
    %c0_363 = arith.constant 0 : index
    %671 = vector.load %arg7[%c8_362, %c0_363] : memref<72x256xf32, #tpu.memory_space<vmem>>, vector<8x256xf32>
    tpu.vector_store %arg7[%c8_362, %c0_363], %667 {strides = array<i32>} : memref<72x256xf32, #tpu.memory_space<vmem>>, vector<8x256xf32>,
    %c32_364 = arith.constant 32 : index
    %c0_365 = arith.constant 0 : index
    %672 = vector.load %arg7[%c32_364, %c0_365] : memref<72x256xf32, #tpu.memory_space<vmem>>, vector<8x256xf32>
    tpu.vector_store %arg7[%c32_364, %c0_365], %641 {strides = array<i32>} : memref<72x256xf32, #tpu.memory_space<vmem>>, vector<8x256xf32>,
    %c56_366 = arith.constant 56 : index
    %c0_367 = arith.constant 0 : index
    %673 = vector.load %arg7[%c56_366, %c0_367] : memref<72x256xf32, #tpu.memory_space<vmem>>, vector<8x256xf32>
    tpu.vector_store %arg7[%c56_366, %c0_367], %670 {strides = array<i32>} : memref<72x256xf32, #tpu.memory_space<vmem>>, vector<8x256xf32>,
    %c16_i32_368 = arith.constant 16 : i32
    %674 = tpu.dynamic_rotate %651 by %c16_i32_368 dim 1 : vector<8x256xf32>, i32 -> vector<8x256xf32>
    %c240_i32_369 = arith.constant 240 : i32
    %675 = tpu.dynamic_rotate %651 by %c240_i32_369 dim 1 : vector<8x256xf32>, i32 -> vector<8x256xf32>
    %676 = vector.shape_cast %8 : vector<1x256xi1> to vector<1x256xi1>
    %677 = vector.broadcast %676 : vector<1x256xi1> to vector<8x256xi1>
    %678 = arith.select %677, %675, %674 : vector<8x256xi1>, vector<8x256xf32>
    %679 = vector.shape_cast %10 : vector<1x256xi1> to vector<1x256xi1>
    %680 = vector.broadcast %679 : vector<1x256xi1> to vector<8x256xi1>
    %681 = arith.select %680, %674, %675 : vector<8x256xi1>, vector<8x256xf32>
    %c16_370 = arith.constant 16 : index
    %c0_371 = arith.constant 0 : index
    %682 = vector.load %arg7[%c16_370, %c0_371] : memref<72x256xf32, #tpu.memory_space<vmem>>, vector<8x256xf32>
    tpu.vector_store %arg7[%c16_370, %c0_371], %678 {strides = array<i32>} : memref<72x256xf32, #tpu.memory_space<vmem>>, vector<8x256xf32>,
    %c40_372 = arith.constant 40 : index
    %c0_373 = arith.constant 0 : index
    %683 = vector.load %arg7[%c40_372, %c0_373] : memref<72x256xf32, #tpu.memory_space<vmem>>, vector<8x256xf32>
    tpu.vector_store %arg7[%c40_372, %c0_373], %651 {strides = array<i32>} : memref<72x256xf32, #tpu.memory_space<vmem>>, vector<8x256xf32>,
    %c64_374 = arith.constant 64 : index
    %c0_375 = arith.constant 0 : index
    %684 = vector.load %arg7[%c64_374, %c0_375] : memref<72x256xf32, #tpu.memory_space<vmem>>, vector<8x256xf32>
    tpu.vector_store %arg7[%c64_374, %c0_375], %681 {strides = array<i32>} : memref<72x256xf32, #tpu.memory_space<vmem>>, vector<8x256xf32>,
    %c0_376 = arith.constant 0 : index
    %c0_377 = arith.constant 0 : index
    %685 = vector.load %arg7[%c0_376, %c0_377] : memref<72x256xf32, #tpu.memory_space<vmem>>, vector<72x256xf32>
    %686 = arith.truncf %685 : vector<72x256xf32> to vector<72x256xbf16>
    %cst_378 = arith.constant dense<0.000000e+00> : vector<8x256xf32>
    %687 = tpu.matmul %643, %686, %cst_378 {dimension_numbers = #tpu.dot_dimension_numbers<[1], [0], [0], [1], [0, 0, 1, 1], [], []>} : vector<8x72xbf16>, vector<72x256xbf16>, vector<8x256xf32> -> vector<8x256xf32>
    %cst_379 = arith.constant dense<0.000000e+00> : vector<8xf32>
    %688 = vector.multi_reduction <add>, %687, %cst_379 [1] : vector<8x256xf32> to vector<8xf32>
    %689 = vector.shape_cast %688 : vector<8xf32> to vector<8x1xf32>
    %cst_380 = arith.constant 3.906250e-03 : f32
    %690 = vector.broadcast %cst_380 : f32 to vector<8x1xf32>
    %691 = arith.mulf %689, %690 : vector<8x1xf32>
    %692 = arith.mulf %687, %687 : vector<8x256xf32>
    %cst_381 = arith.constant dense<0.000000e+00> : vector<8xf32>
    %693 = vector.multi_reduction <add>, %692, %cst_381 [1] : vector<8x256xf32> to vector<8xf32>
    %694 = vector.shape_cast %693 : vector<8xf32> to vector<8x1xf32>
    %cst_382 = arith.constant 3.906250e-03 : f32
    %695 = vector.broadcast %cst_382 : f32 to vector<8x1xf32>
    %696 = arith.mulf %694, %695 : vector<8x1xf32>
    %697 = arith.mulf %691, %691 : vector<8x1xf32>
    %698 = arith.subf %696, %697 : vector<8x1xf32>
    %cst_383 = arith.constant 0.000000e+00 : f32
    %699 = vector.broadcast %cst_383 : f32 to vector<8x1xf32>
    %700 = arith.maximumf %698, %699 : vector<8x1xf32>
    %701 = vector.broadcast %691 : vector<8x1xf32> to vector<8x256xf32>
    %702 = arith.subf %687, %701 : vector<8x256xf32>
    %cst_384 = arith.constant 9.99999974E-6 : f32
    %703 = vector.broadcast %cst_384 : f32 to vector<8x1xf32>
    %704 = arith.addf %700, %703 : vector<8x1xf32>
    %705 = math.rsqrt %704 : vector<8x1xf32>
    %706 = vector.broadcast %705 : vector<8x1xf32> to vector<8x256xf32>
    %707 = arith.mulf %702, %706 : vector<8x256xf32>
    %cst_385 = arith.constant 0.000000e+00 : f32
    %708 = vector.broadcast %cst_385 : f32 to vector<8x256xf32>
    %709 = arith.cmpf oge, %707, %708 : vector<8x256xf32>
    %cst_386 = arith.constant 0.00999999977 : f32
    %710 = vector.broadcast %cst_386 : f32 to vector<8x256xf32>
    %711 = arith.mulf %710, %707 : vector<8x256xf32>
    %712 = arith.select %709, %707, %711 : vector<8x256xi1>, vector<8x256xf32>
    %c3_387 = arith.constant 3 : index
    %c0_388 = arith.constant 0 : index
    %c0_389 = arith.constant 0 : index
    %713 = vector.load %arg2[%c3_387, %c0_388, %c0_389] : memref<6x8x72xbf16, #tpu.memory_space<vmem>>, vector<1x8x72xbf16>
    %714 = vector.shape_cast %713 : vector<1x8x72xbf16> to vector<8x72xbf16>
    %c1_i32_390 = arith.constant 1 : i32
    %715 = tpu.dynamic_rotate %712 by %c1_i32_390 dim 1 : vector<8x256xf32>, i32 -> vector<8x256xf32>
    %c255_i32_391 = arith.constant 255 : i32
    %716 = tpu.dynamic_rotate %712 by %c255_i32_391 dim 1 : vector<8x256xf32>, i32 -> vector<8x256xf32>
    %717 = vector.shape_cast %4 : vector<1x256xi1> to vector<1x256xi1>
    %718 = vector.broadcast %717 : vector<1x256xi1> to vector<8x256xi1>
    %719 = arith.select %718, %716, %715 : vector<8x256xi1>, vector<8x256xf32>
    %720 = vector.shape_cast %6 : vector<1x256xi1> to vector<1x256xi1>
    %721 = vector.broadcast %720 : vector<1x256xi1> to vector<8x256xi1>
    %722 = arith.select %721, %715, %716 : vector<8x256xi1>, vector<8x256xf32>
    %c16_i32_392 = arith.constant 16 : i32
    %723 = tpu.dynamic_rotate %719 by %c16_i32_392 dim 1 : vector<8x256xf32>, i32 -> vector<8x256xf32>
    %c240_i32_393 = arith.constant 240 : i32
    %724 = tpu.dynamic_rotate %719 by %c240_i32_393 dim 1 : vector<8x256xf32>, i32 -> vector<8x256xf32>
    %725 = vector.shape_cast %8 : vector<1x256xi1> to vector<1x256xi1>
    %726 = vector.broadcast %725 : vector<1x256xi1> to vector<8x256xi1>
    %727 = arith.select %726, %724, %723 : vector<8x256xi1>, vector<8x256xf32>
    %728 = vector.shape_cast %10 : vector<1x256xi1> to vector<1x256xi1>
    %729 = vector.broadcast %728 : vector<1x256xi1> to vector<8x256xi1>
    %730 = arith.select %729, %723, %724 : vector<8x256xi1>, vector<8x256xf32>
    %c0_394 = arith.constant 0 : index
    %c0_395 = arith.constant 0 : index
    %731 = vector.load %arg7[%c0_394, %c0_395] : memref<72x256xf32, #tpu.memory_space<vmem>>, vector<8x256xf32>
    tpu.vector_store %arg7[%c0_394, %c0_395], %727 {strides = array<i32>} : memref<72x256xf32, #tpu.memory_space<vmem>>, vector<8x256xf32>,
    %c24_396 = arith.constant 24 : index
    %c0_397 = arith.constant 0 : index
    %732 = vector.load %arg7[%c24_396, %c0_397] : memref<72x256xf32, #tpu.memory_space<vmem>>, vector<8x256xf32>
    tpu.vector_store %arg7[%c24_396, %c0_397], %719 {strides = array<i32>} : memref<72x256xf32, #tpu.memory_space<vmem>>, vector<8x256xf32>,
    %c48_398 = arith.constant 48 : index
    %c0_399 = arith.constant 0 : index
    %733 = vector.load %arg7[%c48_398, %c0_399] : memref<72x256xf32, #tpu.memory_space<vmem>>, vector<8x256xf32>
    tpu.vector_store %arg7[%c48_398, %c0_399], %730 {strides = array<i32>} : memref<72x256xf32, #tpu.memory_space<vmem>>, vector<8x256xf32>,
    %c16_i32_400 = arith.constant 16 : i32
    %734 = tpu.dynamic_rotate %712 by %c16_i32_400 dim 1 : vector<8x256xf32>, i32 -> vector<8x256xf32>
    %c240_i32_401 = arith.constant 240 : i32
    %735 = tpu.dynamic_rotate %712 by %c240_i32_401 dim 1 : vector<8x256xf32>, i32 -> vector<8x256xf32>
    %736 = vector.shape_cast %8 : vector<1x256xi1> to vector<1x256xi1>
    %737 = vector.broadcast %736 : vector<1x256xi1> to vector<8x256xi1>
    %738 = arith.select %737, %735, %734 : vector<8x256xi1>, vector<8x256xf32>
    %739 = vector.shape_cast %10 : vector<1x256xi1> to vector<1x256xi1>
    %740 = vector.broadcast %739 : vector<1x256xi1> to vector<8x256xi1>
    %741 = arith.select %740, %734, %735 : vector<8x256xi1>, vector<8x256xf32>
    %c8_402 = arith.constant 8 : index
    %c0_403 = arith.constant 0 : index
    %742 = vector.load %arg7[%c8_402, %c0_403] : memref<72x256xf32, #tpu.memory_space<vmem>>, vector<8x256xf32>
    tpu.vector_store %arg7[%c8_402, %c0_403], %738 {strides = array<i32>} : memref<72x256xf32, #tpu.memory_space<vmem>>, vector<8x256xf32>,
    %c32_404 = arith.constant 32 : index
    %c0_405 = arith.constant 0 : index
    %743 = vector.load %arg7[%c32_404, %c0_405] : memref<72x256xf32, #tpu.memory_space<vmem>>, vector<8x256xf32>
    tpu.vector_store %arg7[%c32_404, %c0_405], %712 {strides = array<i32>} : memref<72x256xf32, #tpu.memory_space<vmem>>, vector<8x256xf32>,
    %c56_406 = arith.constant 56 : index
    %c0_407 = arith.constant 0 : index
    %744 = vector.load %arg7[%c56_406, %c0_407] : memref<72x256xf32, #tpu.memory_space<vmem>>, vector<8x256xf32>
    tpu.vector_store %arg7[%c56_406, %c0_407], %741 {strides = array<i32>} : memref<72x256xf32, #tpu.memory_space<vmem>>, vector<8x256xf32>,
    %c16_i32_408 = arith.constant 16 : i32
    %745 = tpu.dynamic_rotate %722 by %c16_i32_408 dim 1 : vector<8x256xf32>, i32 -> vector<8x256xf32>
    %c240_i32_409 = arith.constant 240 : i32
    %746 = tpu.dynamic_rotate %722 by %c240_i32_409 dim 1 : vector<8x256xf32>, i32 -> vector<8x256xf32>
    %747 = vector.shape_cast %8 : vector<1x256xi1> to vector<1x256xi1>
    %748 = vector.broadcast %747 : vector<1x256xi1> to vector<8x256xi1>
    %749 = arith.select %748, %746, %745 : vector<8x256xi1>, vector<8x256xf32>
    %750 = vector.shape_cast %10 : vector<1x256xi1> to vector<1x256xi1>
    %751 = vector.broadcast %750 : vector<1x256xi1> to vector<8x256xi1>
    %752 = arith.select %751, %745, %746 : vector<8x256xi1>, vector<8x256xf32>
    %c16_410 = arith.constant 16 : index
    %c0_411 = arith.constant 0 : index
    %753 = vector.load %arg7[%c16_410, %c0_411] : memref<72x256xf32, #tpu.memory_space<vmem>>, vector<8x256xf32>
    tpu.vector_store %arg7[%c16_410, %c0_411], %749 {strides = array<i32>} : memref<72x256xf32, #tpu.memory_space<vmem>>, vector<8x256xf32>,
    %c40_412 = arith.constant 40 : index
    %c0_413 = arith.constant 0 : index
    %754 = vector.load %arg7[%c40_412, %c0_413] : memref<72x256xf32, #tpu.memory_space<vmem>>, vector<8x256xf32>
    tpu.vector_store %arg7[%c40_412, %c0_413], %722 {strides = array<i32>} : memref<72x256xf32, #tpu.memory_space<vmem>>, vector<8x256xf32>,
    %c64_414 = arith.constant 64 : index
    %c0_415 = arith.constant 0 : index
    %755 = vector.load %arg7[%c64_414, %c0_415] : memref<72x256xf32, #tpu.memory_space<vmem>>, vector<8x256xf32>
    tpu.vector_store %arg7[%c64_414, %c0_415], %752 {strides = array<i32>} : memref<72x256xf32, #tpu.memory_space<vmem>>, vector<8x256xf32>,
    %c0_416 = arith.constant 0 : index
    %c0_417 = arith.constant 0 : index
    %756 = vector.load %arg7[%c0_416, %c0_417] : memref<72x256xf32, #tpu.memory_space<vmem>>, vector<72x256xf32>
    %757 = arith.truncf %756 : vector<72x256xf32> to vector<72x256xbf16>
    %cst_418 = arith.constant dense<0.000000e+00> : vector<8x256xf32>
    %758 = tpu.matmul %714, %757, %cst_418 {dimension_numbers = #tpu.dot_dimension_numbers<[1], [0], [0], [1], [0, 0, 1, 1], [], []>} : vector<8x72xbf16>, vector<72x256xbf16>, vector<8x256xf32> -> vector<8x256xf32>
    %cst_419 = arith.constant dense<0.000000e+00> : vector<8xf32>
    %759 = vector.multi_reduction <add>, %758, %cst_419 [1] : vector<8x256xf32> to vector<8xf32>
    %760 = vector.shape_cast %759 : vector<8xf32> to vector<8x1xf32>
    %cst_420 = arith.constant 3.906250e-03 : f32
    %761 = vector.broadcast %cst_420 : f32 to vector<8x1xf32>
    %762 = arith.mulf %760, %761 : vector<8x1xf32>
    %763 = arith.mulf %758, %758 : vector<8x256xf32>
    %cst_421 = arith.constant dense<0.000000e+00> : vector<8xf32>
    %764 = vector.multi_reduction <add>, %763, %cst_421 [1] : vector<8x256xf32> to vector<8xf32>
    %765 = vector.shape_cast %764 : vector<8xf32> to vector<8x1xf32>
    %cst_422 = arith.constant 3.906250e-03 : f32
    %766 = vector.broadcast %cst_422 : f32 to vector<8x1xf32>
    %767 = arith.mulf %765, %766 : vector<8x1xf32>
    %768 = arith.mulf %762, %762 : vector<8x1xf32>
    %769 = arith.subf %767, %768 : vector<8x1xf32>
    %cst_423 = arith.constant 0.000000e+00 : f32
    %770 = vector.broadcast %cst_423 : f32 to vector<8x1xf32>
    %771 = arith.maximumf %769, %770 : vector<8x1xf32>
    %772 = vector.broadcast %762 : vector<8x1xf32> to vector<8x256xf32>
    %773 = arith.subf %758, %772 : vector<8x256xf32>
    %cst_424 = arith.constant 9.99999974E-6 : f32
    %774 = vector.broadcast %cst_424 : f32 to vector<8x1xf32>
    %775 = arith.addf %771, %774 : vector<8x1xf32>
    %776 = math.rsqrt %775 : vector<8x1xf32>
    %777 = vector.broadcast %776 : vector<8x1xf32> to vector<8x256xf32>
    %778 = arith.mulf %773, %777 : vector<8x256xf32>
    %779 = arith.addf %641, %778 : vector<8x256xf32>
    %c4_425 = arith.constant 4 : index
    %c0_426 = arith.constant 0 : index
    %c0_427 = arith.constant 0 : index
    %780 = vector.load %arg2[%c4_425, %c0_426, %c0_427] : memref<6x8x72xbf16, #tpu.memory_space<vmem>>, vector<1x8x72xbf16>
    %781 = vector.shape_cast %780 : vector<1x8x72xbf16> to vector<8x72xbf16>
    %c1_i32_428 = arith.constant 1 : i32
    %782 = tpu.dynamic_rotate %779 by %c1_i32_428 dim 1 : vector<8x256xf32>, i32 -> vector<8x256xf32>
    %c255_i32_429 = arith.constant 255 : i32
    %783 = tpu.dynamic_rotate %779 by %c255_i32_429 dim 1 : vector<8x256xf32>, i32 -> vector<8x256xf32>
    %784 = vector.shape_cast %4 : vector<1x256xi1> to vector<1x256xi1>
    %785 = vector.broadcast %784 : vector<1x256xi1> to vector<8x256xi1>
    %786 = arith.select %785, %783, %782 : vector<8x256xi1>, vector<8x256xf32>
    %787 = vector.shape_cast %6 : vector<1x256xi1> to vector<1x256xi1>
    %788 = vector.broadcast %787 : vector<1x256xi1> to vector<8x256xi1>
    %789 = arith.select %788, %782, %783 : vector<8x256xi1>, vector<8x256xf32>
    %c16_i32_430 = arith.constant 16 : i32
    %790 = tpu.dynamic_rotate %786 by %c16_i32_430 dim 1 : vector<8x256xf32>, i32 -> vector<8x256xf32>
    %c240_i32_431 = arith.constant 240 : i32
    %791 = tpu.dynamic_rotate %786 by %c240_i32_431 dim 1 : vector<8x256xf32>, i32 -> vector<8x256xf32>
    %792 = vector.shape_cast %8 : vector<1x256xi1> to vector<1x256xi1>
    %793 = vector.broadcast %792 : vector<1x256xi1> to vector<8x256xi1>
    %794 = arith.select %793, %791, %790 : vector<8x256xi1>, vector<8x256xf32>
    %795 = vector.shape_cast %10 : vector<1x256xi1> to vector<1x256xi1>
    %796 = vector.broadcast %795 : vector<1x256xi1> to vector<8x256xi1>
    %797 = arith.select %796, %790, %791 : vector<8x256xi1>, vector<8x256xf32>
    %c0_432 = arith.constant 0 : index
    %c0_433 = arith.constant 0 : index
    %798 = vector.load %arg7[%c0_432, %c0_433] : memref<72x256xf32, #tpu.memory_space<vmem>>, vector<8x256xf32>
    tpu.vector_store %arg7[%c0_432, %c0_433], %794 {strides = array<i32>} : memref<72x256xf32, #tpu.memory_space<vmem>>, vector<8x256xf32>,
    %c24_434 = arith.constant 24 : index
    %c0_435 = arith.constant 0 : index
    %799 = vector.load %arg7[%c24_434, %c0_435] : memref<72x256xf32, #tpu.memory_space<vmem>>, vector<8x256xf32>
    tpu.vector_store %arg7[%c24_434, %c0_435], %786 {strides = array<i32>} : memref<72x256xf32, #tpu.memory_space<vmem>>, vector<8x256xf32>,
    %c48_436 = arith.constant 48 : index
    %c0_437 = arith.constant 0 : index
    %800 = vector.load %arg7[%c48_436, %c0_437] : memref<72x256xf32, #tpu.memory_space<vmem>>, vector<8x256xf32>
    tpu.vector_store %arg7[%c48_436, %c0_437], %797 {strides = array<i32>} : memref<72x256xf32, #tpu.memory_space<vmem>>, vector<8x256xf32>,
    %c16_i32_438 = arith.constant 16 : i32
    %801 = tpu.dynamic_rotate %779 by %c16_i32_438 dim 1 : vector<8x256xf32>, i32 -> vector<8x256xf32>
    %c240_i32_439 = arith.constant 240 : i32
    %802 = tpu.dynamic_rotate %779 by %c240_i32_439 dim 1 : vector<8x256xf32>, i32 -> vector<8x256xf32>
    %803 = vector.shape_cast %8 : vector<1x256xi1> to vector<1x256xi1>
    %804 = vector.broadcast %803 : vector<1x256xi1> to vector<8x256xi1>
    %805 = arith.select %804, %802, %801 : vector<8x256xi1>, vector<8x256xf32>
    %806 = vector.shape_cast %10 : vector<1x256xi1> to vector<1x256xi1>
    %807 = vector.broadcast %806 : vector<1x256xi1> to vector<8x256xi1>
    %808 = arith.select %807, %801, %802 : vector<8x256xi1>, vector<8x256xf32>
    %c8_440 = arith.constant 8 : index
    %c0_441 = arith.constant 0 : index
    %809 = vector.load %arg7[%c8_440, %c0_441] : memref<72x256xf32, #tpu.memory_space<vmem>>, vector<8x256xf32>
    tpu.vector_store %arg7[%c8_440, %c0_441], %805 {strides = array<i32>} : memref<72x256xf32, #tpu.memory_space<vmem>>, vector<8x256xf32>,
    %c32_442 = arith.constant 32 : index
    %c0_443 = arith.constant 0 : index
    %810 = vector.load %arg7[%c32_442, %c0_443] : memref<72x256xf32, #tpu.memory_space<vmem>>, vector<8x256xf32>
    tpu.vector_store %arg7[%c32_442, %c0_443], %779 {strides = array<i32>} : memref<72x256xf32, #tpu.memory_space<vmem>>, vector<8x256xf32>,
    %c56_444 = arith.constant 56 : index
    %c0_445 = arith.constant 0 : index
    %811 = vector.load %arg7[%c56_444, %c0_445] : memref<72x256xf32, #tpu.memory_space<vmem>>, vector<8x256xf32>
    tpu.vector_store %arg7[%c56_444, %c0_445], %808 {strides = array<i32>} : memref<72x256xf32, #tpu.memory_space<vmem>>, vector<8x256xf32>,
    %c16_i32_446 = arith.constant 16 : i32
    %812 = tpu.dynamic_rotate %789 by %c16_i32_446 dim 1 : vector<8x256xf32>, i32 -> vector<8x256xf32>
    %c240_i32_447 = arith.constant 240 : i32
    %813 = tpu.dynamic_rotate %789 by %c240_i32_447 dim 1 : vector<8x256xf32>, i32 -> vector<8x256xf32>
    %814 = vector.shape_cast %8 : vector<1x256xi1> to vector<1x256xi1>
    %815 = vector.broadcast %814 : vector<1x256xi1> to vector<8x256xi1>
    %816 = arith.select %815, %813, %812 : vector<8x256xi1>, vector<8x256xf32>
    %817 = vector.shape_cast %10 : vector<1x256xi1> to vector<1x256xi1>
    %818 = vector.broadcast %817 : vector<1x256xi1> to vector<8x256xi1>
    %819 = arith.select %818, %812, %813 : vector<8x256xi1>, vector<8x256xf32>
    %c16_448 = arith.constant 16 : index
    %c0_449 = arith.constant 0 : index
    %820 = vector.load %arg7[%c16_448, %c0_449] : memref<72x256xf32, #tpu.memory_space<vmem>>, vector<8x256xf32>
    tpu.vector_store %arg7[%c16_448, %c0_449], %816 {strides = array<i32>} : memref<72x256xf32, #tpu.memory_space<vmem>>, vector<8x256xf32>,
    %c40_450 = arith.constant 40 : index
    %c0_451 = arith.constant 0 : index
    %821 = vector.load %arg7[%c40_450, %c0_451] : memref<72x256xf32, #tpu.memory_space<vmem>>, vector<8x256xf32>
    tpu.vector_store %arg7[%c40_450, %c0_451], %789 {strides = array<i32>} : memref<72x256xf32, #tpu.memory_space<vmem>>, vector<8x256xf32>,
    %c64_452 = arith.constant 64 : index
    %c0_453 = arith.constant 0 : index
    %822 = vector.load %arg7[%c64_452, %c0_453] : memref<72x256xf32, #tpu.memory_space<vmem>>, vector<8x256xf32>
    tpu.vector_store %arg7[%c64_452, %c0_453], %819 {strides = array<i32>} : memref<72x256xf32, #tpu.memory_space<vmem>>, vector<8x256xf32>,
    %c0_454 = arith.constant 0 : index
    %c0_455 = arith.constant 0 : index
    %823 = vector.load %arg7[%c0_454, %c0_455] : memref<72x256xf32, #tpu.memory_space<vmem>>, vector<72x256xf32>
    %824 = arith.truncf %823 : vector<72x256xf32> to vector<72x256xbf16>
    %cst_456 = arith.constant dense<0.000000e+00> : vector<8x256xf32>
    %825 = tpu.matmul %781, %824, %cst_456 {dimension_numbers = #tpu.dot_dimension_numbers<[1], [0], [0], [1], [0, 0, 1, 1], [], []>} : vector<8x72xbf16>, vector<72x256xbf16>, vector<8x256xf32> -> vector<8x256xf32>
    %cst_457 = arith.constant dense<0.000000e+00> : vector<8xf32>
    %826 = vector.multi_reduction <add>, %825, %cst_457 [1] : vector<8x256xf32> to vector<8xf32>
    %827 = vector.shape_cast %826 : vector<8xf32> to vector<8x1xf32>
    %cst_458 = arith.constant 3.906250e-03 : f32
    %828 = vector.broadcast %cst_458 : f32 to vector<8x1xf32>
    %829 = arith.mulf %827, %828 : vector<8x1xf32>
    %830 = arith.mulf %825, %825 : vector<8x256xf32>
    %cst_459 = arith.constant dense<0.000000e+00> : vector<8xf32>
    %831 = vector.multi_reduction <add>, %830, %cst_459 [1] : vector<8x256xf32> to vector<8xf32>
    %832 = vector.shape_cast %831 : vector<8xf32> to vector<8x1xf32>
    %cst_460 = arith.constant 3.906250e-03 : f32
    %833 = vector.broadcast %cst_460 : f32 to vector<8x1xf32>
    %834 = arith.mulf %832, %833 : vector<8x1xf32>
    %835 = arith.mulf %829, %829 : vector<8x1xf32>
    %836 = arith.subf %834, %835 : vector<8x1xf32>
    %cst_461 = arith.constant 0.000000e+00 : f32
    %837 = vector.broadcast %cst_461 : f32 to vector<8x1xf32>
    %838 = arith.maximumf %836, %837 : vector<8x1xf32>
    %839 = vector.broadcast %829 : vector<8x1xf32> to vector<8x256xf32>
    %840 = arith.subf %825, %839 : vector<8x256xf32>
    %cst_462 = arith.constant 9.99999974E-6 : f32
    %841 = vector.broadcast %cst_462 : f32 to vector<8x1xf32>
    %842 = arith.addf %838, %841 : vector<8x1xf32>
    %843 = math.rsqrt %842 : vector<8x1xf32>
    %844 = vector.broadcast %843 : vector<8x1xf32> to vector<8x256xf32>
    %845 = arith.mulf %840, %844 : vector<8x256xf32>
    %cst_463 = arith.constant 0.000000e+00 : f32
    %846 = vector.broadcast %cst_463 : f32 to vector<8x256xf32>
    %847 = arith.cmpf oge, %845, %846 : vector<8x256xf32>
    %cst_464 = arith.constant 0.00999999977 : f32
    %848 = vector.broadcast %cst_464 : f32 to vector<8x256xf32>
    %849 = arith.mulf %848, %845 : vector<8x256xf32>
    %850 = arith.select %847, %845, %849 : vector<8x256xi1>, vector<8x256xf32>
    %c5_465 = arith.constant 5 : index
    %c0_466 = arith.constant 0 : index
    %c0_467 = arith.constant 0 : index
    %851 = vector.load %arg2[%c5_465, %c0_466, %c0_467] : memref<6x8x72xbf16, #tpu.memory_space<vmem>>, vector<1x8x72xbf16>
    %852 = vector.shape_cast %851 : vector<1x8x72xbf16> to vector<8x72xbf16>
    %c1_i32_468 = arith.constant 1 : i32
    %853 = tpu.dynamic_rotate %850 by %c1_i32_468 dim 1 : vector<8x256xf32>, i32 -> vector<8x256xf32>
    %c255_i32_469 = arith.constant 255 : i32
    %854 = tpu.dynamic_rotate %850 by %c255_i32_469 dim 1 : vector<8x256xf32>, i32 -> vector<8x256xf32>
    %855 = vector.shape_cast %4 : vector<1x256xi1> to vector<1x256xi1>
    %856 = vector.broadcast %855 : vector<1x256xi1> to vector<8x256xi1>
    %857 = arith.select %856, %854, %853 : vector<8x256xi1>, vector<8x256xf32>
    %858 = vector.shape_cast %6 : vector<1x256xi1> to vector<1x256xi1>
    %859 = vector.broadcast %858 : vector<1x256xi1> to vector<8x256xi1>
    %860 = arith.select %859, %853, %854 : vector<8x256xi1>, vector<8x256xf32>
    %c16_i32_470 = arith.constant 16 : i32
    %861 = tpu.dynamic_rotate %857 by %c16_i32_470 dim 1 : vector<8x256xf32>, i32 -> vector<8x256xf32>
    %c240_i32_471 = arith.constant 240 : i32
    %862 = tpu.dynamic_rotate %857 by %c240_i32_471 dim 1 : vector<8x256xf32>, i32 -> vector<8x256xf32>
    %863 = vector.shape_cast %8 : vector<1x256xi1> to vector<1x256xi1>
    %864 = vector.broadcast %863 : vector<1x256xi1> to vector<8x256xi1>
    %865 = arith.select %864, %862, %861 : vector<8x256xi1>, vector<8x256xf32>
    %866 = vector.shape_cast %10 : vector<1x256xi1> to vector<1x256xi1>
    %867 = vector.broadcast %866 : vector<1x256xi1> to vector<8x256xi1>
    %868 = arith.select %867, %861, %862 : vector<8x256xi1>, vector<8x256xf32>
    %c0_472 = arith.constant 0 : index
    %c0_473 = arith.constant 0 : index
    %869 = vector.load %arg7[%c0_472, %c0_473] : memref<72x256xf32, #tpu.memory_space<vmem>>, vector<8x256xf32>
    tpu.vector_store %arg7[%c0_472, %c0_473], %865 {strides = array<i32>} : memref<72x256xf32, #tpu.memory_space<vmem>>, vector<8x256xf32>,
    %c24_474 = arith.constant 24 : index
    %c0_475 = arith.constant 0 : index
    %870 = vector.load %arg7[%c24_474, %c0_475] : memref<72x256xf32, #tpu.memory_space<vmem>>, vector<8x256xf32>
    tpu.vector_store %arg7[%c24_474, %c0_475], %857 {strides = array<i32>} : memref<72x256xf32, #tpu.memory_space<vmem>>, vector<8x256xf32>,
    %c48_476 = arith.constant 48 : index
    %c0_477 = arith.constant 0 : index
    %871 = vector.load %arg7[%c48_476, %c0_477] : memref<72x256xf32, #tpu.memory_space<vmem>>, vector<8x256xf32>
    tpu.vector_store %arg7[%c48_476, %c0_477], %868 {strides = array<i32>} : memref<72x256xf32, #tpu.memory_space<vmem>>, vector<8x256xf32>,
    %c16_i32_478 = arith.constant 16 : i32
    %872 = tpu.dynamic_rotate %850 by %c16_i32_478 dim 1 : vector<8x256xf32>, i32 -> vector<8x256xf32>
    %c240_i32_479 = arith.constant 240 : i32
    %873 = tpu.dynamic_rotate %850 by %c240_i32_479 dim 1 : vector<8x256xf32>, i32 -> vector<8x256xf32>
    %874 = vector.shape_cast %8 : vector<1x256xi1> to vector<1x256xi1>
    %875 = vector.broadcast %874 : vector<1x256xi1> to vector<8x256xi1>
    %876 = arith.select %875, %873, %872 : vector<8x256xi1>, vector<8x256xf32>
    %877 = vector.shape_cast %10 : vector<1x256xi1> to vector<1x256xi1>
    %878 = vector.broadcast %877 : vector<1x256xi1> to vector<8x256xi1>
    %879 = arith.select %878, %872, %873 : vector<8x256xi1>, vector<8x256xf32>
    %c8_480 = arith.constant 8 : index
    %c0_481 = arith.constant 0 : index
    %880 = vector.load %arg7[%c8_480, %c0_481] : memref<72x256xf32, #tpu.memory_space<vmem>>, vector<8x256xf32>
    tpu.vector_store %arg7[%c8_480, %c0_481], %876 {strides = array<i32>} : memref<72x256xf32, #tpu.memory_space<vmem>>, vector<8x256xf32>,
    %c32_482 = arith.constant 32 : index
    %c0_483 = arith.constant 0 : index
    %881 = vector.load %arg7[%c32_482, %c0_483] : memref<72x256xf32, #tpu.memory_space<vmem>>, vector<8x256xf32>
    tpu.vector_store %arg7[%c32_482, %c0_483], %850 {strides = array<i32>} : memref<72x256xf32, #tpu.memory_space<vmem>>, vector<8x256xf32>,
    %c56_484 = arith.constant 56 : index
    %c0_485 = arith.constant 0 : index
    %882 = vector.load %arg7[%c56_484, %c0_485] : memref<72x256xf32, #tpu.memory_space<vmem>>, vector<8x256xf32>
    tpu.vector_store %arg7[%c56_484, %c0_485], %879 {strides = array<i32>} : memref<72x256xf32, #tpu.memory_space<vmem>>, vector<8x256xf32>,
    %c16_i32_486 = arith.constant 16 : i32
    %883 = tpu.dynamic_rotate %860 by %c16_i32_486 dim 1 : vector<8x256xf32>, i32 -> vector<8x256xf32>
    %c240_i32_487 = arith.constant 240 : i32
    %884 = tpu.dynamic_rotate %860 by %c240_i32_487 dim 1 : vector<8x256xf32>, i32 -> vector<8x256xf32>
    %885 = vector.shape_cast %8 : vector<1x256xi1> to vector<1x256xi1>
    %886 = vector.broadcast %885 : vector<1x256xi1> to vector<8x256xi1>
    %887 = arith.select %886, %884, %883 : vector<8x256xi1>, vector<8x256xf32>
    %888 = vector.shape_cast %10 : vector<1x256xi1> to vector<1x256xi1>
    %889 = vector.broadcast %888 : vector<1x256xi1> to vector<8x256xi1>
    %890 = arith.select %889, %883, %884 : vector<8x256xi1>, vector<8x256xf32>
    %c16_488 = arith.constant 16 : index
    %c0_489 = arith.constant 0 : index
    %891 = vector.load %arg7[%c16_488, %c0_489] : memref<72x256xf32, #tpu.memory_space<vmem>>, vector<8x256xf32>
    tpu.vector_store %arg7[%c16_488, %c0_489], %887 {strides = array<i32>} : memref<72x256xf32, #tpu.memory_space<vmem>>, vector<8x256xf32>,
    %c40_490 = arith.constant 40 : index
    %c0_491 = arith.constant 0 : index
    %892 = vector.load %arg7[%c40_490, %c0_491] : memref<72x256xf32, #tpu.memory_space<vmem>>, vector<8x256xf32>
    tpu.vector_store %arg7[%c40_490, %c0_491], %860 {strides = array<i32>} : memref<72x256xf32, #tpu.memory_space<vmem>>, vector<8x256xf32>,
    %c64_492 = arith.constant 64 : index
    %c0_493 = arith.constant 0 : index
    %893 = vector.load %arg7[%c64_492, %c0_493] : memref<72x256xf32, #tpu.memory_space<vmem>>, vector<8x256xf32>
    tpu.vector_store %arg7[%c64_492, %c0_493], %890 {strides = array<i32>} : memref<72x256xf32, #tpu.memory_space<vmem>>, vector<8x256xf32>,
    %c0_494 = arith.constant 0 : index
    %c0_495 = arith.constant 0 : index
    %894 = vector.load %arg7[%c0_494, %c0_495] : memref<72x256xf32, #tpu.memory_space<vmem>>, vector<72x256xf32>
    %895 = arith.truncf %894 : vector<72x256xf32> to vector<72x256xbf16>
    %cst_496 = arith.constant dense<0.000000e+00> : vector<8x256xf32>
    %896 = tpu.matmul %852, %895, %cst_496 {dimension_numbers = #tpu.dot_dimension_numbers<[1], [0], [0], [1], [0, 0, 1, 1], [], []>} : vector<8x72xbf16>, vector<72x256xbf16>, vector<8x256xf32> -> vector<8x256xf32>
    %cst_497 = arith.constant dense<0.000000e+00> : vector<8xf32>
    %897 = vector.multi_reduction <add>, %896, %cst_497 [1] : vector<8x256xf32> to vector<8xf32>
    %898 = vector.shape_cast %897 : vector<8xf32> to vector<8x1xf32>
    %cst_498 = arith.constant 3.906250e-03 : f32
    %899 = vector.broadcast %cst_498 : f32 to vector<8x1xf32>
    %900 = arith.mulf %898, %899 : vector<8x1xf32>
    %901 = arith.mulf %896, %896 : vector<8x256xf32>
    %cst_499 = arith.constant dense<0.000000e+00> : vector<8xf32>
    %902 = vector.multi_reduction <add>, %901, %cst_499 [1] : vector<8x256xf32> to vector<8xf32>
    %903 = vector.shape_cast %902 : vector<8xf32> to vector<8x1xf32>
    %cst_500 = arith.constant 3.906250e-03 : f32
    %904 = vector.broadcast %cst_500 : f32 to vector<8x1xf32>
    %905 = arith.mulf %903, %904 : vector<8x1xf32>
    %906 = arith.mulf %900, %900 : vector<8x1xf32>
    %907 = arith.subf %905, %906 : vector<8x1xf32>
    %cst_501 = arith.constant 0.000000e+00 : f32
    %908 = vector.broadcast %cst_501 : f32 to vector<8x1xf32>
    %909 = arith.maximumf %907, %908 : vector<8x1xf32>
    %910 = vector.broadcast %900 : vector<8x1xf32> to vector<8x256xf32>
    %911 = arith.subf %896, %910 : vector<8x256xf32>
    %cst_502 = arith.constant 9.99999974E-6 : f32
    %912 = vector.broadcast %cst_502 : f32 to vector<8x1xf32>
    %913 = arith.addf %909, %912 : vector<8x1xf32>
    %914 = math.rsqrt %913 : vector<8x1xf32>
    %915 = vector.broadcast %914 : vector<8x1xf32> to vector<8x256xf32>
    %916 = arith.mulf %911, %915 : vector<8x256xf32>
    %917 = arith.addf %779, %916 : vector<8x256xf32>
    %918 = arith.addf %503, %917 : vector<8x256xf32>
    %cst_503 = arith.constant dense<0.000000e+00> : vector<8xf32>
    %919 = vector.multi_reduction <add>, %918, %cst_503 [1] : vector<8x256xf32> to vector<8xf32>
    %920 = vector.shape_cast %919 : vector<8xf32> to vector<8x1xf32>
    %cst_504 = arith.constant 3.906250e-03 : f32
    %921 = vector.broadcast %cst_504 : f32 to vector<8x1xf32>
    %922 = arith.mulf %920, %921 : vector<8x1xf32>
    %923 = arith.mulf %918, %918 : vector<8x256xf32>
    %cst_505 = arith.constant dense<0.000000e+00> : vector<8xf32>
    %924 = vector.multi_reduction <add>, %923, %cst_505 [1] : vector<8x256xf32> to vector<8xf32>
    %925 = vector.shape_cast %924 : vector<8xf32> to vector<8x1xf32>
    %cst_506 = arith.constant 3.906250e-03 : f32
    %926 = vector.broadcast %cst_506 : f32 to vector<8x1xf32>
    %927 = arith.mulf %925, %926 : vector<8x1xf32>
    %928 = arith.mulf %922, %922 : vector<8x1xf32>
    %929 = arith.subf %927, %928 : vector<8x1xf32>
    %cst_507 = arith.constant 0.000000e+00 : f32
    %930 = vector.broadcast %cst_507 : f32 to vector<8x1xf32>
    %931 = arith.maximumf %929, %930 : vector<8x1xf32>
    %932 = vector.broadcast %922 : vector<8x1xf32> to vector<8x256xf32>
    %933 = arith.subf %918, %932 : vector<8x256xf32>
    %cst_508 = arith.constant 9.99999997E-7 : f32
    %934 = vector.broadcast %cst_508 : f32 to vector<8x1xf32>
    %935 = arith.addf %931, %934 : vector<8x1xf32>
    %936 = math.rsqrt %935 : vector<8x1xf32>
    %937 = vector.broadcast %936 : vector<8x1xf32> to vector<8x256xf32>
    %938 = arith.mulf %933, %937 : vector<8x256xf32>
    %c1_i32_509 = arith.constant 1 : i32
    %939 = tpu.dynamic_rotate %938 by %c1_i32_509 dim 1 : vector<8x256xf32>, i32 -> vector<8x256xf32>
    %c255_i32_510 = arith.constant 255 : i32
    %940 = tpu.dynamic_rotate %938 by %c255_i32_510 dim 1 : vector<8x256xf32>, i32 -> vector<8x256xf32>
    %941 = vector.shape_cast %4 : vector<1x256xi1> to vector<1x256xi1>
    %942 = vector.broadcast %941 : vector<1x256xi1> to vector<8x256xi1>
    %943 = arith.select %942, %940, %939 : vector<8x256xi1>, vector<8x256xf32>
    %944 = vector.shape_cast %6 : vector<1x256xi1> to vector<1x256xi1>
    %945 = vector.broadcast %944 : vector<1x256xi1> to vector<8x256xi1>
    %946 = arith.select %945, %939, %940 : vector<8x256xi1>, vector<8x256xf32>
    %c16_i32_511 = arith.constant 16 : i32
    %947 = tpu.dynamic_rotate %943 by %c16_i32_511 dim 1 : vector<8x256xf32>, i32 -> vector<8x256xf32>
    %c240_i32_512 = arith.constant 240 : i32
    %948 = tpu.dynamic_rotate %943 by %c240_i32_512 dim 1 : vector<8x256xf32>, i32 -> vector<8x256xf32>
    %949 = vector.shape_cast %8 : vector<1x256xi1> to vector<1x256xi1>
    %950 = vector.broadcast %949 : vector<1x256xi1> to vector<8x256xi1>
    %951 = arith.select %950, %948, %947 : vector<8x256xi1>, vector<8x256xf32>
    %952 = vector.shape_cast %10 : vector<1x256xi1> to vector<1x256xi1>
    %953 = vector.broadcast %952 : vector<1x256xi1> to vector<8x256xi1>
    %954 = arith.select %953, %947, %948 : vector<8x256xi1>, vector<8x256xf32>
    %c0_513 = arith.constant 0 : index
    %c0_514 = arith.constant 0 : index
    %955 = vector.load %arg7[%c0_513, %c0_514] : memref<72x256xf32, #tpu.memory_space<vmem>>, vector<8x256xf32>
    tpu.vector_store %arg7[%c0_513, %c0_514], %951 {strides = array<i32>} : memref<72x256xf32, #tpu.memory_space<vmem>>, vector<8x256xf32>,
    %c24_515 = arith.constant 24 : index
    %c0_516 = arith.constant 0 : index
    %956 = vector.load %arg7[%c24_515, %c0_516] : memref<72x256xf32, #tpu.memory_space<vmem>>, vector<8x256xf32>
    tpu.vector_store %arg7[%c24_515, %c0_516], %943 {strides = array<i32>} : memref<72x256xf32, #tpu.memory_space<vmem>>, vector<8x256xf32>,
    %c48_517 = arith.constant 48 : index
    %c0_518 = arith.constant 0 : index
    %957 = vector.load %arg7[%c48_517, %c0_518] : memref<72x256xf32, #tpu.memory_space<vmem>>, vector<8x256xf32>
    tpu.vector_store %arg7[%c48_517, %c0_518], %954 {strides = array<i32>} : memref<72x256xf32, #tpu.memory_space<vmem>>, vector<8x256xf32>,
    %c16_i32_519 = arith.constant 16 : i32
    %958 = tpu.dynamic_rotate %938 by %c16_i32_519 dim 1 : vector<8x256xf32>, i32 -> vector<8x256xf32>
    %c240_i32_520 = arith.constant 240 : i32
    %959 = tpu.dynamic_rotate %938 by %c240_i32_520 dim 1 : vector<8x256xf32>, i32 -> vector<8x256xf32>
    %960 = vector.shape_cast %8 : vector<1x256xi1> to vector<1x256xi1>
    %961 = vector.broadcast %960 : vector<1x256xi1> to vector<8x256xi1>
    %962 = arith.select %961, %959, %958 : vector<8x256xi1>, vector<8x256xf32>
    %963 = vector.shape_cast %10 : vector<1x256xi1> to vector<1x256xi1>
    %964 = vector.broadcast %963 : vector<1x256xi1> to vector<8x256xi1>
    %965 = arith.select %964, %958, %959 : vector<8x256xi1>, vector<8x256xf32>
    %c8_521 = arith.constant 8 : index
    %c0_522 = arith.constant 0 : index
    %966 = vector.load %arg7[%c8_521, %c0_522] : memref<72x256xf32, #tpu.memory_space<vmem>>, vector<8x256xf32>
    tpu.vector_store %arg7[%c8_521, %c0_522], %962 {strides = array<i32>} : memref<72x256xf32, #tpu.memory_space<vmem>>, vector<8x256xf32>,
    %c32_523 = arith.constant 32 : index
    %c0_524 = arith.constant 0 : index
    %967 = vector.load %arg7[%c32_523, %c0_524] : memref<72x256xf32, #tpu.memory_space<vmem>>, vector<8x256xf32>
    tpu.vector_store %arg7[%c32_523, %c0_524], %938 {strides = array<i32>} : memref<72x256xf32, #tpu.memory_space<vmem>>, vector<8x256xf32>,
    %c56_525 = arith.constant 56 : index
    %c0_526 = arith.constant 0 : index
    %968 = vector.load %arg7[%c56_525, %c0_526] : memref<72x256xf32, #tpu.memory_space<vmem>>, vector<8x256xf32>
    tpu.vector_store %arg7[%c56_525, %c0_526], %965 {strides = array<i32>} : memref<72x256xf32, #tpu.memory_space<vmem>>, vector<8x256xf32>,
    %c16_i32_527 = arith.constant 16 : i32
    %969 = tpu.dynamic_rotate %946 by %c16_i32_527 dim 1 : vector<8x256xf32>, i32 -> vector<8x256xf32>
    %c240_i32_528 = arith.constant 240 : i32
    %970 = tpu.dynamic_rotate %946 by %c240_i32_528 dim 1 : vector<8x256xf32>, i32 -> vector<8x256xf32>
    %971 = vector.shape_cast %8 : vector<1x256xi1> to vector<1x256xi1>
    %972 = vector.broadcast %971 : vector<1x256xi1> to vector<8x256xi1>
    %973 = arith.select %972, %970, %969 : vector<8x256xi1>, vector<8x256xf32>
    %974 = vector.shape_cast %10 : vector<1x256xi1> to vector<1x256xi1>
    %975 = vector.broadcast %974 : vector<1x256xi1> to vector<8x256xi1>
    %976 = arith.select %975, %969, %970 : vector<8x256xi1>, vector<8x256xf32>
    %c16_529 = arith.constant 16 : index
    %c0_530 = arith.constant 0 : index
    %977 = vector.load %arg7[%c16_529, %c0_530] : memref<72x256xf32, #tpu.memory_space<vmem>>, vector<8x256xf32>
    tpu.vector_store %arg7[%c16_529, %c0_530], %973 {strides = array<i32>} : memref<72x256xf32, #tpu.memory_space<vmem>>, vector<8x256xf32>,
    %c40_531 = arith.constant 40 : index
    %c0_532 = arith.constant 0 : index
    %978 = vector.load %arg7[%c40_531, %c0_532] : memref<72x256xf32, #tpu.memory_space<vmem>>, vector<8x256xf32>
    tpu.vector_store %arg7[%c40_531, %c0_532], %946 {strides = array<i32>} : memref<72x256xf32, #tpu.memory_space<vmem>>, vector<8x256xf32>,
    %c64_533 = arith.constant 64 : index
    %c0_534 = arith.constant 0 : index
    %979 = vector.load %arg7[%c64_533, %c0_534] : memref<72x256xf32, #tpu.memory_space<vmem>>, vector<8x256xf32>
    tpu.vector_store %arg7[%c64_533, %c0_534], %976 {strides = array<i32>} : memref<72x256xf32, #tpu.memory_space<vmem>>, vector<8x256xf32>,
    %c0_535 = arith.constant 0 : index
    %c0_536 = arith.constant 0 : index
    %980 = vector.load %arg7[%c0_535, %c0_536] : memref<72x256xf32, #tpu.memory_space<vmem>>, vector<72x256xf32>
    %981 = arith.truncf %980 : vector<72x256xf32> to vector<72x256xbf16>
    %c0_537 = arith.constant 0 : index
    %c0_538 = arith.constant 0 : index
    %982 = vector.load %arg5[%c0_537, %c0_538] : memref<256x64xbf16, #tpu.memory_space<vmem>>, vector<256x64xbf16>
    %cst_539 = arith.constant dense<0.000000e+00> : vector<72x64xf32>
    %983 = tpu.matmul %981, %982, %cst_539 {dimension_numbers = #tpu.dot_dimension_numbers<[1], [0], [0], [1], [0, 0, 1, 1], [], []>} : vector<72x256xbf16>, vector<256x64xbf16>, vector<72x64xf32> -> vector<72x64xf32>
    %c0_540 = arith.constant 0 : index
    %c0_541 = arith.constant 0 : index
    %984 = vector.load %arg3[%c0_540, %c0_541] : memref<16x72xbf16, #tpu.memory_space<vmem>>, vector<16x72xbf16>
    %985 = arith.truncf %983 : vector<72x64xf32> to vector<72x64xbf16>
    %cst_542 = arith.constant dense<0.000000e+00> : vector<16x64xf32>
    %986 = tpu.matmul %984, %985, %cst_542 {dimension_numbers = #tpu.dot_dimension_numbers<[1], [0], [0], [1], [0, 0, 1, 1], [], []>} : vector<16x72xbf16>, vector<72x64xbf16>, vector<16x64xf32> -> vector<16x64xf32>
    %c0_543 = arith.constant 0 : index
    %c0_544 = arith.constant 0 : index
    %987 = vector.load %arg4[%c0_543, %c0_544] : memref<16x1xf32, #tpu.memory_space<vmem>>, vector<16x1xf32>
    %988 = vector.broadcast %987 : vector<16x1xf32> to vector<16x64xf32>
    %989 = arith.addf %986, %988 : vector<16x64xf32>
    %c1_545 = arith.constant 1 : index
    %c0_546 = arith.constant 0 : index
    %c0_547 = arith.constant 0 : index
    %990 = vector.load %arg6[%c1_545, %c0_546, %c0_547] : memref<2x16x64xf32, #tpu.memory_space<vmem>>, vector<1x16x64xf32>
    %991 = vector.shape_cast %990 : vector<1x16x64xf32> to vector<16x64xf32>
    %992 = vector.shape_cast %989 : vector<16x64xf32> to vector<1x16x64xf32>
    tpu.vector_store %arg6[%c1_545, %c0_546, %c0_547], %992 {strides = array<i32>} : memref<2x16x64xf32, #tpu.memory_space<vmem>>, vector<1x16x64xf32>,
    return
  }
  func.func @transform_0(%arg0: i32) -> (i32, i32, i32) {
    %c0_i32 = arith.constant 0 : i32
    %c0_i32_0 = arith.constant 0 : i32
    %c0_i32_1 = arith.constant 0 : i32
    return %arg0, %c0_i32, %c0_i32_0 : i32, i32, i32
  }
  func.func @transform_1(%arg0: i32) -> (i32, i32, i32) {
    %c0_i32 = arith.constant 0 : i32
    %c0_i32_0 = arith.constant 0 : i32
    %c0_i32_1 = arith.constant 0 : i32
    %c0_i32_2 = arith.constant 0 : i32
    return %c0_i32, %c0_i32_0, %c0_i32_1 : i32, i32, i32
  }
  func.func @transform_2(%arg0: i32) -> (i32, i32) {
    %c0_i32 = arith.constant 0 : i32
    %c0_i32_0 = arith.constant 0 : i32
    %c0_i32_1 = arith.constant 0 : i32
    return %c0_i32, %c0_i32_0 : i32, i32
  }
  func.func @transform_3(%arg0: i32) -> (i32, i32) {
    %c0_i32 = arith.constant 0 : i32
    %c0_i32_0 = arith.constant 0 : i32
    %c0_i32_1 = arith.constant 0 : i32
    return %c0_i32, %c0_i32_0 : i32, i32
  }
  func.func @transform_4(%arg0: i32) -> (i32, i32) {
    %c0_i32 = arith.constant 0 : i32
    %c0_i32_0 = arith.constant 0 : i32
    %c0_i32_1 = arith.constant 0 : i32
    return %c0_i32, %c0_i32_0 : i32, i32
  }
  func.func @transform_5(%arg0: i32) -> (i32, i32, i32) {
    %c0_i32 = arith.constant 0 : i32
    %c0_i32_0 = arith.constant 0 : i32
    %c0_i32_1 = arith.constant 0 : i32
    return %arg0, %c0_i32, %c0_i32_0 : i32, i32, i32
  }
}

</mosaic_0001>

<llo_original>
// kernel: tpu_custom_call.1
$region0: #{tpu_custom_call.1}
  #allocation0 [shape = 'u32[]', space=smem, size = 0x4, offset = 0x4, fixed_abs, tag = 'smem constant byte address 0x4 - core index']
  #allocation1 [shape = 'u32[144,128]{1,0:T(1,128)}', space=vmem, size = 0x12000, scoped, tag = 'internal scratch']
  #allocation2 [shape = 'f32[72,256]{1,0:T(8,128)}', space=vmem, size = 0x12000, scoped, tag = 'scratch operand']
  %s0 = inlined_call_operand.vmem [shape: f32[4,8,256], index: 0, kind: input, shape index: {}]
  %s1 = inlined_call_operand.vmem [shape: bf16[6,8,72], index: 1, kind: input, shape index: {}]
  %s2 = inlined_call_operand.vmem [shape: bf16[16,72], index: 2, kind: input, shape index: {}]
  %s3 = inlined_call_operand.vmem [shape: f32[16,1], index: 3, kind: input, shape index: {}]
  %s4 = inlined_call_operand.vmem [shape: bf16[256,64], index: 4, kind: input, shape index: {}]
  %s5 = inlined_call_operand.hbm [shape: f32[4,16,64], index: 5, kind: output, shape index: {}]
  %s6 = sld [smem:[#allocation0]]
  $region53: #{tpu_custom_call.1} parent=0
    _
  %s8 = ssub.s32 1, %s6
  %s9 = scalar_select 0, %s8, %s6
  $region1: #{tpu_custom_call.1} parent=0
    #allocation3 [shape = 'u8[32768]{0}', space=vmem, size = 0x8000, scoped, tag = 'output window, operand 0']
    #allocation4 [shape = 's32[2]{0}', space=sflag, size = 0x8, scoped, tag = 'scoped memory for tpu_custom_call.1']
    %10 = vsyncpa [#allocation4], 0
    %s11 = scalar_lea.sflag [#allocation4], 1
    %12 = vsyncpa %s11, 0
    loop: start=0, step=1, limit=4
    $region2: #{tpu_custom_call.1} parent=1 // loop_pre_header
      _
    $region3: #{tpu_custom_call.1} parent=1 // loop_header
      %s14 = sphi 0, %s18
      %p15 = scmp.ge.s32.totalorder %s14, 4
      %s24 = sphi 0, %s26
      %s27 = sphi 0, %s24
      %s28 = sphi 0, %s27
      %s44 = sphi 0, %s28
      %s48 = sphi 0, %s48
      %s50 = sphi 0, %s48
      %s51 = sphi 0, %s50
      %s65 = sphi 0, %s51
      %s69 = sphi 0, %s69
      %s71 = sphi 0, %s69
      %s72 = sphi 0, %s71
      %s86 = sphi 0, %s72
      %s90 = sphi 0, %s90
      %s92 = sphi 0, %s90
      %s93 = sphi 0, %s92
      %s107 = sphi 0, %s93
      %s111 = sphi 0, %s111
      %s113 = sphi 0, %s111
      %s114 = sphi 0, %s113
      %s128 = sphi 0, %s114
      %s134 = sphi 0, %s136
      %s137 = sphi 0, %s134
      %s138 = sphi 0, %s137
      %s154 = sphi 0, %s138
    $region4: #{tpu_custom_call.1} parent=1 // loop_header_branch
      %17 = sbr.rel (%p15) target = $region8
    $region5: #{tpu_custom_call.1} parent=1 // loop_body
      %s19 = ssub.s32 %s14, 1
      %s20 = ssub.s32 %s14, 2
      %s21 = sadd.s32 %s14, 1
      %s22 = ssub.s32 %s14, %s21
      %p23 = scmp.eq.s32.totalorder %s22, 0
      %s25 = sadd.s32 %s24, 1
      %s26 = scalar_select %p23, %s24, %s25
      %p29 = pneg %p23
      %p30 = scmp.eq.s32.totalorder %s14, 1
      %p31 = por %p29, %p30
      %p32 = scmp.ne.s32.totalorder %s24, %s27
      %p33 = scmp.eq.s32.totalorder %s14, 0
      %p34 = por %p32, %p33
      %p35 = scmp.ne.s32.totalorder %s24, %s27
      %p36 = scmp.eq.s32.totalorder %s19, 1
      %p37 = por %p35, %p36
      %p38 = scmp.ne.s32.totalorder %s27, %s28
      %p39 = scmp.eq.s32.totalorder %s19, 0
      %p40 = por %p38, %p39
      %p41 = scmp.ne.s32.totalorder %s27, %s28
      %p42 = scmp.eq.s32.totalorder %s20, 1
      %p43 = por %p41, %p42
      %p45 = scmp.ne.s32.totalorder %s28, %s44
      %p46 = scmp.eq.s32.totalorder %s20, 0
      %p47 = por %p45, %p46
      %s49 = sadd.s32 %s48, 1
      %p52 = scmp.eq.s32.totalorder %s14, 1
      %p53 = scmp.ne.s32.totalorder %s48, %s50
      %p54 = scmp.eq.s32.totalorder %s14, 0
      %p55 = por %p53, %p54
      %p56 = scmp.ne.s32.totalorder %s48, %s50
      %p57 = scmp.eq.s32.totalorder %s19, 1
      %p58 = por %p56, %p57
      %p59 = scmp.ne.s32.totalorder %s50, %s51
      %p60 = scmp.eq.s32.totalorder %s19, 0
      %p61 = por %p59, %p60
      %p62 = scmp.ne.s32.totalorder %s50, %s51
      %p63 = scmp.eq.s32.totalorder %s20, 1
      %p64 = por %p62, %p63
      %p66 = scmp.ne.s32.totalorder %s51, %s65
      %p67 = scmp.eq.s32.totalorder %s20, 0
      %p68 = por %p66, %p67
      %s70 = sadd.s32 %s69, 1
      %p73 = scmp.eq.s32.totalorder %s14, 1
      %p74 = scmp.ne.s32.totalorder %s69, %s71
      %p75 = scmp.eq.s32.totalorder %s14, 0
      %p76 = por %p74, %p75
      %p77 = scmp.ne.s32.totalorder %s69, %s71
      %p78 = scmp.eq.s32.totalorder %s19, 1
      %p79 = por %p77, %p78
      %p80 = scmp.ne.s32.totalorder %s71, %s72
      %p81 = scmp.eq.s32.totalorder %s19, 0
      %p82 = por %p80, %p81
      %p83 = scmp.ne.s32.totalorder %s71, %s72
      %p84 = scmp.eq.s32.totalorder %s20, 1
      %p85 = por %p83, %p84
      %p87 = scmp.ne.s32.totalorder %s72, %s86
      %p88 = scmp.eq.s32.totalorder %s20, 0
      %p89 = por %p87, %p88
      %s91 = sadd.s32 %s90, 1
      %p94 = scmp.eq.s32.totalorder %s14, 1
      %p95 = scmp.ne.s32.totalorder %s90, %s92
      %p96 = scmp.eq.s32.totalorder %s14, 0
      %p97 = por %p95, %p96
      %p98 = scmp.ne.s32.totalorder %s90, %s92
      %p99 = scmp.eq.s32.totalorder %s19, 1
      %p100 = por %p98, %p99
      %p101 = scmp.ne.s32.totalorder %s92, %s93
      %p102 = scmp.eq.s32.totalorder %s19, 0
      %p103 = por %p101, %p102
      %p104 = scmp.ne.s32.totalorder %s92, %s93
      %p105 = scmp.eq.s32.totalorder %s20, 1
      %p106 = por %p104, %p105
      %p108 = scmp.ne.s32.totalorder %s93, %s107
      %p109 = scmp.eq.s32.totalorder %s20, 0
      %p110 = por %p108, %p109
      %s112 = sadd.s32 %s111, 1
      %p115 = scmp.eq.s32.totalorder %s14, 1
      %p116 = scmp.ne.s32.totalorder %s111, %s113
      %p117 = scmp.eq.s32.totalorder %s14, 0
      %p118 = por %p116, %p117
      %p119 = scmp.ne.s32.totalorder %s111, %s113
      %p120 = scmp.eq.s32.totalorder %s19, 1
      %p121 = por %p119, %p120
      %p122 = scmp.ne.s32.totalorder %s113, %s114
      %p123 = scmp.eq.s32.totalorder %s19, 0
      %p124 = por %p122, %p123
      %p125 = scmp.ne.s32.totalorder %s113, %s114
      %p126 = scmp.eq.s32.totalorder %s20, 1
      %p127 = por %p125, %p126
      %p129 = scmp.ne.s32.totalorder %s114, %s128
      %p130 = scmp.eq.s32.totalorder %s20, 0
      %p131 = por %p129, %p130
      %s132 = ssub.s32 %s14, %s21
      %p133 = scmp.eq.s32.totalorder %s132, 0
      %s135 = sadd.s32 %s134, 1
      %s136 = scalar_select %p133, %s134, %s135
      %p139 = pneg %p133
      %p140 = scmp.eq.s32.totalorder %s14, 1
      %p141 = por %p139, %p140
      %p142 = scmp.ne.s32.totalorder %s134, %s137
      %p143 = scmp.eq.s32.totalorder %s14, 0
      %p144 = por %p142, %p143
      %p145 = scmp.ne.s32.totalorder %s134, %s137
      %p146 = scmp.eq.s32.totalorder %s19, 1
      %p147 = por %p145, %p146
      %p148 = scmp.ne.s32.totalorder %s137, %s138
      %p149 = scmp.eq.s32.totalorder %s19, 0
      %p150 = por %p148, %p149
      %p151 = scmp.ne.s32.totalorder %s137, %s138
      %p152 = scmp.eq.s32.totalorder %s20, 1
      %p153 = por %p151, %p152
      %p155 = scmp.ne.s32.totalorder %s138, %s154
      %p156 = scmp.eq.s32.totalorder %s20, 0
      %p157 = por %p155, %p156
      %p158 = scmp.le.s32.totalorder 1, %s14
      %p159 = scmp.lt.s32.totalorder %s14, 3
      %p160 = pnand %p158, %p159
      %p161 = pneg %p160
      // Predicated region
      $region9: #{tpu_custom_call.1} parent=5 // pred_check
        _
      $region10: #{tpu_custom_call.1} parent=5 // pred_check_branch
        %163 = sbr.rel (%p160) target = $region12
      $region11: #{tpu_custom_call.1} parent=5 // pred_region
        %s164 = ssub.s32 %s14, 1
        // Predicated region
        $region13: #{tpu_custom_call.1} parent=11 // pred_check
          %p165 = pneg %p61
        $region14: #{tpu_custom_call.1} parent=11 // pred_check_branch
          %167 = sbr.rel (%p165) target = $region16
        $region15: #{tpu_custom_call.1} parent=11 // pred_region
          _
        $region16: #{tpu_custom_call.1} parent=11 // pred_fallthru
          _
        // Predicated region
        $region17: #{tpu_custom_call.1} parent=11 // pred_check
          %p168 = pneg %p82
        $region18: #{tpu_custom_call.1} parent=11 // pred_check_branch
          %170 = sbr.rel (%p168) target = $region20
        $region19: #{tpu_custom_call.1} parent=11 // pred_region
          _
        $region20: #{tpu_custom_call.1} parent=11 // pred_fallthru
          _
        // Predicated region
        $region21: #{tpu_custom_call.1} parent=11 // pred_check
          %p171 = pneg %p103
        $region22: #{tpu_custom_call.1} parent=11 // pred_check_branch
          %173 = sbr.rel (%p171) target = $region24
        $region23: #{tpu_custom_call.1} parent=11 // pred_region
          _
        $region24: #{tpu_custom_call.1} parent=11 // pred_fallthru
          _
        // Predicated region
        $region25: #{tpu_custom_call.1} parent=11 // pred_check
          %p174 = pneg %p124
        $region26: #{tpu_custom_call.1} parent=11 // pred_check_branch
          %176 = sbr.rel (%p174) target = $region28
        $region27: #{tpu_custom_call.1} parent=11 // pred_region
          _
        $region28: #{tpu_custom_call.1} parent=11 // pred_fallthru
          _
      $region12: #{tpu_custom_call.1} parent=5 // pred_fallthru
        _
      %p177 = scmp.lt.s32.totalorder %s14, 2
      // Predicated region
      $region29: #{tpu_custom_call.1} parent=5 // pred_check
        %p178 = pneg %p177
      $region30: #{tpu_custom_call.1} parent=5 // pred_check_branch
        %180 = sbr.rel (%p178) target = $region32
      $region31: #{tpu_custom_call.1} parent=5 // pred_region
        // Predicated region
        $region33: #{tpu_custom_call.1} parent=31 // pred_check
          %p181 = pneg %p34
        $region34: #{tpu_custom_call.1} parent=31 // pred_check_branch
          %183 = sbr.rel (%p181) target = $region36
        $region35: #{tpu_custom_call.1} parent=31 // pred_region
          %s184 = smul.u32 2, %s14
          %p185 = scmp.lt.s32.totalorder %s184, 3
          %s186 = scalar_select %p185, %s184, 3
          %s187 = smul.addr %s186, 2
          %s188 = smul.addr %s187, 8
          %s189 = scalar_lea.vmem %s0, %s188
          %s190 = smul.u32 2, %s14
        $region36: #{tpu_custom_call.1} parent=31 // pred_fallthru
          _
      $region32: #{tpu_custom_call.1} parent=5 // pred_fallthru
        _
      %p191 = scmp.le.s32.totalorder 1, %s14
      %p192 = scmp.lt.s32.totalorder %s14, 3
      %p193 = pnand %p191, %p192
      %p194 = pneg %p193
      // Predicated region
      $region37: #{tpu_custom_call.1} parent=5 // pred_check
        _
      $region38: #{tpu_custom_call.1} parent=5 // pred_check_branch
        %196 = sbr.rel (%p193) target = $region40
      $region39: #{tpu_custom_call.1} parent=5 // pred_region
        %s197 = ssub.s32 %s14, 1
        %s198 = smul.u32 2, %s19
        %p199 = scmp.lt.s32.totalorder %s198, 3
        %s200 = scalar_select %p199, %s198, 3
        %s201 = smul.addr %s200, 2
        %s202 = smul.addr %s201, 8
        %s203 = scalar_lea.vmem %s0, %s202
        %p204 = pneg %p40
        %p205 = pneg %p37
        %p206 = pneg %p61
        %p207 = pneg %p58
        %p208 = pneg %p82
        %p209 = pneg %p79
        %p210 = pneg %p103
        %p211 = pneg %p100
        %p212 = pneg %p124
        %p213 = pneg %p121
        %p214 = pneg %p150
        %p215 = pneg %p147
        %s216 = sand.u32 %s137, 1
        %s217 = scalar_lea.sflag [#allocation4], %s216
        %s218 = sand.u32 %s137, 1
        %s219 = smul.addr %s218, 32
        %s220 = scalar_lea.vmem [#allocation3], %s219
        %s221 = smul.u32 2, %s19
        %p222 = scmp.lt.s32.totalorder %s221, 3
        %s223 = scalar_select %p222, %s221, 3
        %s224 = smul.addr %s223, 2
        %s225 = smul.addr %s224, 8
        %s226 = scalar_lea.vmem %s0, %s225
        %s227 = smul.u32 2, %s19
        %s228 = smul.u32 2, %s19
        %v230 = vlaneseq
        %v231 = vand.u32 %v230, 127
        %v232 = vadd.s32 %v231, 128
        %v233 = vand.u32 %v231, 15
        %v234 = vand.u32 %v232, 15
        %vm235 = vcmp.eq.s32.totalorder %v233, 0
        %vm236 = vcmp.eq.s32.totalorder %v234, 0
        %vm237 = vcmp.eq.s32.totalorder %v233, 15
        %vm238 = vcmp.eq.s32.totalorder %v234, 15
        %vm239 = vcmp.lt.s32.totalorder %v231, 16
        %vm240 = vcmp.lt.s32.totalorder %v232, 16
        %vm241 = vcmp.ge.s32.totalorder %v231, 240
        %vm242 = vcmp.ge.s32.totalorder %v232, 240
        %v243 = vld [vmem:[%s226] sm:$0xff]
        %v244 = vld [vmem:[%s226 + $0x8] sm:$0xff]
        %v245 = vld [vmem:[%s1] sm:$0xf]
        %246 = vrot.lane.b32.xlu0 %v243, 1
        %v247 = vpop.permute.xlu0 %246
        %248 = vrot.lane.b32.xlu0 %v244, 1
        %v249 = vpop.permute.xlu0 %248
        %vm250 = vcmp.lt.s32.totalorder %v231, 1
        %v251 = vsel %vm250, %v247, %v249
        %v252 = vsel %vm250, %v249, %v247
        %253 = vrot.lane.b32.xlu0 %v243, 127
        %v254 = vpop.permute.xlu0 %253
        %255 = vrot.lane.b32.xlu0 %v244, 127
        %v256 = vpop.permute.xlu0 %255
        %vm257 = vcmp.lt.s32.totalorder %v231, 127
        %v258 = vsel %vm257, %v254, %v256
        %v259 = vsel %vm257, %v256, %v254
        %v260 = vsel %vm235, 1, 0
        %v261 = vsel %vm236, 1, 0
        %vm262 = vcmp.eq.s32.totalorder %v260, 1
        %vm263 = vcmp.eq.s32.totalorder %v261, 1
        %v264 = vsel %vm262, %v258, %v252
        %v265 = vsel %vm263, %v259, %v251
        %v266 = vsel %vm237, 1, 0
        %v267 = vsel %vm238, 1, 0
        %vm268 = vcmp.eq.s32.totalorder %v266, 1
        %vm269 = vcmp.eq.s32.totalorder %v267, 1
        %v270 = vsel %vm268, %v252, %v258
        %v271 = vsel %vm269, %v251, %v259
        %272 = vrot.lane.b32.xlu0 %v264, 16
        %v273 = vpop.permute.xlu0 %272
        %274 = vrot.lane.b32.xlu0 %v265, 16
        %v275 = vpop.permute.xlu0 %274
        %v276 = vsel %vm239, %v273, %v275
        %v277 = vsel %vm239, %v275, %v273
        %278 = vrot.lane.b32.xlu0 %v264, 112
        %v279 = vpop.permute.xlu0 %278
        %280 = vrot.lane.b32.xlu0 %v265, 112
        %v281 = vpop.permute.xlu0 %280
        %vm282 = vcmp.lt.s32.totalorder %v231, 112
        %v283 = vsel %vm282, %v279, %v281
        %v284 = vsel %vm282, %v281, %v279
        %v285 = vsel %vm239, 1, 0
        %v286 = vsel %vm240, 1, 0
        %vm287 = vcmp.eq.s32.totalorder %v285, 1
        %vm288 = vcmp.eq.s32.totalorder %v286, 1
        %v289 = vsel %vm287, %v283, %v277
        %v290 = vsel %vm288, %v284, %v276
        %v291 = vsel %vm241, 1, 0
        %v292 = vsel %vm242, 1, 0
        %vm293 = vcmp.eq.s32.totalorder %v291, 1
        %vm294 = vcmp.eq.s32.totalorder %v292, 1
        %v295 = vsel %vm293, %v277, %v283
        %v296 = vsel %vm294, %v276, %v284
        %297 = vst [vmem:[#allocation2] sm:$0xff] %v289
        %298 = vst [vmem:[#allocation2 + $0x8] sm:$0xff] %v290
        %299 = vst [vmem:[#allocation2 + $0x30] sm:$0xff] %v264
        %300 = vst [vmem:[#allocation2 + $0x38] sm:$0xff] %v265
        %301 = vst [vmem:[#allocation2 + $0x60] sm:$0xff] %v295
        %302 = vst [vmem:[#allocation2 + $0x68] sm:$0xff] %v296
        %303 = vrot.lane.b32.xlu0 %v243, 16
        %v304 = vpop.permute.xlu0 %303
        %305 = vrot.lane.b32.xlu0 %v244, 16
        %v306 = vpop.permute.xlu0 %305
        %v307 = vsel %vm239, %v304, %v306
        %v308 = vsel %vm239, %v306, %v304
        %309 = vrot.lane.b32.xlu0 %v243, 112
        %v310 = vpop.permute.xlu0 %309
        %311 = vrot.lane.b32.xlu0 %v244, 112
        %v312 = vpop.permute.xlu0 %311
        %v313 = vsel %vm282, %v310, %v312
        %v314 = vsel %vm282, %v312, %v310
        %v315 = vsel %vm287, %v313, %v308
        %v316 = vsel %vm288, %v314, %v307
        %v317 = vsel %vm293, %v308, %v313
        %v318 = vsel %vm294, %v307, %v314
        %319 = vst [vmem:[#allocation2 + $0x10] sm:$0xff] %v315
        %320 = vst [vmem:[#allocation2 + $0x18] sm:$0xff] %v316
        %321 = vst [vmem:[#allocation2 + $0x40] sm:$0xff] %v243
        %322 = vst [vmem:[#allocation2 + $0x48] sm:$0xff] %v244
        %323 = vst [vmem:[#allocation2 + $0x70] sm:$0xff] %v317
        %324 = vst [vmem:[#allocation2 + $0x78] sm:$0xff] %v318
        %325 = vrot.lane.b32.xlu0 %v270, 16
        %v326 = vpop.permute.xlu0 %325
        %327 = vrot.lane.b32.xlu0 %v271, 16
        %v328 = vpop.permute.xlu0 %327
        %v329 = vsel %vm239, %v326, %v328
        %v330 = vsel %vm239, %v328, %v326
        %331 = vrot.lane.b32.xlu0 %v270, 112
        %v332 = vpop.permute.xlu0 %331
        %333 = vrot.lane.b32.xlu0 %v271, 112
        %v334 = vpop.permute.xlu0 %333
        %v335 = vsel %vm282, %v332, %v334
        %v336 = vsel %vm282, %v334, %v332
        %v337 = vsel %vm287, %v335, %v330
        %v338 = vsel %vm288, %v336, %v329
        %v339 = vsel %vm293, %v330, %v335
        %v340 = vsel %vm294, %v329, %v336
        %341 = vst [vmem:[#allocation2 + $0x20] sm:$0xff] %v337
        %342 = vst [vmem:[#allocation2 + $0x28] sm:$0xff] %v338
        %343 = vst [vmem:[#allocation2 + $0x50] sm:$0xff] %v270
        %344 = vst [vmem:[#allocation2 + $0x58] sm:$0xff] %v271
        %345 = vst [vmem:[#allocation2 + $0x80] sm:$0xff] %v339
        %346 = vst [vmem:[#allocation2 + $0x88] sm:$0xff] %v340
        %v347 = vld [vmem:[#allocation2] sm:$0xff]
        %v348 = vld [vmem:[#allocation2 + $0x8] sm:$0xff]
        %v349 = vld [vmem:[#allocation2 + $0x10] sm:$0xff]
        %v350 = vld [vmem:[#allocation2 + $0x18] sm:$0xff]
        %v351 = vld [vmem:[#allocation2 + $0x20] sm:$0xff]
        %v352 = vld [vmem:[#allocation2 + $0x28] sm:$0xff]
        %v353 = vld [vmem:[#allocation2 + $0x30] sm:$0xff]
        %v354 = vld [vmem:[#allocation2 + $0x38] sm:$0xff]
        %v355 = vld [vmem:[#allocation2 + $0x40] sm:$0xff]
        %v356 = vld [vmem:[#allocation2 + $0x48] sm:$0xff]
        %v357 = vld [vmem:[#allocation2 + $0x50] sm:$0xff]
        %v358 = vld [vmem:[#allocation2 + $0x58] sm:$0xff]
        %v359 = vld [vmem:[#allocation2 + $0x60] sm:$0xff]
        %v360 = vld [vmem:[#allocation2 + $0x68] sm:$0xff]
        %v361 = vld [vmem:[#allocation2 + $0x70] sm:$0xff]
        %v362 = vld [vmem:[#allocation2 + $0x78] sm:$0xff]
        %v363 = vld [vmem:[#allocation2 + $0x80] sm:$0xff]
        %v364 = vld [vmem:[#allocation2 + $0x88] sm:$0xff]
        %v365 = vpack.c.bf16 %v349, %v347
        %v366 = vpack.c.bf16 %v350, %v348
        %v367 = vpack.c.bf16 %v353, %v351
        %v368 = vpack.c.bf16 %v354, %v352
        %v369 = vpack.c.bf16 %v357, %v355
        %v370 = vpack.c.bf16 %v358, %v356
        %v371 = vpack.c.bf16 %v361, %v359
        %v372 = vpack.c.bf16 %v362, %v360
        %v373 = vpack.c.bf16 %v363, %v363
        %v374 = vpack.c.bf16 %v364, %v364
        %vm375 = vcmask 588800
        %v377 = vsel %vm375, %v245, 0
        %vm379 = vcmask 1043456
        %v381 = vsel %vm379, %v373, 0
        %v384 = vsel %vm379, %v374, 0
        %386 = vmatprep.subr.bf16.mxu0 0
        %387 = vmatpush1.bf16.msra.mxu0 0
        %388 = vmatprep.subr.bf16.mxu0 0
        %389 = vmatpush1.bf16.msra.mxu0 0
        %390 = vmatprep.subr.bf16.mxu0 0
        %391 = vmatpush1.bf16.msra.mxu0 0
        %392 = vmatprep.subr.bf16.mxu0 %v384
        %393 = vmatpush1.bf16.msra.mxu0 %v381
        %394 = vmatprep.subr.bf16.mxu0 %v372
        %395 = vmatpush1.bf16.msra.mxu0 %v371
        %396 = vmatprep.subr.bf16.mxu0 %v370
        %397 = vmatpush1.bf16.msra.mxu0 %v369
        %398 = vmatprep.subr.bf16.mxu0 %v368
        %399 = vmatpush1.bf16.msra.mxu0 %v367
        %400 = vmatprep.subr.bf16.mxu0 %v366
        %401 = vmatpush1.bf16.msra.mxu0 %v365
        %402 = vmatprep.subr.bf16.mxu0 0
        %403 = vmatpush2.bf16.msra.mxu0 0
        %404 = vmatprep.subr.bf16.mxu0 0
        %405 = vmatpush2.bf16.msra.mxu0 0
        %406 = vmatprep.subr.bf16.mxu0 0
        %407 = vmatpush2.bf16.msra.mxu0 0
        %408 = vmatprep.subr.bf16.mxu0 0
        %409 = vmatpush2.bf16.msra.mxu0 0
        %410 = vmatprep.subr.bf16.mxu0 0
        %411 = vmatpush2.bf16.msra.mxu0 0
        %412 = vmatprep.subr.bf16.mxu0 0
        %413 = vmatpush2.bf16.msra.mxu0 0
        %414 = vmatprep.subr.bf16.mxu0 0
        %415 = vmatpush2.bf16.msra.mxu0 0
        %416 = vmatprep.subr.bf16.mxu0 0
        %417 = vmatpush2.bf16.msra.mxu0 0
        %418 = vmatprep.mubr.bf16.mxu0 0
        %419 = vmatmul.mubr.bf16.gmra.mxu0 %v377
        %v420 = vpop.f32.mrf.mxu0
        %v421 = vadd.f32 0.0, %v420
        %v422 = vpop.f32.mrf.mxu0
        %v423 = vadd.f32 0.0, %v422
        %v424 = vpop.f32.mrf.mxu0
        %v425 = vpop.f32.mrf.mxu0
        %426 = vdwg.mxu0
        %v427 = vadd.f32 %v421, %v423
        %428 = vadd.xlane.f32.xlu0 %v427
        %v429 = vpop.xlane.xlu0 %428
        %v430 = vmul.f32 %v429, 0.00390625
        %v431 = vmul.f32 %v421, %v421
        %v432 = vmul.f32 %v423, %v423
        %v433 = vadd.f32 %v431, %v432
        %434 = vadd.xlane.f32.xlu0 %v433
        %v435 = vpop.xlane.xlu0 %434
        %v436 = vmul.f32 %v435, 0.00390625
        %v437 = vmul.f32 %v430, %v430
        %v438 = vsub.f32 %v436, %v437
        %v439 = vmax.f32 %v438, 0.0
        %v440 = vsub.f32 %v421, %v430
        %v441 = vsub.f32 %v423, %v430
        %v442 = vadd.f32 %v439, 1e-05
        %v443 = vrsqrt.pop %v442
        %v444 = vmul.f32 %v440, %v443
        %v445 = vmul.f32 %v441, %v443
        %vm446 = vcmp.ge.f32.partialorder %v444, 0.0
        %vm447 = vcmp.ge.f32.partialorder %v445, 0.0
        %v448 = vmul.f32 %v444, 0.01
        %v449 = vmul.f32 %v445, 0.01
        %v450 = vsel %vm446, %v444, %v448
        %v451 = vsel %vm447, %v445, %v449
        %s452 = scalar_lea.vmem %s1, 4
        %v453 = vld [vmem:[%s452] sm:$0xf]
        %454 = vrot.lane.b32.xlu0 %v450, 1
        %v455 = vpop.permute.xlu0 %454
        %456 = vrot.lane.b32.xlu0 %v451, 1
        %v457 = vpop.permute.xlu0 %456
        %v458 = vsel %vm250, %v455, %v457
        %v459 = vsel %vm250, %v457, %v455
        %460 = vrot.lane.b32.xlu0 %v450, 127
        %v461 = vpop.permute.xlu0 %460
        %462 = vrot.lane.b32.xlu0 %v451, 127
        %v463 = vpop.permute.xlu0 %462
        %v464 = vsel %vm257, %v461, %v463
        %v465 = vsel %vm257, %v463, %v461
        %v466 = vsel %vm262, %v464, %v459
        %v467 = vsel %vm263, %v465, %v458
        %v468 = vsel %vm268, %v459, %v464
        %v469 = vsel %vm269, %v458, %v465
        %470 = vrot.lane.b32.xlu0 %v466, 16
        %v471 = vpop.permute.xlu0 %470
        %472 = vrot.lane.b32.xlu0 %v467, 16
        %v473 = vpop.permute.xlu0 %472
        %v474 = vsel %vm239, %v471, %v473
        %v475 = vsel %vm239, %v473, %v471
        %476 = vrot.lane.b32.xlu0 %v466, 112
        %v477 = vpop.permute.xlu0 %476
        %478 = vrot.lane.b32.xlu0 %v467, 112
        %v479 = vpop.permute.xlu0 %478
        %v480 = vsel %vm282, %v477, %v479
        %v481 = vsel %vm282, %v479, %v477
        %v482 = vsel %vm287, %v480, %v475
        %v483 = vsel %vm288, %v481, %v474
        %v484 = vsel %vm293, %v475, %v480
        %v485 = vsel %vm294, %v474, %v481
        %486 = vst [vmem:[#allocation2] sm:$0xff] %v482
        %487 = vst [vmem:[#allocation2 + $0x8] sm:$0xff] %v483
        %488 = vst [vmem:[#allocation2 + $0x30] sm:$0xff] %v466
        %489 = vst [vmem:[#allocation2 + $0x38] sm:$0xff] %v467
        %490 = vst [vmem:[#allocation2 + $0x60] sm:$0xff] %v484
        %491 = vst [vmem:[#allocation2 + $0x68] sm:$0xff] %v485
        %492 = vrot.lane.b32.xlu0 %v450, 16
        %v493 = vpop.permute.xlu0 %492
        %494 = vrot.lane.b32.xlu0 %v451, 16
        %v495 = vpop.permute.xlu0 %494
        %v496 = vsel %vm239, %v493, %v495
        %v497 = vsel %vm239, %v495, %v493
        %498 = vrot.lane.b32.xlu0 %v450, 112
        %v499 = vpop.permute.xlu0 %498
        %500 = vrot.lane.b32.xlu0 %v451, 112
        %v501 = vpop.permute.xlu0 %500
        %v502 = vsel %vm282, %v499, %v501
        %v503 = vsel %vm282, %v501, %v499
        %v504 = vsel %vm287, %v502, %v497
        %v505 = vsel %vm288, %v503, %v496
        %v506 = vsel %vm293, %v497, %v502
        %v507 = vsel %vm294, %v496, %v503
        %508 = vst [vmem:[#allocation2 + $0x10] sm:$0xff] %v504
        %509 = vst [vmem:[#allocation2 + $0x18] sm:$0xff] %v505
        %510 = vst [vmem:[#allocation2 + $0x40] sm:$0xff] %v450
        %511 = vst [vmem:[#allocation2 + $0x48] sm:$0xff] %v451
        %512 = vst [vmem:[#allocation2 + $0x70] sm:$0xff] %v506
        %513 = vst [vmem:[#allocation2 + $0x78] sm:$0xff] %v507
        %514 = vrot.lane.b32.xlu0 %v468, 16
        %v515 = vpop.permute.xlu0 %514
        %516 = vrot.lane.b32.xlu0 %v469, 16
        %v517 = vpop.permute.xlu0 %516
        %v518 = vsel %vm239, %v515, %v517
        %v519 = vsel %vm239, %v517, %v515
        %520 = vrot.lane.b32.xlu0 %v468, 112
        %v521 = vpop.permute.xlu0 %520
        %522 = vrot.lane.b32.xlu0 %v469, 112
        %v523 = vpop.permute.xlu0 %522
        %v524 = vsel %vm282, %v521, %v523
        %v525 = vsel %vm282, %v523, %v521
        %v526 = vsel %vm287, %v524, %v519
        %v527 = vsel %vm288, %v525, %v518
        %v528 = vsel %vm293, %v519, %v524
        %v529 = vsel %vm294, %v518, %v525
        %530 = vst [vmem:[#allocation2 + $0x20] sm:$0xff] %v526
        %531 = vst [vmem:[#allocation2 + $0x28] sm:$0xff] %v527
        %532 = vst [vmem:[#allocation2 + $0x50] sm:$0xff] %v468
        %533 = vst [vmem:[#allocation2 + $0x58] sm:$0xff] %v469
        %534 = vst [vmem:[#allocation2 + $0x80] sm:$0xff] %v528
        %535 = vst [vmem:[#allocation2 + $0x88] sm:$0xff] %v529
        %v536 = vld [vmem:[#allocation2] sm:$0xff]
        %v537 = vld [vmem:[#allocation2 + $0x8] sm:$0xff]
        %v538 = vld [vmem:[#allocation2 + $0x10] sm:$0xff]
        %v539 = vld [vmem:[#allocation2 + $0x18] sm:$0xff]
        %v540 = vld [vmem:[#allocation2 + $0x20] sm:$0xff]
        %v541 = vld [vmem:[#allocation2 + $0x28] sm:$0xff]
        %v542 = vld [vmem:[#allocation2 + $0x30] sm:$0xff]
        %v543 = vld [vmem:[#allocation2 + $0x38] sm:$0xff]
        %v544 = vld [vmem:[#allocation2 + $0x40] sm:$0xff]
        %v545 = vld [vmem:[#allocation2 + $0x48] sm:$0xff]
        %v546 = vld [vmem:[#allocation2 + $0x50] sm:$0xff]
        %v547 = vld [vmem:[#allocation2 + $0x58] sm:$0xff]
        %v548 = vld [vmem:[#allocation2 + $0x60] sm:$0xff]
        %v549 = vld [vmem:[#allocation2 + $0x68] sm:$0xff]
        %v550 = vld [vmem:[#allocation2 + $0x70] sm:$0xff]
        %v551 = vld [vmem:[#allocation2 + $0x78] sm:$0xff]
        %v552 = vld [vmem:[#allocation2 + $0x80] sm:$0xff]
        %v553 = vld [vmem:[#allocation2 + $0x88] sm:$0xff]
        %v554 = vpack.c.bf16 %v538, %v536
        %v555 = vpack.c.bf16 %v539, %v537
        %v556 = vpack.c.bf16 %v542, %v540
        %v557 = vpack.c.bf16 %v543, %v541
        %v558 = vpack.c.bf16 %v546, %v544
        %v559 = vpack.c.bf16 %v547, %v545
        %v560 = vpack.c.bf16 %v550, %v548
        %v561 = vpack.c.bf16 %v551, %v549
        %v562 = vpack.c.bf16 %v552, %v552
        %v563 = vpack.c.bf16 %v553, %v553
        %v565 = vsel %vm375, %v453, 0
        %v568 = vsel %vm379, %v562, 0
        %v571 = vsel %vm379, %v563, 0
        %573 = vmatprep.subr.bf16.mxu0 0
        %574 = vmatpush1.bf16.msra.mxu0 0
        %575 = vmatprep.subr.bf16.mxu0 0
        %576 = vmatpush1.bf16.msra.mxu0 0
        %577 = vmatprep.subr.bf16.mxu0 0
        %578 = vmatpush1.bf16.msra.mxu0 0
        %579 = vmatprep.subr.bf16.mxu0 %v571
        %580 = vmatpush1.bf16.msra.mxu0 %v568
        %581 = vmatprep.subr.bf16.mxu0 %v561
        %582 = vmatpush1.bf16.msra.mxu0 %v560
        %583 = vmatprep.subr.bf16.mxu0 %v559
        %584 = vmatpush1.bf16.msra.mxu0 %v558
        %585 = vmatprep.subr.bf16.mxu0 %v557
        %586 = vmatpush1.bf16.msra.mxu0 %v556
        %587 = vmatprep.subr.bf16.mxu0 %v555
        %588 = vmatpush1.bf16.msra.mxu0 %v554
        %589 = vmatprep.subr.bf16.mxu0 0
        %590 = vmatpush2.bf16.msra.mxu0 0
        %591 = vmatprep.subr.bf16.mxu0 0
        %592 = vmatpush2.bf16.msra.mxu0 0
        %593 = vmatprep.subr.bf16.mxu0 0
        %594 = vmatpush2.bf16.msra.mxu0 0
        %595 = vmatprep.subr.bf16.mxu0 0
        %596 = vmatpush2.bf16.msra.mxu0 0
        %597 = vmatprep.subr.bf16.mxu0 0
        %598 = vmatpush2.bf16.msra.mxu0 0
        %599 = vmatprep.subr.bf16.mxu0 0
        %600 = vmatpush2.bf16.msra.mxu0 0
        %601 = vmatprep.subr.bf16.mxu0 0
        %602 = vmatpush2.bf16.msra.mxu0 0
        %603 = vmatprep.subr.bf16.mxu0 0
        %604 = vmatpush2.bf16.msra.mxu0 0
        %605 = vmatprep.mubr.bf16.mxu0 0
        %606 = vmatmul.mubr.bf16.gmra.mxu0 %v565
        %v607 = vpop.f32.mrf.mxu0
        %v608 = vadd.f32 0.0, %v607
        %v609 = vpop.f32.mrf.mxu0
        %v610 = vadd.f32 0.0, %v609
        %v611 = vpop.f32.mrf.mxu0
        %v612 = vpop.f32.mrf.mxu0
        %613 = vdwg.mxu0
        %v614 = vadd.f32 %v608, %v610
        %615 = vadd.xlane.f32.xlu0 %v614
        %v616 = vpop.xlane.xlu0 %615
        %v617 = vmul.f32 %v616, 0.00390625
        %v618 = vmul.f32 %v608, %v608
        %v619 = vmul.f32 %v610, %v610
        %v620 = vadd.f32 %v618, %v619
        %621 = vadd.xlane.f32.xlu0 %v620
        %v622 = vpop.xlane.xlu0 %621
        %v623 = vmul.f32 %v622, 0.00390625
        %v624 = vmul.f32 %v617, %v617
        %v625 = vsub.f32 %v623, %v624
        %v626 = vmax.f32 %v625, 0.0
        %v627 = vsub.f32 %v608, %v617
        %v628 = vsub.f32 %v610, %v617
        %v629 = vadd.f32 %v626, 1e-05
        %v630 = vrsqrt.pop %v629
        %v631 = vmul.f32 %v627, %v630
        %v632 = vmul.f32 %v628, %v630
        %v633 = vadd.f32 %v243, %v631
        %v634 = vadd.f32 %v244, %v632
        %s635 = scalar_lea.vmem %s1, 8
        %v636 = vld [vmem:[%s635] sm:$0xf]
        %637 = vrot.lane.b32.xlu0 %v633, 1
        %v638 = vpop.permute.xlu0 %637
        %639 = vrot.lane.b32.xlu0 %v634, 1
        %v640 = vpop.permute.xlu0 %639
        %v641 = vsel %vm250, %v638, %v640
        %v642 = vsel %vm250, %v640, %v638
        %643 = vrot.lane.b32.xlu0 %v633, 127
        %v644 = vpop.permute.xlu0 %643
        %645 = vrot.lane.b32.xlu0 %v634, 127
        %v646 = vpop.permute.xlu0 %645
        %v647 = vsel %vm257, %v644, %v646
        %v648 = vsel %vm257, %v646, %v644
        %v649 = vsel %vm262, %v647, %v642
        %v650 = vsel %vm263, %v648, %v641
        %v651 = vsel %vm268, %v642, %v647
        %v652 = vsel %vm269, %v641, %v648
        %653 = vrot.lane.b32.xlu0 %v649, 16
        %v654 = vpop.permute.xlu0 %653
        %655 = vrot.lane.b32.xlu0 %v650, 16
        %v656 = vpop.permute.xlu0 %655
        %v657 = vsel %vm239, %v654, %v656
        %v658 = vsel %vm239, %v656, %v654
        %659 = vrot.lane.b32.xlu0 %v649, 112
        %v660 = vpop.permute.xlu0 %659
        %661 = vrot.lane.b32.xlu0 %v650, 112
        %v662 = vpop.permute.xlu0 %661
        %v663 = vsel %vm282, %v660, %v662
        %v664 = vsel %vm282, %v662, %v660
        %v665 = vsel %vm287, %v663, %v658
        %v666 = vsel %vm288, %v664, %v657
        %v667 = vsel %vm293, %v658, %v663
        %v668 = vsel %vm294, %v657, %v664
        %669 = vst [vmem:[#allocation2] sm:$0xff] %v665
        %670 = vst [vmem:[#allocation2 + $0x8] sm:$0xff] %v666
        %671 = vst [vmem:[#allocation2 + $0x30] sm:$0xff] %v649
        %672 = vst [vmem:[#allocation2 + $0x38] sm:$0xff] %v650
        %673 = vst [vmem:[#allocation2 + $0x60] sm:$0xff] %v667
        %674 = vst [vmem:[#allocation2 + $0x68] sm:$0xff] %v668
        %675 = vrot.lane.b32.xlu0 %v633, 16
        %v676 = vpop.permute.xlu0 %675
        %677 = vrot.lane.b32.xlu0 %v634, 16
        %v678 = vpop.permute.xlu0 %677
        %v679 = vsel %vm239, %v676, %v678
        %v680 = vsel %vm239, %v678, %v676
        %681 = vrot.lane.b32.xlu0 %v633, 112
        %v682 = vpop.permute.xlu0 %681
        %683 = vrot.lane.b32.xlu0 %v634, 112
        %v684 = vpop.permute.xlu0 %683
        %v685 = vsel %vm282, %v682, %v684
        %v686 = vsel %vm282, %v684, %v682
        %v687 = vsel %vm287, %v685, %v680
        %v688 = vsel %vm288, %v686, %v679
        %v689 = vsel %vm293, %v680, %v685
        %v690 = vsel %vm294, %v679, %v686
        %691 = vst [vmem:[#allocation2 + $0x10] sm:$0xff] %v687
        %692 = vst [vmem:[#allocation2 + $0x18] sm:$0xff] %v688
        %693 = vst [vmem:[#allocation2 + $0x40] sm:$0xff] %v633
        %694 = vst [vmem:[#allocation2 + $0x48] sm:$0xff] %v634
        %695 = vst [vmem:[#allocation2 + $0x70] sm:$0xff] %v689
        %696 = vst [vmem:[#allocation2 + $0x78] sm:$0xff] %v690
        %697 = vrot.lane.b32.xlu0 %v651, 16
        %v698 = vpop.permute.xlu0 %697
        %699 = vrot.lane.b32.xlu0 %v652, 16
        %v700 = vpop.permute.xlu0 %699
        %v701 = vsel %vm239, %v698, %v700
        %v702 = vsel %vm239, %v700, %v698
        %703 = vrot.lane.b32.xlu0 %v651, 112
        %v704 = vpop.permute.xlu0 %703
        %705 = vrot.lane.b32.xlu0 %v652, 112
        %v706 = vpop.permute.xlu0 %705
        %v707 = vsel %vm282, %v704, %v706
        %v708 = vsel %vm282, %v706, %v704
        %v709 = vsel %vm287, %v707, %v702
        %v710 = vsel %vm288, %v708, %v701
        %v711 = vsel %vm293, %v702, %v707
        %v712 = vsel %vm294, %v701, %v708
        %713 = vst [vmem:[#allocation2 + $0x20] sm:$0xff] %v709
        %714 = vst [vmem:[#allocation2 + $0x28] sm:$0xff] %v710
        %715 = vst [vmem:[#allocation2 + $0x50] sm:$0xff] %v651
        %716 = vst [vmem:[#allocation2 + $0x58] sm:$0xff] %v652
        %717 = vst [vmem:[#allocation2 + $0x80] sm:$0xff] %v711
        %718 = vst [vmem:[#allocation2 + $0x88] sm:$0xff] %v712
        %v719 = vld [vmem:[#allocation2] sm:$0xff]
        %v720 = vld [vmem:[#allocation2 + $0x8] sm:$0xff]
        %v721 = vld [vmem:[#allocation2 + $0x10] sm:$0xff]
        %v722 = vld [vmem:[#allocation2 + $0x18] sm:$0xff]
        %v723 = vld [vmem:[#allocation2 + $0x20] sm:$0xff]
        %v724 = vld [vmem:[#allocation2 + $0x28] sm:$0xff]
        %v725 = vld [vmem:[#allocation2 + $0x30] sm:$0xff]
        %v726 = vld [vmem:[#allocation2 + $0x38] sm:$0xff]
        %v727 = vld [vmem:[#allocation2 + $0x40] sm:$0xff]
        %v728 = vld [vmem:[#allocation2 + $0x48] sm:$0xff]
        %v729 = vld [vmem:[#allocation2 + $0x50] sm:$0xff]
        %v730 = vld [vmem:[#allocation2 + $0x58] sm:$0xff]
        %v731 = vld [vmem:[#allocation2 + $0x60] sm:$0xff]
        %v732 = vld [vmem:[#allocation2 + $0x68] sm:$0xff]
        %v733 = vld [vmem:[#allocation2 + $0x70] sm:$0xff]
        %v734 = vld [vmem:[#allocation2 + $0x78] sm:$0xff]
        %v735 = vld [vmem:[#allocation2 + $0x80] sm:$0xff]
        %v736 = vld [vmem:[#allocation2 + $0x88] sm:$0xff]
        %v737 = vpack.c.bf16 %v721, %v719
        %v738 = vpack.c.bf16 %v722, %v720
        %v739 = vpack.c.bf16 %v725, %v723
        %v740 = vpack.c.bf16 %v726, %v724
        %v741 = vpack.c.bf16 %v729, %v727
        %v742 = vpack.c.bf16 %v730, %v728
        %v743 = vpack.c.bf16 %v733, %v731
        %v744 = vpack.c.bf16 %v734, %v732
        %v745 = vpack.c.bf16 %v735, %v735
        %v746 = vpack.c.bf16 %v736, %v736
        %v748 = vsel %vm375, %v636, 0
        %v751 = vsel %vm379, %v745, 0
        %v754 = vsel %vm379, %v746, 0
        %756 = vmatprep.subr.bf16.mxu0 0
        %757 = vmatpush1.bf16.msra.mxu0 0
        %758 = vmatprep.subr.bf16.mxu0 0
        %759 = vmatpush1.bf16.msra.mxu0 0
        %760 = vmatprep.subr.bf16.mxu0 0
        %761 = vmatpush1.bf16.msra.mxu0 0
        %762 = vmatprep.subr.bf16.mxu0 %v754
        %763 = vmatpush1.bf16.msra.mxu0 %v751
        %764 = vmatprep.subr.bf16.mxu0 %v744
        %765 = vmatpush1.bf16.msra.mxu0 %v743
        %766 = vmatprep.subr.bf16.mxu0 %v742
        %767 = vmatpush1.bf16.msra.mxu0 %v741
        %768 = vmatprep.subr.bf16.mxu0 %v740
        %769 = vmatpush1.bf16.msra.mxu0 %v739
        %770 = vmatprep.subr.bf16.mxu0 %v738
        %771 = vmatpush1.bf16.msra.mxu0 %v737
        %772 = vmatprep.subr.bf16.mxu0 0
        %773 = vmatpush2.bf16.msra.mxu0 0
        %774 = vmatprep.subr.bf16.mxu0 0
        %775 = vmatpush2.bf16.msra.mxu0 0
        %776 = vmatprep.subr.bf16.mxu0 0
        %777 = vmatpush2.bf16.msra.mxu0 0
        %778 = vmatprep.subr.bf16.mxu0 0
        %779 = vmatpush2.bf16.msra.mxu0 0
        %780 = vmatprep.subr.bf16.mxu0 0
        %781 = vmatpush2.bf16.msra.mxu0 0
        %782 = vmatprep.subr.bf16.mxu0 0
        %783 = vmatpush2.bf16.msra.mxu0 0
        %784 = vmatprep.subr.bf16.mxu0 0
        %785 = vmatpush2.bf16.msra.mxu0 0
        %786 = vmatprep.subr.bf16.mxu0 0
        %787 = vmatpush2.bf16.msra.mxu0 0
        %788 = vmatprep.mubr.bf16.mxu0 0
        %789 = vmatmul.mubr.bf16.gmra.mxu0 %v748
        %v790 = vpop.f32.mrf.mxu0
        %v791 = vadd.f32 0.0, %v790
        %v792 = vpop.f32.mrf.mxu0
        %v793 = vadd.f32 0.0, %v792
        %v794 = vpop.f32.mrf.mxu0
        %v795 = vpop.f32.mrf.mxu0
        %796 = vdwg.mxu0
        %v797 = vadd.f32 %v791, %v793
        %798 = vadd.xlane.f32.xlu0 %v797
        %v799 = vpop.xlane.xlu0 %798
        %v800 = vmul.f32 %v799, 0.00390625
        %v801 = vmul.f32 %v791, %v791
        %v802 = vmul.f32 %v793, %v793
        %v803 = vadd.f32 %v801, %v802
        %804 = vadd.xlane.f32.xlu0 %v803
        %v805 = vpop.xlane.xlu0 %804
        %v806 = vmul.f32 %v805, 0.00390625
        %v807 = vmul.f32 %v800, %v800
        %v808 = vsub.f32 %v806, %v807
        %v809 = vmax.f32 %v808, 0.0
        %v810 = vsub.f32 %v791, %v800
        %v811 = vsub.f32 %v793, %v800
        %v812 = vadd.f32 %v809, 1e-05
        %v813 = vrsqrt.pop %v812
        %v814 = vmul.f32 %v810, %v813
        %v815 = vmul.f32 %v811, %v813
        %vm816 = vcmp.ge.f32.partialorder %v814, 0.0
        %vm817 = vcmp.ge.f32.partialorder %v815, 0.0
        %v818 = vmul.f32 %v814, 0.01
        %v819 = vmul.f32 %v815, 0.01
        %v820 = vsel %vm816, %v814, %v818
        %v821 = vsel %vm817, %v815, %v819
        %s822 = scalar_lea.vmem %s1, 12
        %v823 = vld [vmem:[%s822] sm:$0xf]
        %824 = vrot.lane.b32.xlu0 %v820, 1
        %v825 = vpop.permute.xlu0 %824
        %826 = vrot.lane.b32.xlu0 %v821, 1
        %v827 = vpop.permute.xlu0 %826
        %v828 = vsel %vm250, %v825, %v827
        %v829 = vsel %vm250, %v827, %v825
        %830 = vrot.lane.b32.xlu0 %v820, 127
        %v831 = vpop.permute.xlu0 %830
        %832 = vrot.lane.b32.xlu0 %v821, 127
        %v833 = vpop.permute.xlu0 %832
        %v834 = vsel %vm257, %v831, %v833
        %v835 = vsel %vm257, %v833, %v831
        %v836 = vsel %vm262, %v834, %v829
        %v837 = vsel %vm263, %v835, %v828
        %v838 = vsel %vm268, %v829, %v834
        %v839 = vsel %vm269, %v828, %v835
        %840 = vrot.lane.b32.xlu0 %v836, 16
        %v841 = vpop.permute.xlu0 %840
        %842 = vrot.lane.b32.xlu0 %v837, 16
        %v843 = vpop.permute.xlu0 %842
        %v844 = vsel %vm239, %v841, %v843
        %v845 = vsel %vm239, %v843, %v841
        %846 = vrot.lane.b32.xlu0 %v836, 112
        %v847 = vpop.permute.xlu0 %846
        %848 = vrot.lane.b32.xlu0 %v837, 112
        %v849 = vpop.permute.xlu0 %848
        %v850 = vsel %vm282, %v847, %v849
        %v851 = vsel %vm282, %v849, %v847
        %v852 = vsel %vm287, %v850, %v845
        %v853 = vsel %vm288, %v851, %v844
        %v854 = vsel %vm293, %v845, %v850
        %v855 = vsel %vm294, %v844, %v851
        %856 = vst [vmem:[#allocation2] sm:$0xff] %v852
        %857 = vst [vmem:[#allocation2 + $0x8] sm:$0xff] %v853
        %858 = vst [vmem:[#allocation2 + $0x30] sm:$0xff] %v836
        %859 = vst [vmem:[#allocation2 + $0x38] sm:$0xff] %v837
        %860 = vst [vmem:[#allocation2 + $0x60] sm:$0xff] %v854
        %861 = vst [vmem:[#allocation2 + $0x68] sm:$0xff] %v855
        %862 = vrot.lane.b32.xlu0 %v820, 16
        %v863 = vpop.permute.xlu0 %862
        %864 = vrot.lane.b32.xlu0 %v821, 16
        %v865 = vpop.permute.xlu0 %864
        %v866 = vsel %vm239, %v863, %v865
        %v867 = vsel %vm239, %v865, %v863
        %868 = vrot.lane.b32.xlu0 %v820, 112
        %v869 = vpop.permute.xlu0 %868
        %870 = vrot.lane.b32.xlu0 %v821, 112
        %v871 = vpop.permute.xlu0 %870
        %v872 = vsel %vm282, %v869, %v871
        %v873 = vsel %vm282, %v871, %v869
        %v874 = vsel %vm287, %v872, %v867
        %v875 = vsel %vm288, %v873, %v866
        %v876 = vsel %vm293, %v867, %v872
        %v877 = vsel %vm294, %v866, %v873
        %878 = vst [vmem:[#allocation2 + $0x10] sm:$0xff] %v874
        %879 = vst [vmem:[#allocation2 + $0x18] sm:$0xff] %v875
        %880 = vst [vmem:[#allocation2 + $0x40] sm:$0xff] %v820
        %881 = vst [vmem:[#allocation2 + $0x48] sm:$0xff] %v821
        %882 = vst [vmem:[#allocation2 + $0x70] sm:$0xff] %v876
        %883 = vst [vmem:[#allocation2 + $0x78] sm:$0xff] %v877
        %884 = vrot.lane.b32.xlu0 %v838, 16
        %v885 = vpop.permute.xlu0 %884
        %886 = vrot.lane.b32.xlu0 %v839, 16
        %v887 = vpop.permute.xlu0 %886
        %v888 = vsel %vm239, %v885, %v887
        %v889 = vsel %vm239, %v887, %v885
        %890 = vrot.lane.b32.xlu0 %v838, 112
        %v891 = vpop.permute.xlu0 %890
        %892 = vrot.lane.b32.xlu0 %v839, 112
        %v893 = vpop.permute.xlu0 %892
        %v894 = vsel %vm282, %v891, %v893
        %v895 = vsel %vm282, %v893, %v891
        %v896 = vsel %vm287, %v894, %v889
        %v897 = vsel %vm288, %v895, %v888
        %v898 = vsel %vm293, %v889, %v894
        %v899 = vsel %vm294, %v888, %v895
        %900 = vst [vmem:[#allocation2 + $0x20] sm:$0xff] %v896
        %901 = vst [vmem:[#allocation2 + $0x28] sm:$0xff] %v897
        %902 = vst [vmem:[#allocation2 + $0x50] sm:$0xff] %v838
        %903 = vst [vmem:[#allocation2 + $0x58] sm:$0xff] %v839
        %904 = vst [vmem:[#allocation2 + $0x80] sm:$0xff] %v898
        %905 = vst [vmem:[#allocation2 + $0x88] sm:$0xff] %v899
        %v906 = vld [vmem:[#allocation2] sm:$0xff]
        %v907 = vld [vmem:[#allocation2 + $0x8] sm:$0xff]
        %v908 = vld [vmem:[#allocation2 + $0x10] sm:$0xff]
        %v909 = vld [vmem:[#allocation2 + $0x18] sm:$0xff]
        %v910 = vld [vmem:[#allocation2 + $0x20] sm:$0xff]
        %v911 = vld [vmem:[#allocation2 + $0x28] sm:$0xff]
        %v912 = vld [vmem:[#allocation2 + $0x30] sm:$0xff]
        %v913 = vld [vmem:[#allocation2 + $0x38] sm:$0xff]
        %v914 = vld [vmem:[#allocation2 + $0x40] sm:$0xff]
        %v915 = vld [vmem:[#allocation2 + $0x48] sm:$0xff]
        %v916 = vld [vmem:[#allocation2 + $0x50] sm:$0xff]
        %v917 = vld [vmem:[#allocation2 + $0x58] sm:$0xff]
        %v918 = vld [vmem:[#allocation2 + $0x60] sm:$0xff]
        %v919 = vld [vmem:[#allocation2 + $0x68] sm:$0xff]
        %v920 = vld [vmem:[#allocation2 + $0x70] sm:$0xff]
        %v921 = vld [vmem:[#allocation2 + $0x78] sm:$0xff]
        %v922 = vld [vmem:[#allocation2 + $0x80] sm:$0xff]
        %v923 = vld [vmem:[#allocation2 + $0x88] sm:$0xff]
        %v924 = vpack.c.bf16 %v908, %v906
        %v925 = vpack.c.bf16 %v909, %v907
        %v926 = vpack.c.bf16 %v912, %v910
        %v927 = vpack.c.bf16 %v913, %v911
        %v928 = vpack.c.bf16 %v916, %v914
        %v929 = vpack.c.bf16 %v917, %v915
        %v930 = vpack.c.bf16 %v920, %v918
        %v931 = vpack.c.bf16 %v921, %v919
        %v932 = vpack.c.bf16 %v922, %v922
        %v933 = vpack.c.bf16 %v923, %v923
        %v935 = vsel %vm375, %v823, 0
        %v938 = vsel %vm379, %v932, 0
        %v941 = vsel %vm379, %v933, 0
        %943 = vmatprep.subr.bf16.mxu0 0
        %944 = vmatpush1.bf16.msra.mxu0 0
        %945 = vmatprep.subr.bf16.mxu0 0
        %946 = vmatpush1.bf16.msra.mxu0 0
        %947 = vmatprep.subr.bf16.mxu0 0
        %948 = vmatpush1.bf16.msra.mxu0 0
        %949 = vmatprep.subr.bf16.mxu0 %v941
        %950 = vmatpush1.bf16.msra.mxu0 %v938
        %951 = vmatprep.subr.bf16.mxu0 %v931
        %952 = vmatpush1.bf16.msra.mxu0 %v930
        %953 = vmatprep.subr.bf16.mxu0 %v929
        %954 = vmatpush1.bf16.msra.mxu0 %v928
        %955 = vmatprep.subr.bf16.mxu0 %v927
        %956 = vmatpush1.bf16.msra.mxu0 %v926
        %957 = vmatprep.subr.bf16.mxu0 %v925
        %958 = vmatpush1.bf16.msra.mxu0 %v924
        %959 = vmatprep.subr.bf16.mxu0 0
        %960 = vmatpush2.bf16.msra.mxu0 0
        %961 = vmatprep.subr.bf16.mxu0 0
        %962 = vmatpush2.bf16.msra.mxu0 0
        %963 = vmatprep.subr.bf16.mxu0 0
        %964 = vmatpush2.bf16.msra.mxu0 0
        %965 = vmatprep.subr.bf16.mxu0 0
        %966 = vmatpush2.bf16.msra.mxu0 0
        %967 = vmatprep.subr.bf16.mxu0 0
        %968 = vmatpush2.bf16.msra.mxu0 0
        %969 = vmatprep.subr.bf16.mxu0 0
        %970 = vmatpush2.bf16.msra.mxu0 0
        %971 = vmatprep.subr.bf16.mxu0 0
        %972 = vmatpush2.bf16.msra.mxu0 0
        %973 = vmatprep.subr.bf16.mxu0 0
        %974 = vmatpush2.bf16.msra.mxu0 0
        %975 = vmatprep.mubr.bf16.mxu0 0
        %976 = vmatmul.mubr.bf16.gmra.mxu0 %v935
        %v977 = vpop.f32.mrf.mxu0
        %v978 = vadd.f32 0.0, %v977
        %v979 = vpop.f32.mrf.mxu0
        %v980 = vadd.f32 0.0, %v979
        %v981 = vpop.f32.mrf.mxu0
        %v982 = vpop.f32.mrf.mxu0
        %983 = vdwg.mxu0
        %v984 = vadd.f32 %v978, %v980
        %985 = vadd.xlane.f32.xlu0 %v984
        %v986 = vpop.xlane.xlu0 %985
        %v987 = vmul.f32 %v986, 0.00390625
        %v988 = vmul.f32 %v978, %v978
        %v989 = vmul.f32 %v980, %v980
        %v990 = vadd.f32 %v988, %v989
        %991 = vadd.xlane.f32.xlu0 %v990
        %v992 = vpop.xlane.xlu0 %991
        %v993 = vmul.f32 %v992, 0.00390625
        %v994 = vmul.f32 %v987, %v987
        %v995 = vsub.f32 %v993, %v994
        %v996 = vmax.f32 %v995, 0.0
        %v997 = vsub.f32 %v978, %v987
        %v998 = vsub.f32 %v980, %v987
        %v999 = vadd.f32 %v996, 1e-05
        %v1000 = vrsqrt.pop %v999
        %v1001 = vmul.f32 %v997, %v1000
        %v1002 = vmul.f32 %v998, %v1000
        %v1003 = vadd.f32 %v633, %v1001
        %v1004 = vadd.f32 %v634, %v1002
        %s1005 = scalar_lea.vmem %s1, 16
        %v1006 = vld [vmem:[%s1005] sm:$0xf]
        %1007 = vrot.lane.b32.xlu0 %v1003, 1
        %v1008 = vpop.permute.xlu0 %1007
        %1009 = vrot.lane.b32.xlu0 %v1004, 1
        %v1010 = vpop.permute.xlu0 %1009
        %v1011 = vsel %vm250, %v1008, %v1010
        %v1012 = vsel %vm250, %v1010, %v1008
        %1013 = vrot.lane.b32.xlu0 %v1003, 127
        %v1014 = vpop.permute.xlu0 %1013
        %1015 = vrot.lane.b32.xlu0 %v1004, 127
        %v1016 = vpop.permute.xlu0 %1015
        %v1017 = vsel %vm257, %v1014, %v1016
        %v1018 = vsel %vm257, %v1016, %v1014
        %v1019 = vsel %vm262, %v1017, %v1012
        %v1020 = vsel %vm263, %v1018, %v1011
        %v1021 = vsel %vm268, %v1012, %v1017
        %v1022 = vsel %vm269, %v1011, %v1018
        %1023 = vrot.lane.b32.xlu0 %v1019, 16
        %v1024 = vpop.permute.xlu0 %1023
        %1025 = vrot.lane.b32.xlu0 %v1020, 16
        %v1026 = vpop.permute.xlu0 %1025
        %v1027 = vsel %vm239, %v1024, %v1026
        %v1028 = vsel %vm239, %v1026, %v1024
        %1029 = vrot.lane.b32.xlu0 %v1019, 112
        %v1030 = vpop.permute.xlu0 %1029
        %1031 = vrot.lane.b32.xlu0 %v1020, 112
        %v1032 = vpop.permute.xlu0 %1031
        %v1033 = vsel %vm282, %v1030, %v1032
        %v1034 = vsel %vm282, %v1032, %v1030
        %v1035 = vsel %vm287, %v1033, %v1028
        %v1036 = vsel %vm288, %v1034, %v1027
        %v1037 = vsel %vm293, %v1028, %v1033
        %v1038 = vsel %vm294, %v1027, %v1034
        %1039 = vst [vmem:[#allocation2] sm:$0xff] %v1035
        %1040 = vst [vmem:[#allocation2 + $0x8] sm:$0xff] %v1036
        %1041 = vst [vmem:[#allocation2 + $0x30] sm:$0xff] %v1019
        %1042 = vst [vmem:[#allocation2 + $0x38] sm:$0xff] %v1020
        %1043 = vst [vmem:[#allocation2 + $0x60] sm:$0xff] %v1037
        %1044 = vst [vmem:[#allocation2 + $0x68] sm:$0xff] %v1038
        %1045 = vrot.lane.b32.xlu0 %v1003, 16
        %v1046 = vpop.permute.xlu0 %1045
        %1047 = vrot.lane.b32.xlu0 %v1004, 16
        %v1048 = vpop.permute.xlu0 %1047
        %v1049 = vsel %vm239, %v1046, %v1048
        %v1050 = vsel %vm239, %v1048, %v1046
        %1051 = vrot.lane.b32.xlu0 %v1003, 112
        %v1052 = vpop.permute.xlu0 %1051
        %1053 = vrot.lane.b32.xlu0 %v1004, 112
        %v1054 = vpop.permute.xlu0 %1053
        %v1055 = vsel %vm282, %v1052, %v1054
        %v1056 = vsel %vm282, %v1054, %v1052
        %v1057 = vsel %vm287, %v1055, %v1050
        %v1058 = vsel %vm288, %v1056, %v1049
        %v1059 = vsel %vm293, %v1050, %v1055
        %v1060 = vsel %vm294, %v1049, %v1056
        %1061 = vst [vmem:[#allocation2 + $0x10] sm:$0xff] %v1057
        %1062 = vst [vmem:[#allocation2 + $0x18] sm:$0xff] %v1058
        %1063 = vst [vmem:[#allocation2 + $0x40] sm:$0xff] %v1003
        %1064 = vst [vmem:[#allocation2 + $0x48] sm:$0xff] %v1004
        %1065 = vst [vmem:[#allocation2 + $0x70] sm:$0xff] %v1059
        %1066 = vst [vmem:[#allocation2 + $0x78] sm:$0xff] %v1060
        %1067 = vrot.lane.b32.xlu0 %v1021, 16
        %v1068 = vpop.permute.xlu0 %1067
        %1069 = vrot.lane.b32.xlu0 %v1022, 16
        %v1070 = vpop.permute.xlu0 %1069
        %v1071 = vsel %vm239, %v1068, %v1070
        %v1072 = vsel %vm239, %v1070, %v1068
        %1073 = vrot.lane.b32.xlu0 %v1021, 112
        %v1074 = vpop.permute.xlu0 %1073
        %1075 = vrot.lane.b32.xlu0 %v1022, 112
        %v1076 = vpop.permute.xlu0 %1075
        %v1077 = vsel %vm282, %v1074, %v1076
        %v1078 = vsel %vm282, %v1076, %v1074
        %v1079 = vsel %vm287, %v1077, %v1072
        %v1080 = vsel %vm288, %v1078, %v1071
        %v1081 = vsel %vm293, %v1072, %v1077
        %v1082 = vsel %vm294, %v1071, %v1078
        %1083 = vst [vmem:[#allocation2 + $0x20] sm:$0xff] %v1079
        %1084 = vst [vmem:[#allocation2 + $0x28] sm:$0xff] %v1080
        %1085 = vst [vmem:[#allocation2 + $0x50] sm:$0xff] %v1021
        %1086 = vst [vmem:[#allocation2 + $0x58] sm:$0xff] %v1022
        %1087 = vst [vmem:[#allocation2 + $0x80] sm:$0xff] %v1081
        %1088 = vst [vmem:[#allocation2 + $0x88] sm:$0xff] %v1082
        %v1089 = vld [vmem:[#allocation2] sm:$0xff]
        %v1090 = vld [vmem:[#allocation2 + $0x8] sm:$0xff]
        %v1091 = vld [vmem:[#allocation2 + $0x10] sm:$0xff]
        %v1092 = vld [vmem:[#allocation2 + $0x18] sm:$0xff]
        %v1093 = vld [vmem:[#allocation2 + $0x20] sm:$0xff]
        %v1094 = vld [vmem:[#allocation2 + $0x28] sm:$0xff]
        %v1095 = vld [vmem:[#allocation2 + $0x30] sm:$0xff]
        %v1096 = vld [vmem:[#allocation2 + $0x38] sm:$0xff]
        %v1097 = vld [vmem:[#allocation2 + $0x40] sm:$0xff]
        %v1098 = vld [vmem:[#allocation2 + $0x48] sm:$0xff]
        %v1099 = vld [vmem:[#allocation2 + $0x50] sm:$0xff]
        %v1100 = vld [vmem:[#allocation2 + $0x58] sm:$0xff]
        %v1101 = vld [vmem:[#allocation2 + $0x60] sm:$0xff]
        %v1102 = vld [vmem:[#allocation2 + $0x68] sm:$0xff]
        %v1103 = vld [vmem:[#allocation2 + $0x70] sm:$0xff]
        %v1104 = vld [vmem:[#allocation2 + $0x78] sm:$0xff]
        %v1105 = vld [vmem:[#allocation2 + $0x80] sm:$0xff]
        %v1106 = vld [vmem:[#allocation2 + $0x88] sm:$0xff]
        %v1107 = vpack.c.bf16 %v1091, %v1089
        %v1108 = vpack.c.bf16 %v1092, %v1090
        %v1109 = vpack.c.bf16 %v1095, %v1093
        %v1110 = vpack.c.bf16 %v1096, %v1094
        %v1111 = vpack.c.bf16 %v1099, %v1097
        %v1112 = vpack.c.bf16 %v1100, %v1098
        %v1113 = vpack.c.bf16 %v1103, %v1101
        %v1114 = vpack.c.bf16 %v1104, %v1102
        %v1115 = vpack.c.bf16 %v1105, %v1105
        %v1116 = vpack.c.bf16 %v1106, %v1106
        %v1118 = vsel %vm375, %v1006, 0
        %v1121 = vsel %vm379, %v1115, 0
        %v1124 = vsel %vm379, %v1116, 0
        %1126 = vmatprep.subr.bf16.mxu0 0
        %1127 = vmatpush1.bf16.msra.mxu0 0
        %1128 = vmatprep.subr.bf16.mxu0 0
        %1129 = vmatpush1.bf16.msra.mxu0 0
        %1130 = vmatprep.subr.bf16.mxu0 0
        %1131 = vmatpush1.bf16.msra.mxu0 0
        %1132 = vmatprep.subr.bf16.mxu0 %v1124
        %1133 = vmatpush1.bf16.msra.mxu0 %v1121
        %1134 = vmatprep.subr.bf16.mxu0 %v1114
        %1135 = vmatpush1.bf16.msra.mxu0 %v1113
        %1136 = vmatprep.subr.bf16.mxu0 %v1112
        %1137 = vmatpush1.bf16.msra.mxu0 %v1111
        %1138 = vmatprep.subr.bf16.mxu0 %v1110
        %1139 = vmatpush1.bf16.msra.mxu0 %v1109
        %1140 = vmatprep.subr.bf16.mxu0 %v1108
        %1141 = vmatpush1.bf16.msra.mxu0 %v1107
        %1142 = vmatprep.subr.bf16.mxu0 0
        %1143 = vmatpush2.bf16.msra.mxu0 0
        %1144 = vmatprep.subr.bf16.mxu0 0
        %1145 = vmatpush2.bf16.msra.mxu0 0
        %1146 = vmatprep.subr.bf16.mxu0 0
        %1147 = vmatpush2.bf16.msra.mxu0 0
        %1148 = vmatprep.subr.bf16.mxu0 0
        %1149 = vmatpush2.bf16.msra.mxu0 0
        %1150 = vmatprep.subr.bf16.mxu0 0
        %1151 = vmatpush2.bf16.msra.mxu0 0
        %1152 = vmatprep.subr.bf16.mxu0 0
        %1153 = vmatpush2.bf16.msra.mxu0 0
        %1154 = vmatprep.subr.bf16.mxu0 0
        %1155 = vmatpush2.bf16.msra.mxu0 0
        %1156 = vmatprep.subr.bf16.mxu0 0
        %1157 = vmatpush2.bf16.msra.mxu0 0
        %1158 = vmatprep.mubr.bf16.mxu0 0
        %1159 = vmatmul.mubr.bf16.gmra.mxu0 %v1118
        %v1160 = vpop.f32.mrf.mxu0
        %v1161 = vadd.f32 0.0, %v1160
        %v1162 = vpop.f32.mrf.mxu0
        %v1163 = vadd.f32 0.0, %v1162
        %v1164 = vpop.f32.mrf.mxu0
        %v1165 = vpop.f32.mrf.mxu0
        %1166 = vdwg.mxu0
        %v1167 = vadd.f32 %v1161, %v1163
        %1168 = vadd.xlane.f32.xlu0 %v1167
        %v1169 = vpop.xlane.xlu0 %1168
        %v1170 = vmul.f32 %v1169, 0.00390625
        %v1171 = vmul.f32 %v1161, %v1161
        %v1172 = vmul.f32 %v1163, %v1163
        %v1173 = vadd.f32 %v1171, %v1172
        %1174 = vadd.xlane.f32.xlu0 %v1173
        %v1175 = vpop.xlane.xlu0 %1174
        %v1176 = vmul.f32 %v1175, 0.00390625
        %v1177 = vmul.f32 %v1170, %v1170
        %v1178 = vsub.f32 %v1176, %v1177
        %v1179 = vmax.f32 %v1178, 0.0
        %v1180 = vsub.f32 %v1161, %v1170
        %v1181 = vsub.f32 %v1163, %v1170
        %v1182 = vadd.f32 %v1179, 1e-05
        %v1183 = vrsqrt.pop %v1182
        %v1184 = vmul.f32 %v1180, %v1183
        %v1185 = vmul.f32 %v1181, %v1183
        %vm1186 = vcmp.ge.f32.partialorder %v1184, 0.0
        %vm1187 = vcmp.ge.f32.partialorder %v1185, 0.0
        %v1188 = vmul.f32 %v1184, 0.01
        %v1189 = vmul.f32 %v1185, 0.01
        %v1190 = vsel %vm1186, %v1184, %v1188
        %v1191 = vsel %vm1187, %v1185, %v1189
        %s1192 = scalar_lea.vmem %s1, 20
        %v1193 = vld [vmem:[%s1192] sm:$0xf]
        %1194 = vrot.lane.b32.xlu0 %v1190, 1
        %v1195 = vpop.permute.xlu0 %1194
        %1196 = vrot.lane.b32.xlu0 %v1191, 1
        %v1197 = vpop.permute.xlu0 %1196
        %v1198 = vsel %vm250, %v1195, %v1197
        %v1199 = vsel %vm250, %v1197, %v1195
        %1200 = vrot.lane.b32.xlu0 %v1190, 127
        %v1201 = vpop.permute.xlu0 %1200
        %1202 = vrot.lane.b32.xlu0 %v1191, 127
        %v1203 = vpop.permute.xlu0 %1202
        %v1204 = vsel %vm257, %v1201, %v1203
        %v1205 = vsel %vm257, %v1203, %v1201
        %v1206 = vsel %vm262, %v1204, %v1199
        %v1207 = vsel %vm263, %v1205, %v1198
        %v1208 = vsel %vm268, %v1199, %v1204
        %v1209 = vsel %vm269, %v1198, %v1205
        %1210 = vrot.lane.b32.xlu0 %v1206, 16
        %v1211 = vpop.permute.xlu0 %1210
        %1212 = vrot.lane.b32.xlu0 %v1207, 16
        %v1213 = vpop.permute.xlu0 %1212
        %v1214 = vsel %vm239, %v1211, %v1213
        %v1215 = vsel %vm239, %v1213, %v1211
        %1216 = vrot.lane.b32.xlu0 %v1206, 112
        %v1217 = vpop.permute.xlu0 %1216
        %1218 = vrot.lane.b32.xlu0 %v1207, 112
        %v1219 = vpop.permute.xlu0 %1218
        %v1220 = vsel %vm282, %v1217, %v1219
        %v1221 = vsel %vm282, %v1219, %v1217
        %v1222 = vsel %vm287, %v1220, %v1215
        %v1223 = vsel %vm288, %v1221, %v1214
        %v1224 = vsel %vm293, %v1215, %v1220
        %v1225 = vsel %vm294, %v1214, %v1221
        %1226 = vst [vmem:[#allocation2] sm:$0xff] %v1222
        %1227 = vst [vmem:[#allocation2 + $0x8] sm:$0xff] %v1223
        %1228 = vst [vmem:[#allocation2 + $0x30] sm:$0xff] %v1206
        %1229 = vst [vmem:[#allocation2 + $0x38] sm:$0xff] %v1207
        %1230 = vst [vmem:[#allocation2 + $0x60] sm:$0xff] %v1224
        %1231 = vst [vmem:[#allocation2 + $0x68] sm:$0xff] %v1225
        %1232 = vrot.lane.b32.xlu0 %v1190, 16
        %v1233 = vpop.permute.xlu0 %1232
        %1234 = vrot.lane.b32.xlu0 %v1191, 16
        %v1235 = vpop.permute.xlu0 %1234
        %v1236 = vsel %vm239, %v1233, %v1235
        %v1237 = vsel %vm239, %v1235, %v1233
        %1238 = vrot.lane.b32.xlu0 %v1190, 112
        %v1239 = vpop.permute.xlu0 %1238
        %1240 = vrot.lane.b32.xlu0 %v1191, 112
        %v1241 = vpop.permute.xlu0 %1240
        %v1242 = vsel %vm282, %v1239, %v1241
        %v1243 = vsel %vm282, %v1241, %v1239
        %v1244 = vsel %vm287, %v1242, %v1237
        %v1245 = vsel %vm288, %v1243, %v1236
        %v1246 = vsel %vm293, %v1237, %v1242
        %v1247 = vsel %vm294, %v1236, %v1243
        %1248 = vst [vmem:[#allocation2 + $0x10] sm:$0xff] %v1244
        %1249 = vst [vmem:[#allocation2 + $0x18] sm:$0xff] %v1245
        %1250 = vst [vmem:[#allocation2 + $0x40] sm:$0xff] %v1190
        %1251 = vst [vmem:[#allocation2 + $0x48] sm:$0xff] %v1191
        %1252 = vst [vmem:[#allocation2 + $0x70] sm:$0xff] %v1246
        %1253 = vst [vmem:[#allocation2 + $0x78] sm:$0xff] %v1247
        %1254 = vrot.lane.b32.xlu0 %v1208, 16
        %v1255 = vpop.permute.xlu0 %1254
        %1256 = vrot.lane.b32.xlu0 %v1209, 16
        %v1257 = vpop.permute.xlu0 %1256
        %v1258 = vsel %vm239, %v1255, %v1257
        %v1259 = vsel %vm239, %v1257, %v1255
        %1260 = vrot.lane.b32.xlu0 %v1208, 112
        %v1261 = vpop.permute.xlu0 %1260
        %1262 = vrot.lane.b32.xlu0 %v1209, 112
        %v1263 = vpop.permute.xlu0 %1262
        %v1264 = vsel %vm282, %v1261, %v1263
        %v1265 = vsel %vm282, %v1263, %v1261
        %v1266 = vsel %vm287, %v1264, %v1259
        %v1267 = vsel %vm288, %v1265, %v1258
        %v1268 = vsel %vm293, %v1259, %v1264
        %v1269 = vsel %vm294, %v1258, %v1265
        %1270 = vst [vmem:[#allocation2 + $0x20] sm:$0xff] %v1266
        %1271 = vst [vmem:[#allocation2 + $0x28] sm:$0xff] %v1267
        %1272 = vst [vmem:[#allocation2 + $0x50] sm:$0xff] %v1208
        %1273 = vst [vmem:[#allocation2 + $0x58] sm:$0xff] %v1209
        %1274 = vst [vmem:[#allocation2 + $0x80] sm:$0xff] %v1268
        %1275 = vst [vmem:[#allocation2 + $0x88] sm:$0xff] %v1269
        %v1276 = vld [vmem:[#allocation2] sm:$0xff]
        %v1277 = vld [vmem:[#allocation2 + $0x8] sm:$0xff]
        %v1278 = vld [vmem:[#allocation2 + $0x10] sm:$0xff]
        %v1279 = vld [vmem:[#allocation2 + $0x18] sm:$0xff]
        %v1280 = vld [vmem:[#allocation2 + $0x20] sm:$0xff]
        %v1281 = vld [vmem:[#allocation2 + $0x28] sm:$0xff]
        %v1282 = vld [vmem:[#allocation2 + $0x30] sm:$0xff]
        %v1283 = vld [vmem:[#allocation2 + $0x38] sm:$0xff]
        %v1284 = vld [vmem:[#allocation2 + $0x40] sm:$0xff]
        %v1285 = vld [vmem:[#allocation2 + $0x48] sm:$0xff]
        %v1286 = vld [vmem:[#allocation2 + $0x50] sm:$0xff]
        %v1287 = vld [vmem:[#allocation2 + $0x58] sm:$0xff]
        %v1288 = vld [vmem:[#allocation2 + $0x60] sm:$0xff]
        %v1289 = vld [vmem:[#allocation2 + $0x68] sm:$0xff]
        %v1290 = vld [vmem:[#allocation2 + $0x70] sm:$0xff]
        %v1291 = vld [vmem:[#allocation2 + $0x78] sm:$0xff]
        %v1292 = vld [vmem:[#allocation2 + $0x80] sm:$0xff]
        %v1293 = vld [vmem:[#allocation2 + $0x88] sm:$0xff]
        %v1294 = vpack.c.bf16 %v1278, %v1276
        %v1295 = vpack.c.bf16 %v1279, %v1277
        %v1296 = vpack.c.bf16 %v1282, %v1280
        %v1297 = vpack.c.bf16 %v1283, %v1281
        %v1298 = vpack.c.bf16 %v1286, %v1284
        %v1299 = vpack.c.bf16 %v1287, %v1285
        %v1300 = vpack.c.bf16 %v1290, %v1288
        %v1301 = vpack.c.bf16 %v1291, %v1289
        %v1302 = vpack.c.bf16 %v1292, %v1292
        %v1303 = vpack.c.bf16 %v1293, %v1293
        %v1305 = vsel %vm375, %v1193, 0
        %v1308 = vsel %vm379, %v1302, 0
        %v1311 = vsel %vm379, %v1303, 0
        %1313 = vmatprep.subr.bf16.mxu0 0
        %1314 = vmatpush1.bf16.msra.mxu0 0
        %1315 = vmatprep.subr.bf16.mxu0 0
        %1316 = vmatpush1.bf16.msra.mxu0 0
        %1317 = vmatprep.subr.bf16.mxu0 0
        %1318 = vmatpush1.bf16.msra.mxu0 0
        %1319 = vmatprep.subr.bf16.mxu0 %v1311
        %1320 = vmatpush1.bf16.msra.mxu0 %v1308
        %1321 = vmatprep.subr.bf16.mxu0 %v1301
        %1322 = vmatpush1.bf16.msra.mxu0 %v1300
        %1323 = vmatprep.subr.bf16.mxu0 %v1299
        %1324 = vmatpush1.bf16.msra.mxu0 %v1298
        %1325 = vmatprep.subr.bf16.mxu0 %v1297
        %1326 = vmatpush1.bf16.msra.mxu0 %v1296
        %1327 = vmatprep.subr.bf16.mxu0 %v1295
        %1328 = vmatpush1.bf16.msra.mxu0 %v1294
        %1329 = vmatprep.subr.bf16.mxu0 0
        %1330 = vmatpush2.bf16.msra.mxu0 0
        %1331 = vmatprep.subr.bf16.mxu0 0
        %1332 = vmatpush2.bf16.msra.mxu0 0
        %1333 = vmatprep.subr.bf16.mxu0 0
        %1334 = vmatpush2.bf16.msra.mxu0 0
        %1335 = vmatprep.subr.bf16.mxu0 0
        %1336 = vmatpush2.bf16.msra.mxu0 0
        %1337 = vmatprep.subr.bf16.mxu0 0
        %1338 = vmatpush2.bf16.msra.mxu0 0
        %1339 = vmatprep.subr.bf16.mxu0 0
        %1340 = vmatpush2.bf16.msra.mxu0 0
        %1341 = vmatprep.subr.bf16.mxu0 0
        %1342 = vmatpush2.bf16.msra.mxu0 0
        %1343 = vmatprep.subr.bf16.mxu0 0
        %1344 = vmatpush2.bf16.msra.mxu0 0
        %1345 = vmatprep.mubr.bf16.mxu0 0
        %1346 = vmatmul.mubr.bf16.gmra.mxu0 %v1305
        %v1347 = vpop.f32.mrf.mxu0
        %v1348 = vadd.f32 0.0, %v1347
        %v1349 = vpop.f32.mrf.mxu0
        %v1350 = vadd.f32 0.0, %v1349
        %v1351 = vpop.f32.mrf.mxu0
        %v1352 = vpop.f32.mrf.mxu0
        %1353 = vdwg.mxu0
        %v1354 = vadd.f32 %v1348, %v1350
        %1355 = vadd.xlane.f32.xlu0 %v1354
        %v1356 = vpop.xlane.xlu0 %1355
        %v1357 = vmul.f32 %v1356, 0.00390625
        %v1358 = vmul.f32 %v1348, %v1348
        %v1359 = vmul.f32 %v1350, %v1350
        %v1360 = vadd.f32 %v1358, %v1359
        %1361 = vadd.xlane.f32.xlu0 %v1360
        %v1362 = vpop.xlane.xlu0 %1361
        %v1363 = vmul.f32 %v1362, 0.00390625
        %v1364 = vmul.f32 %v1357, %v1357
        %v1365 = vsub.f32 %v1363, %v1364
        %v1366 = vmax.f32 %v1365, 0.0
        %v1367 = vsub.f32 %v1348, %v1357
        %v1368 = vsub.f32 %v1350, %v1357
        %v1369 = vadd.f32 %v1366, 1e-05
        %v1370 = vrsqrt.pop %v1369
        %v1371 = vmul.f32 %v1367, %v1370
        %v1372 = vmul.f32 %v1368, %v1370
        %v1373 = vadd.f32 %v1003, %v1371
        %v1374 = vadd.f32 %v1004, %v1372
        %v1375 = vadd.f32 %v243, %v1373
        %v1376 = vadd.f32 %v244, %v1374
        %v1377 = vadd.f32 %v1375, %v1376
        %1378 = vadd.xlane.f32.xlu0 %v1377
        %v1379 = vpop.xlane.xlu0 %1378
        %v1380 = vmul.f32 %v1379, 0.00390625
        %v1381 = vmul.f32 %v1375, %v1375
        %v1382 = vmul.f32 %v1376, %v1376
        %v1383 = vadd.f32 %v1381, %v1382
        %1384 = vadd.xlane.f32.xlu0 %v1383
        %v1385 = vpop.xlane.xlu0 %1384
        %v1386 = vmul.f32 %v1385, 0.00390625
        %v1387 = vmul.f32 %v1380, %v1380
        %v1388 = vsub.f32 %v1386, %v1387
        %v1389 = vmax.f32 %v1388, 0.0
        %v1390 = vsub.f32 %v1375, %v1380
        %v1391 = vsub.f32 %v1376, %v1380
        %v1392 = vadd.f32 %v1389, 1e-06
        %v1393 = vrsqrt.pop %v1392
        %v1394 = vmul.f32 %v1390, %v1393
        %v1395 = vmul.f32 %v1391, %v1393
        %1396 = vrot.lane.b32.xlu0 %v1394, 1
        %v1397 = vpop.permute.xlu0 %1396
        %1398 = vrot.lane.b32.xlu0 %v1395, 1
        %v1399 = vpop.permute.xlu0 %1398
        %v1400 = vsel %vm250, %v1397, %v1399
        %v1401 = vsel %vm250, %v1399, %v1397
        %1402 = vrot.lane.b32.xlu0 %v1394, 127
        %v1403 = vpop.permute.xlu0 %1402
        %1404 = vrot.lane.b32.xlu0 %v1395, 127
        %v1405 = vpop.permute.xlu0 %1404
        %v1406 = vsel %vm257, %v1403, %v1405
        %v1407 = vsel %vm257, %v1405, %v1403
        %v1408 = vsel %vm262, %v1406, %v1401
        %v1409 = vsel %vm263, %v1407, %v1400
        %v1410 = vsel %vm268, %v1401, %v1406
        %v1411 = vsel %vm269, %v1400, %v1407
        %1412 = vrot.lane.b32.xlu0 %v1408, 16
        %v1413 = vpop.permute.xlu0 %1412
        %1414 = vrot.lane.b32.xlu0 %v1409, 16
        %v1415 = vpop.permute.xlu0 %1414
        %v1416 = vsel %vm239, %v1413, %v1415
        %v1417 = vsel %vm239, %v1415, %v1413
        %1418 = vrot.lane.b32.xlu0 %v1408, 112
        %v1419 = vpop.permute.xlu0 %1418
        %1420 = vrot.lane.b32.xlu0 %v1409, 112
        %v1421 = vpop.permute.xlu0 %1420
        %v1422 = vsel %vm282, %v1419, %v1421
        %v1423 = vsel %vm282, %v1421, %v1419
        %v1424 = vsel %vm287, %v1422, %v1417
        %v1425 = vsel %vm288, %v1423, %v1416
        %v1426 = vsel %vm293, %v1417, %v1422
        %v1427 = vsel %vm294, %v1416, %v1423
        %1428 = vst [vmem:[#allocation2] sm:$0xff] %v1424
        %1429 = vst [vmem:[#allocation2 + $0x8] sm:$0xff] %v1425
        %1430 = vst [vmem:[#allocation2 + $0x30] sm:$0xff] %v1408
        %1431 = vst [vmem:[#allocation2 + $0x38] sm:$0xff] %v1409
        %1432 = vst [vmem:[#allocation2 + $0x60] sm:$0xff] %v1426
        %1433 = vst [vmem:[#allocation2 + $0x68] sm:$0xff] %v1427
        %1434 = vrot.lane.b32.xlu0 %v1394, 16
        %v1435 = vpop.permute.xlu0 %1434
        %1436 = vrot.lane.b32.xlu0 %v1395, 16
        %v1437 = vpop.permute.xlu0 %1436
        %v1438 = vsel %vm239, %v1435, %v1437
        %v1439 = vsel %vm239, %v1437, %v1435
        %1440 = vrot.lane.b32.xlu0 %v1394, 112
        %v1441 = vpop.permute.xlu0 %1440
        %1442 = vrot.lane.b32.xlu0 %v1395, 112
        %v1443 = vpop.permute.xlu0 %1442
        %v1444 = vsel %vm282, %v1441, %v1443
        %v1445 = vsel %vm282, %v1443, %v1441
        %v1446 = vsel %vm287, %v1444, %v1439
        %v1447 = vsel %vm288, %v1445, %v1438
        %v1448 = vsel %vm293, %v1439, %v1444
        %v1449 = vsel %vm294, %v1438, %v1445
        %1450 = vst [vmem:[#allocation2 + $0x10] sm:$0xff] %v1446
        %1451 = vst [vmem:[#allocation2 + $0x18] sm:$0xff] %v1447
        %1452 = vst [vmem:[#allocation2 + $0x40] sm:$0xff] %v1394
        %1453 = vst [vmem:[#allocation2 + $0x48] sm:$0xff] %v1395
        %1454 = vst [vmem:[#allocation2 + $0x70] sm:$0xff] %v1448
        %1455 = vst [vmem:[#allocation2 + $0x78] sm:$0xff] %v1449
        %1456 = vrot.lane.b32.xlu0 %v1410, 16
        %v1457 = vpop.permute.xlu0 %1456
        %1458 = vrot.lane.b32.xlu0 %v1411, 16
        %v1459 = vpop.permute.xlu0 %1458
        %v1460 = vsel %vm239, %v1457, %v1459
        %v1461 = vsel %vm239, %v1459, %v1457
        %1462 = vrot.lane.b32.xlu0 %v1410, 112
        %v1463 = vpop.permute.xlu0 %1462
        %1464 = vrot.lane.b32.xlu0 %v1411, 112
        %v1465 = vpop.permute.xlu0 %1464
        %v1466 = vsel %vm282, %v1463, %v1465
        %v1467 = vsel %vm282, %v1465, %v1463
        %v1468 = vsel %vm287, %v1466, %v1461
        %v1469 = vsel %vm288, %v1467, %v1460
        %v1470 = vsel %vm293, %v1461, %v1466
        %v1471 = vsel %vm294, %v1460, %v1467
        %1472 = vst [vmem:[#allocation2 + $0x20] sm:$0xff] %v1468
        %1473 = vst [vmem:[#allocation2 + $0x28] sm:$0xff] %v1469
        %1474 = vst [vmem:[#allocation2 + $0x50] sm:$0xff] %v1410
        %1475 = vst [vmem:[#allocation2 + $0x58] sm:$0xff] %v1411
        %1476 = vst [vmem:[#allocation2 + $0x80] sm:$0xff] %v1470
        %1477 = vst [vmem:[#allocation2 + $0x88] sm:$0xff] %v1471
        %v1478 = vld [vmem:[#allocation2] sm:$0xff]
        %v1479 = vld [vmem:[#allocation2 + $0x8] sm:$0xff]
        %v1480 = vld [vmem:[#allocation2 + $0x10] sm:$0xff]
        %v1481 = vld [vmem:[#allocation2 + $0x18] sm:$0xff]
        %v1482 = vld [vmem:[#allocation2 + $0x20] sm:$0xff]
        %v1483 = vld [vmem:[#allocation2 + $0x28] sm:$0xff]
        %v1484 = vld [vmem:[#allocation2 + $0x30] sm:$0xff]
        %v1485 = vld [vmem:[#allocation2 + $0x38] sm:$0xff]
        %v1486 = vld [vmem:[#allocation2 + $0x40] sm:$0xff]
        %v1487 = vld [vmem:[#allocation2 + $0x48] sm:$0xff]
        %v1488 = vld [vmem:[#allocation2 + $0x50] sm:$0xff]
        %v1489 = vld [vmem:[#allocation2 + $0x58] sm:$0xff]
        %v1490 = vld [vmem:[#allocation2 + $0x60] sm:$0xff]
        %v1491 = vld [vmem:[#allocation2 + $0x68] sm:$0xff]
        %v1492 = vld [vmem:[#allocation2 + $0x70] sm:$0xff]
        %v1493 = vld [vmem:[#allocation2 + $0x78] sm:$0xff]
        %v1494 = vld [vmem:[#allocation2 + $0x80] sm:$0xff]
        %v1495 = vld [vmem:[#allocation2 + $0x88] sm:$0xff]
        %v1496 = vpack.c.bf16 %v1480, %v1478
        %v1497 = vpack.c.bf16 %v1481, %v1479
        %v1498 = vpack.c.bf16 %v1484, %v1482
        %v1499 = vpack.c.bf16 %v1485, %v1483
        %v1500 = vpack.c.bf16 %v1488, %v1486
        %v1501 = vpack.c.bf16 %v1489, %v1487
        %v1502 = vpack.c.bf16 %v1492, %v1490
        %v1503 = vpack.c.bf16 %v1493, %v1491
        %v1504 = vpack.c.bf16 %v1494, %v1494
        %v1505 = vpack.c.bf16 %v1495, %v1495
        %v1506 = vld [vmem:[%s4] sm:$0xf]
        %v1507 = vld [vmem:[%s4 + $0x4] sm:$0xf]
        %v1508 = vld [vmem:[%s4 + $0x8] sm:$0xf]
        %v1509 = vld [vmem:[%s4 + $0xc] sm:$0xf]
        %v1510 = vld [vmem:[%s4 + $0x10] sm:$0xf]
        %v1511 = vld [vmem:[%s4 + $0x14] sm:$0xf]
        %v1512 = vld [vmem:[%s4 + $0x18] sm:$0xf]
        %v1513 = vld [vmem:[%s4 + $0x1c] sm:$0xf]
        %v1514 = vld [vmem:[%s4 + $0x20] sm:$0xf]
        %v1515 = vld [vmem:[%s4 + $0x24] sm:$0xf]
        %v1516 = vld [vmem:[%s4 + $0x28] sm:$0xf]
        %v1517 = vld [vmem:[%s4 + $0x2c] sm:$0xf]
        %v1518 = vld [vmem:[%s4 + $0x30] sm:$0xf]
        %v1519 = vld [vmem:[%s4 + $0x34] sm:$0xf]
        %v1520 = vld [vmem:[%s4 + $0x38] sm:$0xf]
        %v1521 = vld [vmem:[%s4 + $0x3c] sm:$0xf]
        %v1522 = vld [vmem:[%s4 + $0x40] sm:$0xf]
        %v1523 = vld [vmem:[%s4 + $0x44] sm:$0xf]
        %v1524 = vld [vmem:[%s4 + $0x48] sm:$0xf]
        %v1525 = vld [vmem:[%s4 + $0x4c] sm:$0xf]
        %v1526 = vld [vmem:[%s4 + $0x50] sm:$0xf]
        %v1527 = vld [vmem:[%s4 + $0x54] sm:$0xf]
        %v1528 = vld [vmem:[%s4 + $0x58] sm:$0xf]
        %v1529 = vld [vmem:[%s4 + $0x5c] sm:$0xf]
        %v1530 = vld [vmem:[%s4 + $0x60] sm:$0xf]
        %v1531 = vld [vmem:[%s4 + $0x64] sm:$0xf]
        %v1532 = vld [vmem:[%s4 + $0x68] sm:$0xf]
        %v1533 = vld [vmem:[%s4 + $0x6c] sm:$0xf]
        %v1534 = vld [vmem:[%s4 + $0x70] sm:$0xf]
        %v1535 = vld [vmem:[%s4 + $0x74] sm:$0xf]
        %v1536 = vld [vmem:[%s4 + $0x78] sm:$0xf]
        %v1537 = vld [vmem:[%s4 + $0x7c] sm:$0xf]
        %v1570 = vunpack.c.l.b16 %v1506
        %v1571 = vunpack.c.l.b16 %v1507
        %v1572 = vunpack.c.l.b16 %v1508
        %v1573 = vunpack.c.l.b16 %v1509
        %v1574 = vunpack.c.l.b16 %v1510
        %v1575 = vunpack.c.l.b16 %v1511
        %v1576 = vunpack.c.l.b16 %v1512
        %v1577 = vunpack.c.l.b16 %v1513
        %v1578 = vunpack.c.l.b16 %v1514
        %v1579 = vunpack.c.l.b16 %v1515
        %v1580 = vunpack.c.l.b16 %v1516
        %v1581 = vunpack.c.l.b16 %v1517
        %v1582 = vunpack.c.l.b16 %v1518
        %v1583 = vunpack.c.l.b16 %v1519
        %v1584 = vunpack.c.l.b16 %v1520
        %v1585 = vunpack.c.l.b16 %v1521
        %v1586 = vunpack.c.l.b16 %v1522
        %v1587 = vunpack.c.l.b16 %v1523
        %v1588 = vunpack.c.l.b16 %v1524
        %v1589 = vunpack.c.l.b16 %v1525
        %v1590 = vunpack.c.l.b16 %v1526
        %v1591 = vunpack.c.l.b16 %v1527
        %v1592 = vunpack.c.l.b16 %v1528
        %v1593 = vunpack.c.l.b16 %v1529
        %v1594 = vunpack.c.l.b16 %v1530
        %v1595 = vunpack.c.l.b16 %v1531
        %v1596 = vunpack.c.l.b16 %v1532
        %v1597 = vunpack.c.l.b16 %v1533
        %v1598 = vunpack.c.l.b16 %v1534
        %v1599 = vunpack.c.l.b16 %v1535
        %v1600 = vunpack.c.l.b16 %v1536
        %v1601 = vunpack.c.l.b16 %v1537
        %v1602 = vpack.c.b16 %v1571, %v1570
        %v1603 = vpack.c.b16 %v1573, %v1572
        %v1604 = vpack.c.b16 %v1575, %v1574
        %v1605 = vpack.c.b16 %v1577, %v1576
        %v1606 = vpack.c.b16 %v1579, %v1578
        %v1607 = vpack.c.b16 %v1581, %v1580
        %v1608 = vpack.c.b16 %v1583, %v1582
        %v1609 = vpack.c.b16 %v1585, %v1584
        %v1610 = vpack.c.b16 %v1587, %v1586
        %v1611 = vpack.c.b16 %v1589, %v1588
        %v1612 = vpack.c.b16 %v1591, %v1590
        %v1613 = vpack.c.b16 %v1593, %v1592
        %v1614 = vpack.c.b16 %v1595, %v1594
        %v1615 = vpack.c.b16 %v1597, %v1596
        %v1616 = vpack.c.b16 %v1599, %v1598
        %v1617 = vpack.c.b16 %v1601, %v1600
        %1634 = vmatprep.subr.bf16.mxu0 0
        %1635 = vmatpush1.bf16.msra.mxu0 %v1609
        %1636 = vmatprep.subr.bf16.mxu0 0
        %1637 = vmatpush1.bf16.msra.mxu0 %v1608
        %1638 = vmatprep.subr.bf16.mxu0 0
        %1639 = vmatpush1.bf16.msra.mxu0 %v1607
        %1640 = vmatprep.subr.bf16.mxu0 0
        %1641 = vmatpush1.bf16.msra.mxu0 %v1606
        %1642 = vmatprep.subr.bf16.mxu0 0
        %1643 = vmatpush1.bf16.msra.mxu0 %v1605
        %1644 = vmatprep.subr.bf16.mxu0 0
        %1645 = vmatpush1.bf16.msra.mxu0 %v1604
        %1646 = vmatprep.subr.bf16.mxu0 0
        %1647 = vmatpush1.bf16.msra.mxu0 %v1603
        %1648 = vmatprep.subr.bf16.mxu0 0
        %1649 = vmatpush1.bf16.msra.mxu0 %v1602
        %1650 = vmatprep.subr.bf16.mxu0 0
        %1651 = vmatpush2.bf16.msra.mxu0 %v1617
        %1652 = vmatprep.subr.bf16.mxu0 0
        %1653 = vmatpush2.bf16.msra.mxu0 %v1616
        %1654 = vmatprep.subr.bf16.mxu0 0
        %1655 = vmatpush2.bf16.msra.mxu0 %v1615
        %1656 = vmatprep.subr.bf16.mxu0 0
        %1657 = vmatpush2.bf16.msra.mxu0 %v1614
        %1658 = vmatprep.subr.bf16.mxu0 0
        %1659 = vmatpush2.bf16.msra.mxu0 %v1613
        %1660 = vmatprep.subr.bf16.mxu0 0
        %1661 = vmatpush2.bf16.msra.mxu0 %v1612
        %1662 = vmatprep.subr.bf16.mxu0 0
        %1663 = vmatpush2.bf16.msra.mxu0 %v1611
        %1664 = vmatprep.subr.bf16.mxu0 0
        %1665 = vmatpush2.bf16.msra.mxu0 %v1610
        %1666 = vmatprep.mubr.bf16.mxu0 %v1497
        %1667 = vmatmul.mubr.bf16.gmra.mxu0 %v1496
        %v1668 = vpop.f32.mrf.mxu0
        %v1669 = vadd.f32 0.0, %v1668
        %v1670 = vpop.f32.mrf.mxu0
        %v1671 = vpop.f32.mrf.mxu0
        %v1672 = vadd.f32 0.0, %v1671
        %v1673 = vpop.f32.mrf.mxu0
        %1674 = vmatprep.mubr.bf16.mxu0 %v1499
        %1675 = vmatmul.mubr.bf16.gmra.mxu0 %v1498
        %v1676 = vpop.f32.mrf.mxu0
        %v1677 = vadd.f32 0.0, %v1676
        %v1678 = vpop.f32.mrf.mxu0
        %v1679 = vpop.f32.mrf.mxu0
        %v1680 = vadd.f32 0.0, %v1679
        %v1681 = vpop.f32.mrf.mxu0
        %1682 = vmatprep.mubr.bf16.mxu0 %v1501
        %1683 = vmatmul.mubr.bf16.gmra.mxu0 %v1500
        %v1684 = vpop.f32.mrf.mxu0
        %v1685 = vadd.f32 0.0, %v1684
        %v1686 = vpop.f32.mrf.mxu0
        %v1687 = vpop.f32.mrf.mxu0
        %v1688 = vadd.f32 0.0, %v1687
        %v1689 = vpop.f32.mrf.mxu0
        %1690 = vmatprep.mubr.bf16.mxu0 %v1503
        %1691 = vmatmul.mubr.bf16.gmra.mxu0 %v1502
        %v1692 = vpop.f32.mrf.mxu0
        %v1693 = vadd.f32 0.0, %v1692
        %v1694 = vpop.f32.mrf.mxu0
        %v1695 = vpop.f32.mrf.mxu0
        %v1696 = vadd.f32 0.0, %v1695
        %v1697 = vpop.f32.mrf.mxu0
        %1698 = vmatprep.mubr.bf16.mxu0 %v1505
        %1699 = vmatmul.mubr.bf16.gmra.mxu0 %v1504
        %v1700 = vpop.f32.mrf.mxu0
        %v1701 = vadd.f32 0.0, %v1700
        %v1702 = vpop.f32.mrf.mxu0
        %v1703 = vpop.f32.mrf.mxu0
        %v1704 = vpop.f32.mrf.mxu0
        %1705 = vdwg.mxu0
        %v1706 = vld [vmem:[%s2] sm:$0xf]
        %v1707 = vld [vmem:[%s2 + $0x4] sm:$0xf]
        %v1708 = vpack.c.bf16 %v1672, %v1669
        %v1709 = vpack.c.bf16 %v1680, %v1677
        %v1710 = vpack.c.bf16 %v1688, %v1685
        %v1711 = vpack.c.bf16 %v1696, %v1693
        %v1712 = vpack.c.bf16 %v1701, %v1701
        %v1713 = vld [vmem:[%s3] sm:$0xff]
        %v1714 = vld [vmem:[%s3 + $0x8] sm:$0xff]
        %1716 = vset.pattern.permute.xlu0 0
        %1717 = vperm.xlu0 %1716, %v1713
        %v1718 = vpop.permute.xlu0 %1717
        %1721 = vset.pattern.permute.xlu0 0
        %1722 = vperm.xlu0 %1721, %v1714
        %v1723 = vpop.permute.xlu0 %1722
        %v1727 = vunpack.c.l.b16 %v1706
        %v1728 = vunpack.c.l.b16 %v1707
        %v1729 = vpack.c.b16 %v1728, %v1727
        %v1731 = vsel %vm375, %v1729, 0
        %v1734 = vsel %vm379, %v1712, 0
        %1736 = vmatprep.subr.bf16.mxu0 0
        %1737 = vmatpush1.bf16.msra.mxu0 0
        %1738 = vmatprep.subr.bf16.mxu0 0
        %1739 = vmatpush1.bf16.msra.mxu0 0
        %1740 = vmatprep.subr.bf16.mxu0 0
        %1741 = vmatpush1.bf16.msra.mxu0 0
        %1742 = vmatprep.subr.bf16.mxu0 0
        %1743 = vmatpush1.bf16.msra.mxu0 %v1734
        %1744 = vmatprep.subr.bf16.mxu0 0
        %1745 = vmatpush1.bf16.msra.mxu0 %v1711
        %1746 = vmatprep.subr.bf16.mxu0 0
        %1747 = vmatpush1.bf16.msra.mxu0 %v1710
        %1748 = vmatprep.subr.bf16.mxu0 0
        %1749 = vmatpush1.bf16.msra.mxu0 %v1709
        %1750 = vmatprep.subr.bf16.mxu0 0
        %1751 = vmatpush1.bf16.msra.mxu0 %v1708
        %1752 = vmatprep.subr.bf16.mxu0 0
        %1753 = vmatpush2.bf16.msra.mxu0 0
        %1754 = vmatprep.subr.bf16.mxu0 0
        %1755 = vmatpush2.bf16.msra.mxu0 0
        %1756 = vmatprep.subr.bf16.mxu0 0
        %1757 = vmatpush2.bf16.msra.mxu0 0
        %1758 = vmatprep.subr.bf16.mxu0 0
        %1759 = vmatpush2.bf16.msra.mxu0 0
        %1760 = vmatprep.subr.bf16.mxu0 0
        %1761 = vmatpush2.bf16.msra.mxu0 0
        %1762 = vmatprep.subr.bf16.mxu0 0
        %1763 = vmatpush2.bf16.msra.mxu0 0
        %1764 = vmatprep.subr.bf16.mxu0 0
        %1765 = vmatpush2.bf16.msra.mxu0 0
        %1766 = vmatprep.subr.bf16.mxu0 0
        %1767 = vmatpush2.bf16.msra.mxu0 0
        %1768 = vmatprep.mubr.bf16.mxu0 0
        %1769 = vmatmul.mubr.bf16.gmra.mxu0 %v1731
        %v1770 = vpop.f32.mrf.mxu0
        %v1771 = vadd.f32 %v1718, %v1770
        %v1772 = vpop.f32.mrf.mxu0
        %v1773 = vpop.f32.mrf.mxu0
        %v1774 = vadd.f32 %v1723, %v1773
        %v1775 = vpop.f32.mrf.mxu0
        %1776 = vdwg.mxu0
        %vm1777 = vcmask 523264
        %1778 = vst.msk [vmem:[%s220] sm:$0xff] %vm1777, %v1771
        %1779 = vst.msk [vmem:[%s220 + $0x8] sm:$0xff] %vm1777, %v1774
        %s1780 = scalar_lea.vmem %s226, 16
        %v1781 = vld [vmem:[%s1780] sm:$0xff]
        %v1782 = vld [vmem:[%s1780 + $0x8] sm:$0xff]
        %v1783 = vld [vmem:[%s1] sm:$0xf]
        %1784 = vrot.lane.b32.xlu0 %v1781, 1
        %v1785 = vpop.permute.xlu0 %1784
        %1786 = vrot.lane.b32.xlu0 %v1782, 1
        %v1787 = vpop.permute.xlu0 %1786
        %v1788 = vsel %vm250, %v1785, %v1787
        %v1789 = vsel %vm250, %v1787, %v1785
        %1790 = vrot.lane.b32.xlu0 %v1781, 127
        %v1791 = vpop.permute.xlu0 %1790
        %1792 = vrot.lane.b32.xlu0 %v1782, 127
        %v1793 = vpop.permute.xlu0 %1792
        %v1794 = vsel %vm257, %v1791, %v1793
        %v1795 = vsel %vm257, %v1793, %v1791
        %v1796 = vsel %vm262, %v1794, %v1789
        %v1797 = vsel %vm263, %v1795, %v1788
        %v1798 = vsel %vm268, %v1789, %v1794
        %v1799 = vsel %vm269, %v1788, %v1795
        %1800 = vrot.lane.b32.xlu0 %v1796, 16
        %v1801 = vpop.permute.xlu0 %1800
        %1802 = vrot.lane.b32.xlu0 %v1797, 16
        %v1803 = vpop.permute.xlu0 %1802
        %v1804 = vsel %vm239, %v1801, %v1803
        %v1805 = vsel %vm239, %v1803, %v1801
        %1806 = vrot.lane.b32.xlu0 %v1796, 112
        %v1807 = vpop.permute.xlu0 %1806
        %1808 = vrot.lane.b32.xlu0 %v1797, 112
        %v1809 = vpop.permute.xlu0 %1808
        %v1810 = vsel %vm282, %v1807, %v1809
        %v1811 = vsel %vm282, %v1809, %v1807
        %v1812 = vsel %vm287, %v1810, %v1805
        %v1813 = vsel %vm288, %v1811, %v1804
        %v1814 = vsel %vm293, %v1805, %v1810
        %v1815 = vsel %vm294, %v1804, %v1811
        %1816 = vst [vmem:[#allocation2] sm:$0xff] %v1812
        %1817 = vst [vmem:[#allocation2 + $0x8] sm:$0xff] %v1813
        %1818 = vst [vmem:[#allocation2 + $0x30] sm:$0xff] %v1796
        %1819 = vst [vmem:[#allocation2 + $0x38] sm:$0xff] %v1797
        %1820 = vst [vmem:[#allocation2 + $0x60] sm:$0xff] %v1814
        %1821 = vst [vmem:[#allocation2 + $0x68] sm:$0xff] %v1815
        %1822 = vrot.lane.b32.xlu0 %v1781, 16
        %v1823 = vpop.permute.xlu0 %1822
        %1824 = vrot.lane.b32.xlu0 %v1782, 16
        %v1825 = vpop.permute.xlu0 %1824
        %v1826 = vsel %vm239, %v1823, %v1825
        %v1827 = vsel %vm239, %v1825, %v1823
        %1828 = vrot.lane.b32.xlu0 %v1781, 112
        %v1829 = vpop.permute.xlu0 %1828
        %1830 = vrot.lane.b32.xlu0 %v1782, 112
        %v1831 = vpop.permute.xlu0 %1830
        %v1832 = vsel %vm282, %v1829, %v1831
        %v1833 = vsel %vm282, %v1831, %v1829
        %v1834 = vsel %vm287, %v1832, %v1827
        %v1835 = vsel %vm288, %v1833, %v1826
        %v1836 = vsel %vm293, %v1827, %v1832
        %v1837 = vsel %vm294, %v1826, %v1833
        %1838 = vst [vmem:[#allocation2 + $0x10] sm:$0xff] %v1834
        %1839 = vst [vmem:[#allocation2 + $0x18] sm:$0xff] %v1835
        %1840 = vst [vmem:[#allocation2 + $0x40] sm:$0xff] %v1781
        %1841 = vst [vmem:[#allocation2 + $0x48] sm:$0xff] %v1782
        %1842 = vst [vmem:[#allocation2 + $0x70] sm:$0xff] %v1836
        %1843 = vst [vmem:[#allocation2 + $0x78] sm:$0xff] %v1837
        %1844 = vrot.lane.b32.xlu0 %v1798, 16
        %v1845 = vpop.permute.xlu0 %1844
        %1846 = vrot.lane.b32.xlu0 %v1799, 16
        %v1847 = vpop.permute.xlu0 %1846
        %v1848 = vsel %vm239, %v1845, %v1847
        %v1849 = vsel %vm239, %v1847, %v1845
        %1850 = vrot.lane.b32.xlu0 %v1798, 112
        %v1851 = vpop.permute.xlu0 %1850
        %1852 = vrot.lane.b32.xlu0 %v1799, 112
        %v1853 = vpop.permute.xlu0 %1852
        %v1854 = vsel %vm282, %v1851, %v1853
        %v1855 = vsel %vm282, %v1853, %v1851
        %v1856 = vsel %vm287, %v1854, %v1849
        %v1857 = vsel %vm288, %v1855, %v1848
        %v1858 = vsel %vm293, %v1849, %v1854
        %v1859 = vsel %vm294, %v1848, %v1855
        %1860 = vst [vmem:[#allocation2 + $0x20] sm:$0xff] %v1856
        %1861 = vst [vmem:[#allocation2 + $0x28] sm:$0xff] %v1857
        %1862 = vst [vmem:[#allocation2 + $0x50] sm:$0xff] %v1798
        %1863 = vst [vmem:[#allocation2 + $0x58] sm:$0xff] %v1799
        %1864 = vst [vmem:[#allocation2 + $0x80] sm:$0xff] %v1858
        %1865 = vst [vmem:[#allocation2 + $0x88] sm:$0xff] %v1859
        %v1866 = vld [vmem:[#allocation2] sm:$0xff]
        %v1867 = vld [vmem:[#allocation2 + $0x8] sm:$0xff]
        %v1868 = vld [vmem:[#allocation2 + $0x10] sm:$0xff]
        %v1869 = vld [vmem:[#allocation2 + $0x18] sm:$0xff]
        %v1870 = vld [vmem:[#allocation2 + $0x20] sm:$0xff]
        %v1871 = vld [vmem:[#allocation2 + $0x28] sm:$0xff]
        %v1872 = vld [vmem:[#allocation2 + $0x30] sm:$0xff]
        %v1873 = vld [vmem:[#allocation2 + $0x38] sm:$0xff]
        %v1874 = vld [vmem:[#allocation2 + $0x40] sm:$0xff]
        %v1875 = vld [vmem:[#allocation2 + $0x48] sm:$0xff]
        %v1876 = vld [vmem:[#allocation2 + $0x50] sm:$0xff]
        %v1877 = vld [vmem:[#allocation2 + $0x58] sm:$0xff]
        %v1878 = vld [vmem:[#allocation2 + $0x60] sm:$0xff]
        %v1879 = vld [vmem:[#allocation2 + $0x68] sm:$0xff]
        %v1880 = vld [vmem:[#allocation2 + $0x70] sm:$0xff]
        %v1881 = vld [vmem:[#allocation2 + $0x78] sm:$0xff]
        %v1882 = vld [vmem:[#allocation2 + $0x80] sm:$0xff]
        %v1883 = vld [vmem:[#allocation2 + $0x88] sm:$0xff]
        %v1884 = vpack.c.bf16 %v1868, %v1866
        %v1885 = vpack.c.bf16 %v1869, %v1867
        %v1886 = vpack.c.bf16 %v1872, %v1870
        %v1887 = vpack.c.bf16 %v1873, %v1871
        %v1888 = vpack.c.bf16 %v1876, %v1874
        %v1889 = vpack.c.bf16 %v1877, %v1875
        %v1890 = vpack.c.bf16 %v1880, %v1878
        %v1891 = vpack.c.bf16 %v1881, %v1879
        %v1892 = vpack.c.bf16 %v1882, %v1882
        %v1893 = vpack.c.bf16 %v1883, %v1883
        %v1895 = vsel %vm375, %v1783, 0
        %v1898 = vsel %vm379, %v1892, 0
        %v1901 = vsel %vm379, %v1893, 0
        %1903 = vmatprep.subr.bf16.mxu0 0
        %1904 = vmatpush1.bf16.msra.mxu0 0
        %1905 = vmatprep.subr.bf16.mxu0 0
        %1906 = vmatpush1.bf16.msra.mxu0 0
        %1907 = vmatprep.subr.bf16.mxu0 0
        %1908 = vmatpush1.bf16.msra.mxu0 0
        %1909 = vmatprep.subr.bf16.mxu0 %v1901
        %1910 = vmatpush1.bf16.msra.mxu0 %v1898
        %1911 = vmatprep.subr.bf16.mxu0 %v1891
        %1912 = vmatpush1.bf16.msra.mxu0 %v1890
        %1913 = vmatprep.subr.bf16.mxu0 %v1889
        %1914 = vmatpush1.bf16.msra.mxu0 %v1888
        %1915 = vmatprep.subr.bf16.mxu0 %v1887
        %1916 = vmatpush1.bf16.msra.mxu0 %v1886
        %1917 = vmatprep.subr.bf16.mxu0 %v1885
        %1918 = vmatpush1.bf16.msra.mxu0 %v1884
        %1919 = vmatprep.subr.bf16.mxu0 0
        %1920 = vmatpush2.bf16.msra.mxu0 0
        %1921 = vmatprep.subr.bf16.mxu0 0
        %1922 = vmatpush2.bf16.msra.mxu0 0
        %1923 = vmatprep.subr.bf16.mxu0 0
        %1924 = vmatpush2.bf16.msra.mxu0 0
        %1925 = vmatprep.subr.bf16.mxu0 0
        %1926 = vmatpush2.bf16.msra.mxu0 0
        %1927 = vmatprep.subr.bf16.mxu0 0
        %1928 = vmatpush2.bf16.msra.mxu0 0
        %1929 = vmatprep.subr.bf16.mxu0 0
        %1930 = vmatpush2.bf16.msra.mxu0 0
        %1931 = vmatprep.subr.bf16.mxu0 0
        %1932 = vmatpush2.bf16.msra.mxu0 0
        %1933 = vmatprep.subr.bf16.mxu0 0
        %1934 = vmatpush2.bf16.msra.mxu0 0
        %1935 = vmatprep.mubr.bf16.mxu0 0
        %1936 = vmatmul.mubr.bf16.gmra.mxu0 %v1895
        %v1937 = vpop.f32.mrf.mxu0
        %v1938 = vadd.f32 0.0, %v1937
        %v1939 = vpop.f32.mrf.mxu0
        %v1940 = vadd.f32 0.0, %v1939
        %v1941 = vpop.f32.mrf.mxu0
        %v1942 = vpop.f32.mrf.mxu0
        %1943 = vdwg.mxu0
        %v1944 = vadd.f32 %v1938, %v1940
        %1945 = vadd.xlane.f32.xlu0 %v1944
        %v1946 = vpop.xlane.xlu0 %1945
        %v1947 = vmul.f32 %v1946, 0.00390625
        %v1948 = vmul.f32 %v1938, %v1938
        %v1949 = vmul.f32 %v1940, %v1940
        %v1950 = vadd.f32 %v1948, %v1949
        %1951 = vadd.xlane.f32.xlu0 %v1950
        %v1952 = vpop.xlane.xlu0 %1951
        %v1953 = vmul.f32 %v1952, 0.00390625
        %v1954 = vmul.f32 %v1947, %v1947
        %v1955 = vsub.f32 %v1953, %v1954
        %v1956 = vmax.f32 %v1955, 0.0
        %v1957 = vsub.f32 %v1938, %v1947
        %v1958 = vsub.f32 %v1940, %v1947
        %v1959 = vadd.f32 %v1956, 1e-05
        %v1960 = vrsqrt.pop %v1959
        %v1961 = vmul.f32 %v1957, %v1960
        %v1962 = vmul.f32 %v1958, %v1960
        %vm1963 = vcmp.ge.f32.partialorder %v1961, 0.0
        %vm1964 = vcmp.ge.f32.partialorder %v1962, 0.0
        %v1965 = vmul.f32 %v1961, 0.01
        %v1966 = vmul.f32 %v1962, 0.01
        %v1967 = vsel %vm1963, %v1961, %v1965
        %v1968 = vsel %vm1964, %v1962, %v1966
        %v1969 = vld [vmem:[%s452] sm:$0xf]
        %1970 = vrot.lane.b32.xlu0 %v1967, 1
        %v1971 = vpop.permute.xlu0 %1970
        %1972 = vrot.lane.b32.xlu0 %v1968, 1
        %v1973 = vpop.permute.xlu0 %1972
        %v1974 = vsel %vm250, %v1971, %v1973
        %v1975 = vsel %vm250, %v1973, %v1971
        %1976 = vrot.lane.b32.xlu0 %v1967, 127
        %v1977 = vpop.permute.xlu0 %1976
        %1978 = vrot.lane.b32.xlu0 %v1968, 127
        %v1979 = vpop.permute.xlu0 %1978
        %v1980 = vsel %vm257, %v1977, %v1979
        %v1981 = vsel %vm257, %v1979, %v1977
        %v1982 = vsel %vm262, %v1980, %v1975
        %v1983 = vsel %vm263, %v1981, %v1974
        %v1984 = vsel %vm268, %v1975, %v1980
        %v1985 = vsel %vm269, %v1974, %v1981
        %1986 = vrot.lane.b32.xlu0 %v1982, 16
        %v1987 = vpop.permute.xlu0 %1986
        %1988 = vrot.lane.b32.xlu0 %v1983, 16
        %v1989 = vpop.permute.xlu0 %1988
        %v1990 = vsel %vm239, %v1987, %v1989
        %v1991 = vsel %vm239, %v1989, %v1987
        %1992 = vrot.lane.b32.xlu0 %v1982, 112
        %v1993 = vpop.permute.xlu0 %1992
        %1994 = vrot.lane.b32.xlu0 %v1983, 112
        %v1995 = vpop.permute.xlu0 %1994
        %v1996 = vsel %vm282, %v1993, %v1995
        %v1997 = vsel %vm282, %v1995, %v1993
        %v1998 = vsel %vm287, %v1996, %v1991
        %v1999 = vsel %vm288, %v1997, %v1990
        %v2000 = vsel %vm293, %v1991, %v1996
        %v2001 = vsel %vm294, %v1990, %v1997
        %2002 = vst [vmem:[#allocation2] sm:$0xff] %v1998
        %2003 = vst [vmem:[#allocation2 + $0x8] sm:$0xff] %v1999
        %2004 = vst [vmem:[#allocation2 + $0x30] sm:$0xff] %v1982
        %2005 = vst [vmem:[#allocation2 + $0x38] sm:$0xff] %v1983
        %2006 = vst [vmem:[#allocation2 + $0x60] sm:$0xff] %v2000
        %2007 = vst [vmem:[#allocation2 + $0x68] sm:$0xff] %v2001
        %2008 = vrot.lane.b32.xlu0 %v1967, 16
        %v2009 = vpop.permute.xlu0 %2008
        %2010 = vrot.lane.b32.xlu0 %v1968, 16
        %v2011 = vpop.permute.xlu0 %2010
        %v2012 = vsel %vm239, %v2009, %v2011
        %v2013 = vsel %vm239, %v2011, %v2009
        %2014 = vrot.lane.b32.xlu0 %v1967, 112
        %v2015 = vpop.permute.xlu0 %2014
        %2016 = vrot.lane.b32.xlu0 %v1968, 112
        %v2017 = vpop.permute.xlu0 %2016
        %v2018 = vsel %vm282, %v2015, %v2017
        %v2019 = vsel %vm282, %v2017, %v2015
        %v2020 = vsel %vm287, %v2018, %v2013
        %v2021 = vsel %vm288, %v2019, %v2012
        %v2022 = vsel %vm293, %v2013, %v2018
        %v2023 = vsel %vm294, %v2012, %v2019
        %2024 = vst [vmem:[#allocation2 + $0x10] sm:$0xff] %v2020
        %2025 = vst [vmem:[#allocation2 + $0x18] sm:$0xff] %v2021
        %2026 = vst [vmem:[#allocation2 + $0x40] sm:$0xff] %v1967
        %2027 = vst [vmem:[#allocation2 + $0x48] sm:$0xff] %v1968
        %2028 = vst [vmem:[#allocation2 + $0x70] sm:$0xff] %v2022
        %2029 = vst [vmem:[#allocation2 + $0x78] sm:$0xff] %v2023
        %2030 = vrot.lane.b32.xlu0 %v1984, 16
        %v2031 = vpop.permute.xlu0 %2030
        %2032 = vrot.lane.b32.xlu0 %v1985, 16
        %v2033 = vpop.permute.xlu0 %2032
        %v2034 = vsel %vm239, %v2031, %v2033
        %v2035 = vsel %vm239, %v2033, %v2031
        %2036 = vrot.lane.b32.xlu0 %v1984, 112
        %v2037 = vpop.permute.xlu0 %2036
        %2038 = vrot.lane.b32.xlu0 %v1985, 112
        %v2039 = vpop.permute.xlu0 %2038
        %v2040 = vsel %vm282, %v2037, %v2039
        %v2041 = vsel %vm282, %v2039, %v2037
        %v2042 = vsel %vm287, %v2040, %v2035
        %v2043 = vsel %vm288, %v2041, %v2034
        %v2044 = vsel %vm293, %v2035, %v2040
        %v2045 = vsel %vm294, %v2034, %v2041
        %2046 = vst [vmem:[#allocation2 + $0x20] sm:$0xff] %v2042
        %2047 = vst [vmem:[#allocation2 + $0x28] sm:$0xff] %v2043
        %2048 = vst [vmem:[#allocation2 + $0x50] sm:$0xff] %v1984
        %2049 = vst [vmem:[#allocation2 + $0x58] sm:$0xff] %v1985
        %2050 = vst [vmem:[#allocation2 + $0x80] sm:$0xff] %v2044
        %2051 = vst [vmem:[#allocation2 + $0x88] sm:$0xff] %v2045
        %v2052 = vld [vmem:[#allocation2] sm:$0xff]
        %v2053 = vld [vmem:[#allocation2 + $0x8] sm:$0xff]
        %v2054 = vld [vmem:[#allocation2 + $0x10] sm:$0xff]
        %v2055 = vld [vmem:[#allocation2 + $0x18] sm:$0xff]
        %v2056 = vld [vmem:[#allocation2 + $0x20] sm:$0xff]
        %v2057 = vld [vmem:[#allocation2 + $0x28] sm:$0xff]
        %v2058 = vld [vmem:[#allocation2 + $0x30] sm:$0xff]
        %v2059 = vld [vmem:[#allocation2 + $0x38] sm:$0xff]
        %v2060 = vld [vmem:[#allocation2 + $0x40] sm:$0xff]
        %v2061 = vld [vmem:[#allocation2 + $0x48] sm:$0xff]
        %v2062 = vld [vmem:[#allocation2 + $0x50] sm:$0xff]
        %v2063 = vld [vmem:[#allocation2 + $0x58] sm:$0xff]
        %v2064 = vld [vmem:[#allocation2 + $0x60] sm:$0xff]
        %v2065 = vld [vmem:[#allocation2 + $0x68] sm:$0xff]
        %v2066 = vld [vmem:[#allocation2 + $0x70] sm:$0xff]
        %v2067 = vld [vmem:[#allocation2 + $0x78] sm:$0xff]
        %v2068 = vld [vmem:[#allocation2 + $0x80] sm:$0xff]
        %v2069 = vld [vmem:[#allocation2 + $0x88] sm:$0xff]
        %v2070 = vpack.c.bf16 %v2054, %v2052
        %v2071 = vpack.c.bf16 %v2055, %v2053
        %v2072 = vpack.c.bf16 %v2058, %v2056
        %v2073 = vpack.c.bf16 %v2059, %v2057
        %v2074 = vpack.c.bf16 %v2062, %v2060
        %v2075 = vpack.c.bf16 %v2063, %v2061
        %v2076 = vpack.c.bf16 %v2066, %v2064
        %v2077 = vpack.c.bf16 %v2067, %v2065
        %v2078 = vpack.c.bf16 %v2068, %v2068
        %v2079 = vpack.c.bf16 %v2069, %v2069
        %v2081 = vsel %vm375, %v1969, 0
        %v2084 = vsel %vm379, %v2078, 0
        %v2087 = vsel %vm379, %v2079, 0
        %2089 = vmatprep.subr.bf16.mxu0 0
        %2090 = vmatpush1.bf16.msra.mxu0 0
        %2091 = vmatprep.subr.bf16.mxu0 0
        %2092 = vmatpush1.bf16.msra.mxu0 0
        %2093 = vmatprep.subr.bf16.mxu0 0
        %2094 = vmatpush1.bf16.msra.mxu0 0
        %2095 = vmatprep.subr.bf16.mxu0 %v2087
        %2096 = vmatpush1.bf16.msra.mxu0 %v2084
        %2097 = vmatprep.subr.bf16.mxu0 %v2077
        %2098 = vmatpush1.bf16.msra.mxu0 %v2076
        %2099 = vmatprep.subr.bf16.mxu0 %v2075
        %2100 = vmatpush1.bf16.msra.mxu0 %v2074
        %2101 = vmatprep.subr.bf16.mxu0 %v2073
        %2102 = vmatpush1.bf16.msra.mxu0 %v2072
        %2103 = vmatprep.subr.bf16.mxu0 %v2071
        %2104 = vmatpush1.bf16.msra.mxu0 %v2070
        %2105 = vmatprep.subr.bf16.mxu0 0
        %2106 = vmatpush2.bf16.msra.mxu0 0
        %2107 = vmatprep.subr.bf16.mxu0 0
        %2108 = vmatpush2.bf16.msra.mxu0 0
        %2109 = vmatprep.subr.bf16.mxu0 0
        %2110 = vmatpush2.bf16.msra.mxu0 0
        %2111 = vmatprep.subr.bf16.mxu0 0
        %2112 = vmatpush2.bf16.msra.mxu0 0
        %2113 = vmatprep.subr.bf16.mxu0 0
        %2114 = vmatpush2.bf16.msra.mxu0 0
        %2115 = vmatprep.subr.bf16.mxu0 0
        %2116 = vmatpush2.bf16.msra.mxu0 0
        %2117 = vmatprep.subr.bf16.mxu0 0
        %2118 = vmatpush2.bf16.msra.mxu0 0
        %2119 = vmatprep.subr.bf16.mxu0 0
        %2120 = vmatpush2.bf16.msra.mxu0 0
        %2121 = vmatprep.mubr.bf16.mxu0 0
        %2122 = vmatmul.mubr.bf16.gmra.mxu0 %v2081
        %v2123 = vpop.f32.mrf.mxu0
        %v2124 = vadd.f32 0.0, %v2123
        %v2125 = vpop.f32.mrf.mxu0
        %v2126 = vadd.f32 0.0, %v2125
        %v2127 = vpop.f32.mrf.mxu0
        %v2128 = vpop.f32.mrf.mxu0
        %2129 = vdwg.mxu0
        %v2130 = vadd.f32 %v2124, %v2126
        %2131 = vadd.xlane.f32.xlu0 %v2130
        %v2132 = vpop.xlane.xlu0 %2131
        %v2133 = vmul.f32 %v2132, 0.00390625
        %v2134 = vmul.f32 %v2124, %v2124
        %v2135 = vmul.f32 %v2126, %v2126
        %v2136 = vadd.f32 %v2134, %v2135
        %2137 = vadd.xlane.f32.xlu0 %v2136
        %v2138 = vpop.xlane.xlu0 %2137
        %v2139 = vmul.f32 %v2138, 0.00390625
        %v2140 = vmul.f32 %v2133, %v2133
        %v2141 = vsub.f32 %v2139, %v2140
        %v2142 = vmax.f32 %v2141, 0.0
        %v2143 = vsub.f32 %v2124, %v2133
        %v2144 = vsub.f32 %v2126, %v2133
        %v2145 = vadd.f32 %v2142, 1e-05
        %v2146 = vrsqrt.pop %v2145
        %v2147 = vmul.f32 %v2143, %v2146
        %v2148 = vmul.f32 %v2144, %v2146
        %v2149 = vadd.f32 %v1781, %v2147
        %v2150 = vadd.f32 %v1782, %v2148
        %v2151 = vld [vmem:[%s635] sm:$0xf]
        %2152 = vrot.lane.b32.xlu0 %v2149, 1
        %v2153 = vpop.permute.xlu0 %2152
        %2154 = vrot.lane.b32.xlu0 %v2150, 1
        %v2155 = vpop.permute.xlu0 %2154
        %v2156 = vsel %vm250, %v2153, %v2155
        %v2157 = vsel %vm250, %v2155, %v2153
        %2158 = vrot.lane.b32.xlu0 %v2149, 127
        %v2159 = vpop.permute.xlu0 %2158
        %2160 = vrot.lane.b32.xlu0 %v2150, 127
        %v2161 = vpop.permute.xlu0 %2160
        %v2162 = vsel %vm257, %v2159, %v2161
        %v2163 = vsel %vm257, %v2161, %v2159
        %v2164 = vsel %vm262, %v2162, %v2157
        %v2165 = vsel %vm263, %v2163, %v2156
        %v2166 = vsel %vm268, %v2157, %v2162
        %v2167 = vsel %vm269, %v2156, %v2163
        %2168 = vrot.lane.b32.xlu0 %v2164, 16
        %v2169 = vpop.permute.xlu0 %2168
        %2170 = vrot.lane.b32.xlu0 %v2165, 16
        %v2171 = vpop.permute.xlu0 %2170
        %v2172 = vsel %vm239, %v2169, %v2171
        %v2173 = vsel %vm239, %v2171, %v2169
        %2174 = vrot.lane.b32.xlu0 %v2164, 112
        %v2175 = vpop.permute.xlu0 %2174
        %2176 = vrot.lane.b32.xlu0 %v2165, 112
        %v2177 = vpop.permute.xlu0 %2176
        %v2178 = vsel %vm282, %v2175, %v2177
        %v2179 = vsel %vm282, %v2177, %v2175
        %v2180 = vsel %vm287, %v2178, %v2173
        %v2181 = vsel %vm288, %v2179, %v2172
        %v2182 = vsel %vm293, %v2173, %v2178
        %v2183 = vsel %vm294, %v2172, %v2179
        %2184 = vst [vmem:[#allocation2] sm:$0xff] %v2180
        %2185 = vst [vmem:[#allocation2 + $0x8] sm:$0xff] %v2181
        %2186 = vst [vmem:[#allocation2 + $0x30] sm:$0xff] %v2164
        %2187 = vst [vmem:[#allocation2 + $0x38] sm:$0xff] %v2165
        %2188 = vst [vmem:[#allocation2 + $0x60] sm:$0xff] %v2182
        %2189 = vst [vmem:[#allocation2 + $0x68] sm:$0xff] %v2183
        %2190 = vrot.lane.b32.xlu0 %v2149, 16
        %v2191 = vpop.permute.xlu0 %2190
        %2192 = vrot.lane.b32.xlu0 %v2150, 16
        %v2193 = vpop.permute.xlu0 %2192
        %v2194 = vsel %vm239, %v2191, %v2193
        %v2195 = vsel %vm239, %v2193, %v2191
        %2196 = vrot.lane.b32.xlu0 %v2149, 112
        %v2197 = vpop.permute.xlu0 %2196
        %2198 = vrot.lane.b32.xlu0 %v2150, 112
        %v2199 = vpop.permute.xlu0 %2198
        %v2200 = vsel %vm282, %v2197, %v2199
        %v2201 = vsel %vm282, %v2199, %v2197
        %v2202 = vsel %vm287, %v2200, %v2195
        %v2203 = vsel %vm288, %v2201, %v2194
        %v2204 = vsel %vm293, %v2195, %v2200
        %v2205 = vsel %vm294, %v2194, %v2201
        %2206 = vst [vmem:[#allocation2 + $0x10] sm:$0xff] %v2202
        %2207 = vst [vmem:[#allocation2 + $0x18] sm:$0xff] %v2203
        %2208 = vst [vmem:[#allocation2 + $0x40] sm:$0xff] %v2149
        %2209 = vst [vmem:[#allocation2 + $0x48] sm:$0xff] %v2150
        %2210 = vst [vmem:[#allocation2 + $0x70] sm:$0xff] %v2204
        %2211 = vst [vmem:[#allocation2 + $0x78] sm:$0xff] %v2205
        %2212 = vrot.lane.b32.xlu0 %v2166, 16
        %v2213 = vpop.permute.xlu0 %2212
        %2214 = vrot.lane.b32.xlu0 %v2167, 16
        %v2215 = vpop.permute.xlu0 %2214
        %v2216 = vsel %vm239, %v2213, %v2215
        %v2217 = vsel %vm239, %v2215, %v2213
        %2218 = vrot.lane.b32.xlu0 %v2166, 112
        %v2219 = vpop.permute.xlu0 %2218
        %2220 = vrot.lane.b32.xlu0 %v2167, 112
        %v2221 = vpop.permute.xlu0 %2220
        %v2222 = vsel %vm282, %v2219, %v2221
        %v2223 = vsel %vm282, %v2221, %v2219
        %v2224 = vsel %vm287, %v2222, %v2217
        %v2225 = vsel %vm288, %v2223, %v2216
        %v2226 = vsel %vm293, %v2217, %v2222
        %v2227 = vsel %vm294, %v2216, %v2223
        %2228 = vst [vmem:[#allocation2 + $0x20] sm:$0xff] %v2224
        %2229 = vst [vmem:[#allocation2 + $0x28] sm:$0xff] %v2225
        %2230 = vst [vmem:[#allocation2 + $0x50] sm:$0xff] %v2166
        %2231 = vst [vmem:[#allocation2 + $0x58] sm:$0xff] %v2167
        %2232 = vst [vmem:[#allocation2 + $0x80] sm:$0xff] %v2226
        %2233 = vst [vmem:[#allocation2 + $0x88] sm:$0xff] %v2227
        %v2234 = vld [vmem:[#allocation2] sm:$0xff]
        %v2235 = vld [vmem:[#allocation2 + $0x8] sm:$0xff]
        %v2236 = vld [vmem:[#allocation2 + $0x10] sm:$0xff]
        %v2237 = vld [vmem:[#allocation2 + $0x18] sm:$0xff]
        %v2238 = vld [vmem:[#allocation2 + $0x20] sm:$0xff]
        %v2239 = vld [vmem:[#allocation2 + $0x28] sm:$0xff]
        %v2240 = vld [vmem:[#allocation2 + $0x30] sm:$0xff]
        %v2241 = vld [vmem:[#allocation2 + $0x38] sm:$0xff]
        %v2242 = vld [vmem:[#allocation2 + $0x40] sm:$0xff]
        %v2243 = vld [vmem:[#allocation2 + $0x48] sm:$0xff]
        %v2244 = vld [vmem:[#allocation2 + $0x50] sm:$0xff]
        %v2245 = vld [vmem:[#allocation2 + $0x58] sm:$0xff]
        %v2246 = vld [vmem:[#allocation2 + $0x60] sm:$0xff]
        %v2247 = vld [vmem:[#allocation2 + $0x68] sm:$0xff]
        %v2248 = vld [vmem:[#allocation2 + $0x70] sm:$0xff]
        %v2249 = vld [vmem:[#allocation2 + $0x78] sm:$0xff]
        %v2250 = vld [vmem:[#allocation2 + $0x80] sm:$0xff]
        %v2251 = vld [vmem:[#allocation2 + $0x88] sm:$0xff]
        %v2252 = vpack.c.bf16 %v2236, %v2234
        %v2253 = vpack.c.bf16 %v2237, %v2235
        %v2254 = vpack.c.bf16 %v2240, %v2238
        %v2255 = vpack.c.bf16 %v2241, %v2239
        %v2256 = vpack.c.bf16 %v2244, %v2242
        %v2257 = vpack.c.bf16 %v2245, %v2243
        %v2258 = vpack.c.bf16 %v2248, %v2246
        %v2259 = vpack.c.bf16 %v2249, %v2247
        %v2260 = vpack.c.bf16 %v2250, %v2250
        %v2261 = vpack.c.bf16 %v2251, %v2251
        %v2263 = vsel %vm375, %v2151, 0
        %v2266 = vsel %vm379, %v2260, 0
        %v2269 = vsel %vm379, %v2261, 0
        %2271 = vmatprep.subr.bf16.mxu0 0
        %2272 = vmatpush1.bf16.msra.mxu0 0
        %2273 = vmatprep.subr.bf16.mxu0 0
        %2274 = vmatpush1.bf16.msra.mxu0 0
        %2275 = vmatprep.subr.bf16.mxu0 0
        %2276 = vmatpush1.bf16.msra.mxu0 0
        %2277 = vmatprep.subr.bf16.mxu0 %v2269
        %2278 = vmatpush1.bf16.msra.mxu0 %v2266
        %2279 = vmatprep.subr.bf16.mxu0 %v2259
        %2280 = vmatpush1.bf16.msra.mxu0 %v2258
        %2281 = vmatprep.subr.bf16.mxu0 %v2257
        %2282 = vmatpush1.bf16.msra.mxu0 %v2256
        %2283 = vmatprep.subr.bf16.mxu0 %v2255
        %2284 = vmatpush1.bf16.msra.mxu0 %v2254
        %2285 = vmatprep.subr.bf16.mxu0 %v2253
        %2286 = vmatpush1.bf16.msra.mxu0 %v2252
        %2287 = vmatprep.subr.bf16.mxu0 0
        %2288 = vmatpush2.bf16.msra.mxu0 0
        %2289 = vmatprep.subr.bf16.mxu0 0
        %2290 = vmatpush2.bf16.msra.mxu0 0
        %2291 = vmatprep.subr.bf16.mxu0 0
        %2292 = vmatpush2.bf16.msra.mxu0 0
        %2293 = vmatprep.subr.bf16.mxu0 0
        %2294 = vmatpush2.bf16.msra.mxu0 0
        %2295 = vmatprep.subr.bf16.mxu0 0
        %2296 = vmatpush2.bf16.msra.mxu0 0
        %2297 = vmatprep.subr.bf16.mxu0 0
        %2298 = vmatpush2.bf16.msra.mxu0 0
        %2299 = vmatprep.subr.bf16.mxu0 0
        %2300 = vmatpush2.bf16.msra.mxu0 0
        %2301 = vmatprep.subr.bf16.mxu0 0
        %2302 = vmatpush2.bf16.msra.mxu0 0
        %2303 = vmatprep.mubr.bf16.mxu0 0
        %2304 = vmatmul.mubr.bf16.gmra.mxu0 %v2263
        %v2305 = vpop.f32.mrf.mxu0
        %v2306 = vadd.f32 0.0, %v2305
        %v2307 = vpop.f32.mrf.mxu0
        %v2308 = vadd.f32 0.0, %v2307
        %v2309 = vpop.f32.mrf.mxu0
        %v2310 = vpop.f32.mrf.mxu0
        %2311 = vdwg.mxu0
        %v2312 = vadd.f32 %v2306, %v2308
        %2313 = vadd.xlane.f32.xlu0 %v2312
        %v2314 = vpop.xlane.xlu0 %2313
        %v2315 = vmul.f32 %v2314, 0.00390625
        %v2316 = vmul.f32 %v2306, %v2306
        %v2317 = vmul.f32 %v2308, %v2308
        %v2318 = vadd.f32 %v2316, %v2317
        %2319 = vadd.xlane.f32.xlu0 %v2318
        %v2320 = vpop.xlane.xlu0 %2319
        %v2321 = vmul.f32 %v2320, 0.00390625
        %v2322 = vmul.f32 %v2315, %v2315
        %v2323 = vsub.f32 %v2321, %v2322
        %v2324 = vmax.f32 %v2323, 0.0
        %v2325 = vsub.f32 %v2306, %v2315
        %v2326 = vsub.f32 %v2308, %v2315
        %v2327 = vadd.f32 %v2324, 1e-05
        %v2328 = vrsqrt.pop %v2327
        %v2329 = vmul.f32 %v2325, %v2328
        %v2330 = vmul.f32 %v2326, %v2328
        %vm2331 = vcmp.ge.f32.partialorder %v2329, 0.0
        %vm2332 = vcmp.ge.f32.partialorder %v2330, 0.0
        %v2333 = vmul.f32 %v2329, 0.01
        %v2334 = vmul.f32 %v2330, 0.01
        %v2335 = vsel %vm2331, %v2329, %v2333
        %v2336 = vsel %vm2332, %v2330, %v2334
        %v2337 = vld [vmem:[%s822] sm:$0xf]
        %2338 = vrot.lane.b32.xlu0 %v2335, 1
        %v2339 = vpop.permute.xlu0 %2338
        %2340 = vrot.lane.b32.xlu0 %v2336, 1
        %v2341 = vpop.permute.xlu0 %2340
        %v2342 = vsel %vm250, %v2339, %v2341
        %v2343 = vsel %vm250, %v2341, %v2339
        %2344 = vrot.lane.b32.xlu0 %v2335, 127
        %v2345 = vpop.permute.xlu0 %2344
        %2346 = vrot.lane.b32.xlu0 %v2336, 127
        %v2347 = vpop.permute.xlu0 %2346
        %v2348 = vsel %vm257, %v2345, %v2347
        %v2349 = vsel %vm257, %v2347, %v2345
        %v2350 = vsel %vm262, %v2348, %v2343
        %v2351 = vsel %vm263, %v2349, %v2342
        %v2352 = vsel %vm268, %v2343, %v2348
        %v2353 = vsel %vm269, %v2342, %v2349
        %2354 = vrot.lane.b32.xlu0 %v2350, 16
        %v2355 = vpop.permute.xlu0 %2354
        %2356 = vrot.lane.b32.xlu0 %v2351, 16
        %v2357 = vpop.permute.xlu0 %2356
        %v2358 = vsel %vm239, %v2355, %v2357
        %v2359 = vsel %vm239, %v2357, %v2355
        %2360 = vrot.lane.b32.xlu0 %v2350, 112
        %v2361 = vpop.permute.xlu0 %2360
        %2362 = vrot.lane.b32.xlu0 %v2351, 112
        %v2363 = vpop.permute.xlu0 %2362
        %v2364 = vsel %vm282, %v2361, %v2363
        %v2365 = vsel %vm282, %v2363, %v2361
        %v2366 = vsel %vm287, %v2364, %v2359
        %v2367 = vsel %vm288, %v2365, %v2358
        %v2368 = vsel %vm293, %v2359, %v2364
        %v2369 = vsel %vm294, %v2358, %v2365
        %2370 = vst [vmem:[#allocation2] sm:$0xff] %v2366
        %2371 = vst [vmem:[#allocation2 + $0x8] sm:$0xff] %v2367
        %2372 = vst [vmem:[#allocation2 + $0x30] sm:$0xff] %v2350
        %2373 = vst [vmem:[#allocation2 + $0x38] sm:$0xff] %v2351
        %2374 = vst [vmem:[#allocation2 + $0x60] sm:$0xff] %v2368
        %2375 = vst [vmem:[#allocation2 + $0x68] sm:$0xff] %v2369
        %2376 = vrot.lane.b32.xlu0 %v2335, 16
        %v2377 = vpop.permute.xlu0 %2376
        %2378 = vrot.lane.b32.xlu0 %v2336, 16
        %v2379 = vpop.permute.xlu0 %2378
        %v2380 = vsel %vm239, %v2377, %v2379
        %v2381 = vsel %vm239, %v2379, %v2377
        %2382 = vrot.lane.b32.xlu0 %v2335, 112
        %v2383 = vpop.permute.xlu0 %2382
        %2384 = vrot.lane.b32.xlu0 %v2336, 112
        %v2385 = vpop.permute.xlu0 %2384
        %v2386 = vsel %vm282, %v2383, %v2385
        %v2387 = vsel %vm282, %v2385, %v2383
        %v2388 = vsel %vm287, %v2386, %v2381
        %v2389 = vsel %vm288, %v2387, %v2380
        %v2390 = vsel %vm293, %v2381, %v2386
        %v2391 = vsel %vm294, %v2380, %v2387
        %2392 = vst [vmem:[#allocation2 + $0x10] sm:$0xff] %v2388
        %2393 = vst [vmem:[#allocation2 + $0x18] sm:$0xff] %v2389
        %2394 = vst [vmem:[#allocation2 + $0x40] sm:$0xff] %v2335
        %2395 = vst [vmem:[#allocation2 + $0x48] sm:$0xff] %v2336
        %2396 = vst [vmem:[#allocation2 + $0x70] sm:$0xff] %v2390
        %2397 = vst [vmem:[#allocation2 + $0x78] sm:$0xff] %v2391
        %2398 = vrot.lane.b32.xlu0 %v2352, 16
        %v2399 = vpop.permute.xlu0 %2398
        %2400 = vrot.lane.b32.xlu0 %v2353, 16
        %v2401 = vpop.permute.xlu0 %2400
        %v2402 = vsel %vm239, %v2399, %v2401
        %v2403 = vsel %vm239, %v2401, %v2399
        %2404 = vrot.lane.b32.xlu0 %v2352, 112
        %v2405 = vpop.permute.xlu0 %2404
        %2406 = vrot.lane.b32.xlu0 %v2353, 112
        %v2407 = vpop.permute.xlu0 %2406
        %v2408 = vsel %vm282, %v2405, %v2407
        %v2409 = vsel %vm282, %v2407, %v2405
        %v2410 = vsel %vm287, %v2408, %v2403
        %v2411 = vsel %vm288, %v2409, %v2402
        %v2412 = vsel %vm293, %v2403, %v2408
        %v2413 = vsel %vm294, %v2402, %v2409
        %2414 = vst [vmem:[#allocation2 + $0x20] sm:$0xff] %v2410
        %2415 = vst [vmem:[#allocation2 + $0x28] sm:$0xff] %v2411
        %2416 = vst [vmem:[#allocation2 + $0x50] sm:$0xff] %v2352
        %2417 = vst [vmem:[#allocation2 + $0x58] sm:$0xff] %v2353
        %2418 = vst [vmem:[#allocation2 + $0x80] sm:$0xff] %v2412
        %2419 = vst [vmem:[#allocation2 + $0x88] sm:$0xff] %v2413
        %v2420 = vld [vmem:[#allocation2] sm:$0xff]
        %v2421 = vld [vmem:[#allocation2 + $0x8] sm:$0xff]
        %v2422 = vld [vmem:[#allocation2 + $0x10] sm:$0xff]
        %v2423 = vld [vmem:[#allocation2 + $0x18] sm:$0xff]
        %v2424 = vld [vmem:[#allocation2 + $0x20] sm:$0xff]
        %v2425 = vld [vmem:[#allocation2 + $0x28] sm:$0xff]
        %v2426 = vld [vmem:[#allocation2 + $0x30] sm:$0xff]
        %v2427 = vld [vmem:[#allocation2 + $0x38] sm:$0xff]
        %v2428 = vld [vmem:[#allocation2 + $0x40] sm:$0xff]
        %v2429 = vld [vmem:[#allocation2 + $0x48] sm:$0xff]
        %v2430 = vld [vmem:[#allocation2 + $0x50] sm:$0xff]
        %v2431 = vld [vmem:[#allocation2 + $0x58] sm:$0xff]
        %v2432 = vld [vmem:[#allocation2 + $0x60] sm:$0xff]
        %v2433 = vld [vmem:[#allocation2 + $0x68] sm:$0xff]
        %v2434 = vld [vmem:[#allocation2 + $0x70] sm:$0xff]
        %v2435 = vld [vmem:[#allocation2 + $0x78] sm:$0xff]
        %v2436 = vld [vmem:[#allocation2 + $0x80] sm:$0xff]
        %v2437 = vld [vmem:[#allocation2 + $0x88] sm:$0xff]
        %v2438 = vpack.c.bf16 %v2422, %v2420
        %v2439 = vpack.c.bf16 %v2423, %v2421
        %v2440 = vpack.c.bf16 %v2426, %v2424
        %v2441 = vpack.c.bf16 %v2427, %v2425
        %v2442 = vpack.c.bf16 %v2430, %v2428
        %v2443 = vpack.c.bf16 %v2431, %v2429
        %v2444 = vpack.c.bf16 %v2434, %v2432
        %v2445 = vpack.c.bf16 %v2435, %v2433
        %v2446 = vpack.c.bf16 %v2436, %v2436
        %v2447 = vpack.c.bf16 %v2437, %v2437
        %v2449 = vsel %vm375, %v2337, 0
        %v2452 = vsel %vm379, %v2446, 0
        %v2455 = vsel %vm379, %v2447, 0
        %2457 = vmatprep.subr.bf16.mxu0 0
        %2458 = vmatpush1.bf16.msra.mxu0 0
        %2459 = vmatprep.subr.bf16.mxu0 0
        %2460 = vmatpush1.bf16.msra.mxu0 0
        %2461 = vmatprep.subr.bf16.mxu0 0
        %2462 = vmatpush1.bf16.msra.mxu0 0
        %2463 = vmatprep.subr.bf16.mxu0 %v2455
        %2464 = vmatpush1.bf16.msra.mxu0 %v2452
        %2465 = vmatprep.subr.bf16.mxu0 %v2445
        %2466 = vmatpush1.bf16.msra.mxu0 %v2444
        %2467 = vmatprep.subr.bf16.mxu0 %v2443
        %2468 = vmatpush1.bf16.msra.mxu0 %v2442
        %2469 = vmatprep.subr.bf16.mxu0 %v2441
        %2470 = vmatpush1.bf16.msra.mxu0 %v2440
        %2471 = vmatprep.subr.bf16.mxu0 %v2439
        %2472 = vmatpush1.bf16.msra.mxu0 %v2438
        %2473 = vmatprep.subr.bf16.mxu0 0
        %2474 = vmatpush2.bf16.msra.mxu0 0
        %2475 = vmatprep.subr.bf16.mxu0 0
        %2476 = vmatpush2.bf16.msra.mxu0 0
        %2477 = vmatprep.subr.bf16.mxu0 0
        %2478 = vmatpush2.bf16.msra.mxu0 0
        %2479 = vmatprep.subr.bf16.mxu0 0
        %2480 = vmatpush2.bf16.msra.mxu0 0
        %2481 = vmatprep.subr.bf16.mxu0 0
        %2482 = vmatpush2.bf16.msra.mxu0 0
        %2483 = vmatprep.subr.bf16.mxu0 0
        %2484 = vmatpush2.bf16.msra.mxu0 0
        %2485 = vmatprep.subr.bf16.mxu0 0
        %2486 = vmatpush2.bf16.msra.mxu0 0
        %2487 = vmatprep.subr.bf16.mxu0 0
        %2488 = vmatpush2.bf16.msra.mxu0 0
        %2489 = vmatprep.mubr.bf16.mxu0 0
        %2490 = vmatmul.mubr.bf16.gmra.mxu0 %v2449
        %v2491 = vpop.f32.mrf.mxu0
        %v2492 = vadd.f32 0.0, %v2491
        %v2493 = vpop.f32.mrf.mxu0
        %v2494 = vadd.f32 0.0, %v2493
        %v2495 = vpop.f32.mrf.mxu0
        %v2496 = vpop.f32.mrf.mxu0
        %2497 = vdwg.mxu0
        %v2498 = vadd.f32 %v2492, %v2494
        %2499 = vadd.xlane.f32.xlu0 %v2498
        %v2500 = vpop.xlane.xlu0 %2499
        %v2501 = vmul.f32 %v2500, 0.00390625
        %v2502 = vmul.f32 %v2492, %v2492
        %v2503 = vmul.f32 %v2494, %v2494
        %v2504 = vadd.f32 %v2502, %v2503
        %2505 = vadd.xlane.f32.xlu0 %v2504
        %v2506 = vpop.xlane.xlu0 %2505
        %v2507 = vmul.f32 %v2506, 0.00390625
        %v2508 = vmul.f32 %v2501, %v2501
        %v2509 = vsub.f32 %v2507, %v2508
        %v2510 = vmax.f32 %v2509, 0.0
        %v2511 = vsub.f32 %v2492, %v2501
        %v2512 = vsub.f32 %v2494, %v2501
        %v2513 = vadd.f32 %v2510, 1e-05
        %v2514 = vrsqrt.pop %v2513
        %v2515 = vmul.f32 %v2511, %v2514
        %v2516 = vmul.f32 %v2512, %v2514
        %v2517 = vadd.f32 %v2149, %v2515
        %v2518 = vadd.f32 %v2150, %v2516
        %v2519 = vld [vmem:[%s1005] sm:$0xf]
        %2520 = vrot.lane.b32.xlu0 %v2517, 1
        %v2521 = vpop.permute.xlu0 %2520
        %2522 = vrot.lane.b32.xlu0 %v2518, 1
        %v2523 = vpop.permute.xlu0 %2522
        %v2524 = vsel %vm250, %v2521, %v2523
        %v2525 = vsel %vm250, %v2523, %v2521
        %2526 = vrot.lane.b32.xlu0 %v2517, 127
        %v2527 = vpop.permute.xlu0 %2526
        %2528 = vrot.lane.b32.xlu0 %v2518, 127
        %v2529 = vpop.permute.xlu0 %2528
        %v2530 = vsel %vm257, %v2527, %v2529
        %v2531 = vsel %vm257, %v2529, %v2527
        %v2532 = vsel %vm262, %v2530, %v2525
        %v2533 = vsel %vm263, %v2531, %v2524
        %v2534 = vsel %vm268, %v2525, %v2530
        %v2535 = vsel %vm269, %v2524, %v2531
        %2536 = vrot.lane.b32.xlu0 %v2532, 16
        %v2537 = vpop.permute.xlu0 %2536
        %2538 = vrot.lane.b32.xlu0 %v2533, 16
        %v2539 = vpop.permute.xlu0 %2538
        %v2540 = vsel %vm239, %v2537, %v2539
        %v2541 = vsel %vm239, %v2539, %v2537
        %2542 = vrot.lane.b32.xlu0 %v2532, 112
        %v2543 = vpop.permute.xlu0 %2542
        %2544 = vrot.lane.b32.xlu0 %v2533, 112
        %v2545 = vpop.permute.xlu0 %2544
        %v2546 = vsel %vm282, %v2543, %v2545
        %v2547 = vsel %vm282, %v2545, %v2543
        %v2548 = vsel %vm287, %v2546, %v2541
        %v2549 = vsel %vm288, %v2547, %v2540
        %v2550 = vsel %vm293, %v2541, %v2546
        %v2551 = vsel %vm294, %v2540, %v2547
        %2552 = vst [vmem:[#allocation2] sm:$0xff] %v2548
        %2553 = vst [vmem:[#allocation2 + $0x8] sm:$0xff] %v2549
        %2554 = vst [vmem:[#allocation2 + $0x30] sm:$0xff] %v2532
        %2555 = vst [vmem:[#allocation2 + $0x38] sm:$0xff] %v2533
        %2556 = vst [vmem:[#allocation2 + $0x60] sm:$0xff] %v2550
        %2557 = vst [vmem:[#allocation2 + $0x68] sm:$0xff] %v2551
        %2558 = vrot.lane.b32.xlu0 %v2517, 16
        %v2559 = vpop.permute.xlu0 %2558
        %2560 = vrot.lane.b32.xlu0 %v2518, 16
        %v2561 = vpop.permute.xlu0 %2560
        %v2562 = vsel %vm239, %v2559, %v2561
        %v2563 = vsel %vm239, %v2561, %v2559
        %2564 = vrot.lane.b32.xlu0 %v2517, 112
        %v2565 = vpop.permute.xlu0 %2564
        %2566 = vrot.lane.b32.xlu0 %v2518, 112
        %v2567 = vpop.permute.xlu0 %2566
        %v2568 = vsel %vm282, %v2565, %v2567
        %v2569 = vsel %vm282, %v2567, %v2565
        %v2570 = vsel %vm287, %v2568, %v2563
        %v2571 = vsel %vm288, %v2569, %v2562
        %v2572 = vsel %vm293, %v2563, %v2568
        %v2573 = vsel %vm294, %v2562, %v2569
        %2574 = vst [vmem:[#allocation2 + $0x10] sm:$0xff] %v2570
        %2575 = vst [vmem:[#allocation2 + $0x18] sm:$0xff] %v2571
        %2576 = vst [vmem:[#allocation2 + $0x40] sm:$0xff] %v2517
        %2577 = vst [vmem:[#allocation2 + $0x48] sm:$0xff] %v2518
        %2578 = vst [vmem:[#allocation2 + $0x70] sm:$0xff] %v2572
        %2579 = vst [vmem:[#allocation2 + $0x78] sm:$0xff] %v2573
        %2580 = vrot.lane.b32.xlu0 %v2534, 16
        %v2581 = vpop.permute.xlu0 %2580
        %2582 = vrot.lane.b32.xlu0 %v2535, 16
        %v2583 = vpop.permute.xlu0 %2582
        %v2584 = vsel %vm239, %v2581, %v2583
        %v2585 = vsel %vm239, %v2583, %v2581
        %2586 = vrot.lane.b32.xlu0 %v2534, 112
        %v2587 = vpop.permute.xlu0 %2586
        %2588 = vrot.lane.b32.xlu0 %v2535, 112
        %v2589 = vpop.permute.xlu0 %2588
        %v2590 = vsel %vm282, %v2587, %v2589
        %v2591 = vsel %vm282, %v2589, %v2587
        %v2592 = vsel %vm287, %v2590, %v2585
        %v2593 = vsel %vm288, %v2591, %v2584
        %v2594 = vsel %vm293, %v2585, %v2590
        %v2595 = vsel %vm294, %v2584, %v2591
        %2596 = vst [vmem:[#allocation2 + $0x20] sm:$0xff] %v2592
        %2597 = vst [vmem:[#allocation2 + $0x28] sm:$0xff] %v2593
        %2598 = vst [vmem:[#allocation2 + $0x50] sm:$0xff] %v2534
        %2599 = vst [vmem:[#allocation2 + $0x58] sm:$0xff] %v2535
        %2600 = vst [vmem:[#allocation2 + $0x80] sm:$0xff] %v2594
        %2601 = vst [vmem:[#allocation2 + $0x88] sm:$0xff] %v2595
        %v2602 = vld [vmem:[#allocation2] sm:$0xff]
        %v2603 = vld [vmem:[#allocation2 + $0x8] sm:$0xff]
        %v2604 = vld [vmem:[#allocation2 + $0x10] sm:$0xff]
        %v2605 = vld [vmem:[#allocation2 + $0x18] sm:$0xff]
        %v2606 = vld [vmem:[#allocation2 + $0x20] sm:$0xff]
        %v2607 = vld [vmem:[#allocation2 + $0x28] sm:$0xff]
        %v2608 = vld [vmem:[#allocation2 + $0x30] sm:$0xff]
        %v2609 = vld [vmem:[#allocation2 + $0x38] sm:$0xff]
        %v2610 = vld [vmem:[#allocation2 + $0x40] sm:$0xff]
        %v2611 = vld [vmem:[#allocation2 + $0x48] sm:$0xff]
        %v2612 = vld [vmem:[#allocation2 + $0x50] sm:$0xff]
        %v2613 = vld [vmem:[#allocation2 + $0x58] sm:$0xff]
        %v2614 = vld [vmem:[#allocation2 + $0x60] sm:$0xff]
        %v2615 = vld [vmem:[#allocation2 + $0x68] sm:$0xff]
        %v2616 = vld [vmem:[#allocation2 + $0x70] sm:$0xff]
        %v2617 = vld [vmem:[#allocation2 + $0x78] sm:$0xff]
        %v2618 = vld [vmem:[#allocation2 + $0x80] sm:$0xff]
        %v2619 = vld [vmem:[#allocation2 + $0x88] sm:$0xff]
        %v2620 = vpack.c.bf16 %v2604, %v2602
        %v2621 = vpack.c.bf16 %v2605, %v2603
        %v2622 = vpack.c.bf16 %v2608, %v2606
        %v2623 = vpack.c.bf16 %v2609, %v2607
        %v2624 = vpack.c.bf16 %v2612, %v2610
        %v2625 = vpack.c.bf16 %v2613, %v2611
        %v2626 = vpack.c.bf16 %v2616, %v2614
        %v2627 = vpack.c.bf16 %v2617, %v2615
        %v2628 = vpack.c.bf16 %v2618, %v2618
        %v2629 = vpack.c.bf16 %v2619, %v2619
        %v2631 = vsel %vm375, %v2519, 0
        %v2634 = vsel %vm379, %v2628, 0
        %v2637 = vsel %vm379, %v2629, 0
        %2639 = vmatprep.subr.bf16.mxu0 0
        %2640 = vmatpush1.bf16.msra.mxu0 0
        %2641 = vmatprep.subr.bf16.mxu0 0
        %2642 = vmatpush1.bf16.msra.mxu0 0
        %2643 = vmatprep.subr.bf16.mxu0 0
        %2644 = vmatpush1.bf16.msra.mxu0 0
        %2645 = vmatprep.subr.bf16.mxu0 %v2637
        %2646 = vmatpush1.bf16.msra.mxu0 %v2634
        %2647 = vmatprep.subr.bf16.mxu0 %v2627
        %2648 = vmatpush1.bf16.msra.mxu0 %v2626
        %2649 = vmatprep.subr.bf16.mxu0 %v2625
        %2650 = vmatpush1.bf16.msra.mxu0 %v2624
        %2651 = vmatprep.subr.bf16.mxu0 %v2623
        %2652 = vmatpush1.bf16.msra.mxu0 %v2622
        %2653 = vmatprep.subr.bf16.mxu0 %v2621
        %2654 = vmatpush1.bf16.msra.mxu0 %v2620
        %2655 = vmatprep.subr.bf16.mxu0 0
        %2656 = vmatpush2.bf16.msra.mxu0 0
        %2657 = vmatprep.subr.bf16.mxu0 0
        %2658 = vmatpush2.bf16.msra.mxu0 0
        %2659 = vmatprep.subr.bf16.mxu0 0
        %2660 = vmatpush2.bf16.msra.mxu0 0
        %2661 = vmatprep.subr.bf16.mxu0 0
        %2662 = vmatpush2.bf16.msra.mxu0 0
        %2663 = vmatprep.subr.bf16.mxu0 0
        %2664 = vmatpush2.bf16.msra.mxu0 0
        %2665 = vmatprep.subr.bf16.mxu0 0
        %2666 = vmatpush2.bf16.msra.mxu0 0
        %2667 = vmatprep.subr.bf16.mxu0 0
        %2668 = vmatpush2.bf16.msra.mxu0 0
        %2669 = vmatprep.subr.bf16.mxu0 0
        %2670 = vmatpush2.bf16.msra.mxu0 0
        %2671 = vmatprep.mubr.bf16.mxu0 0
        %2672 = vmatmul.mubr.bf16.gmra.mxu0 %v2631
        %v2673 = vpop.f32.mrf.mxu0
        %v2674 = vadd.f32 0.0, %v2673
        %v2675 = vpop.f32.mrf.mxu0
        %v2676 = vadd.f32 0.0, %v2675
        %v2677 = vpop.f32.mrf.mxu0
        %v2678 = vpop.f32.mrf.mxu0
        %2679 = vdwg.mxu0
        %v2680 = vadd.f32 %v2674, %v2676
        %2681 = vadd.xlane.f32.xlu0 %v2680
        %v2682 = vpop.xlane.xlu0 %2681
        %v2683 = vmul.f32 %v2682, 0.00390625
        %v2684 = vmul.f32 %v2674, %v2674
        %v2685 = vmul.f32 %v2676, %v2676
        %v2686 = vadd.f32 %v2684, %v2685
        %2687 = vadd.xlane.f32.xlu0 %v2686
        %v2688 = vpop.xlane.xlu0 %2687
        %v2689 = vmul.f32 %v2688, 0.00390625
        %v2690 = vmul.f32 %v2683, %v2683
        %v2691 = vsub.f32 %v2689, %v2690
        %v2692 = vmax.f32 %v2691, 0.0
        %v2693 = vsub.f32 %v2674, %v2683
        %v2694 = vsub.f32 %v2676, %v2683
        %v2695 = vadd.f32 %v2692, 1e-05
        %v2696 = vrsqrt.pop %v2695
        %v2697 = vmul.f32 %v2693, %v2696
        %v2698 = vmul.f32 %v2694, %v2696
        %vm2699 = vcmp.ge.f32.partialorder %v2697, 0.0
        %vm2700 = vcmp.ge.f32.partialorder %v2698, 0.0
        %v2701 = vmul.f32 %v2697, 0.01
        %v2702 = vmul.f32 %v2698, 0.01
        %v2703 = vsel %vm2699, %v2697, %v2701
        %v2704 = vsel %vm2700, %v2698, %v2702
        %v2705 = vld [vmem:[%s1192] sm:$0xf]
        %2706 = vrot.lane.b32.xlu0 %v2703, 1
        %v2707 = vpop.permute.xlu0 %2706
        %2708 = vrot.lane.b32.xlu0 %v2704, 1
        %v2709 = vpop.permute.xlu0 %2708
        %v2710 = vsel %vm250, %v2707, %v2709
        %v2711 = vsel %vm250, %v2709, %v2707
        %2712 = vrot.lane.b32.xlu0 %v2703, 127
        %v2713 = vpop.permute.xlu0 %2712
        %2714 = vrot.lane.b32.xlu0 %v2704, 127
        %v2715 = vpop.permute.xlu0 %2714
        %v2716 = vsel %vm257, %v2713, %v2715
        %v2717 = vsel %vm257, %v2715, %v2713
        %v2718 = vsel %vm262, %v2716, %v2711
        %v2719 = vsel %vm263, %v2717, %v2710
        %v2720 = vsel %vm268, %v2711, %v2716
        %v2721 = vsel %vm269, %v2710, %v2717
        %2722 = vrot.lane.b32.xlu0 %v2718, 16
        %v2723 = vpop.permute.xlu0 %2722
        %2724 = vrot.lane.b32.xlu0 %v2719, 16
        %v2725 = vpop.permute.xlu0 %2724
        %v2726 = vsel %vm239, %v2723, %v2725
        %v2727 = vsel %vm239, %v2725, %v2723
        %2728 = vrot.lane.b32.xlu0 %v2718, 112
        %v2729 = vpop.permute.xlu0 %2728
        %2730 = vrot.lane.b32.xlu0 %v2719, 112
        %v2731 = vpop.permute.xlu0 %2730
        %v2732 = vsel %vm282, %v2729, %v2731
        %v2733 = vsel %vm282, %v2731, %v2729
        %v2734 = vsel %vm287, %v2732, %v2727
        %v2735 = vsel %vm288, %v2733, %v2726
        %v2736 = vsel %vm293, %v2727, %v2732
        %v2737 = vsel %vm294, %v2726, %v2733
        %2738 = vst [vmem:[#allocation2] sm:$0xff] %v2734
        %2739 = vst [vmem:[#allocation2 + $0x8] sm:$0xff] %v2735
        %2740 = vst [vmem:[#allocation2 + $0x30] sm:$0xff] %v2718
        %2741 = vst [vmem:[#allocation2 + $0x38] sm:$0xff] %v2719
        %2742 = vst [vmem:[#allocation2 + $0x60] sm:$0xff] %v2736
        %2743 = vst [vmem:[#allocation2 + $0x68] sm:$0xff] %v2737
        %2744 = vrot.lane.b32.xlu0 %v2703, 16
        %v2745 = vpop.permute.xlu0 %2744
        %2746 = vrot.lane.b32.xlu0 %v2704, 16
        %v2747 = vpop.permute.xlu0 %2746
        %v2748 = vsel %vm239, %v2745, %v2747
        %v2749 = vsel %vm239, %v2747, %v2745
        %2750 = vrot.lane.b32.xlu0 %v2703, 112
        %v2751 = vpop.permute.xlu0 %2750
        %2752 = vrot.lane.b32.xlu0 %v2704, 112
        %v2753 = vpop.permute.xlu0 %2752
        %v2754 = vsel %vm282, %v2751, %v2753
        %v2755 = vsel %vm282, %v2753, %v2751
        %v2756 = vsel %vm287, %v2754, %v2749
        %v2757 = vsel %vm288, %v2755, %v2748
        %v2758 = vsel %vm293, %v2749, %v2754
        %v2759 = vsel %vm294, %v2748, %v2755
        %2760 = vst [vmem:[#allocation2 + $0x10] sm:$0xff] %v2756
        %2761 = vst [vmem:[#allocation2 + $0x18] sm:$0xff] %v2757
        %2762 = vst [vmem:[#allocation2 + $0x40] sm:$0xff] %v2703
        %2763 = vst [vmem:[#allocation2 + $0x48] sm:$0xff] %v2704
        %2764 = vst [vmem:[#allocation2 + $0x70] sm:$0xff] %v2758
        %2765 = vst [vmem:[#allocation2 + $0x78] sm:$0xff] %v2759
        %2766 = vrot.lane.b32.xlu0 %v2720, 16
        %v2767 = vpop.permute.xlu0 %2766
        %2768 = vrot.lane.b32.xlu0 %v2721, 16
        %v2769 = vpop.permute.xlu0 %2768
        %v2770 = vsel %vm239, %v2767, %v2769
        %v2771 = vsel %vm239, %v2769, %v2767
        %2772 = vrot.lane.b32.xlu0 %v2720, 112
        %v2773 = vpop.permute.xlu0 %2772
        %2774 = vrot.lane.b32.xlu0 %v2721, 112
        %v2775 = vpop.permute.xlu0 %2774
        %v2776 = vsel %vm282, %v2773, %v2775
        %v2777 = vsel %vm282, %v2775, %v2773
        %v2778 = vsel %vm287, %v2776, %v2771
        %v2779 = vsel %vm288, %v2777, %v2770
        %v2780 = vsel %vm293, %v2771, %v2776
        %v2781 = vsel %vm294, %v2770, %v2777
        %2782 = vst [vmem:[#allocation2 + $0x20] sm:$0xff] %v2778
        %2783 = vst [vmem:[#allocation2 + $0x28] sm:$0xff] %v2779
        %2784 = vst [vmem:[#allocation2 + $0x50] sm:$0xff] %v2720
        %2785 = vst [vmem:[#allocation2 + $0x58] sm:$0xff] %v2721
        %2786 = vst [vmem:[#allocation2 + $0x80] sm:$0xff] %v2780
        %2787 = vst [vmem:[#allocation2 + $0x88] sm:$0xff] %v2781
        %v2788 = vld [vmem:[#allocation2] sm:$0xff]
        %v2789 = vld [vmem:[#allocation2 + $0x8] sm:$0xff]
        %v2790 = vld [vmem:[#allocation2 + $0x10] sm:$0xff]
        %v2791 = vld [vmem:[#allocation2 + $0x18] sm:$0xff]
        %v2792 = vld [vmem:[#allocation2 + $0x20] sm:$0xff]
        %v2793 = vld [vmem:[#allocation2 + $0x28] sm:$0xff]
        %v2794 = vld [vmem:[#allocation2 + $0x30] sm:$0xff]
        %v2795 = vld [vmem:[#allocation2 + $0x38] sm:$0xff]
        %v2796 = vld [vmem:[#allocation2 + $0x40] sm:$0xff]
        %v2797 = vld [vmem:[#allocation2 + $0x48] sm:$0xff]
        %v2798 = vld [vmem:[#allocation2 + $0x50] sm:$0xff]
        %v2799 = vld [vmem:[#allocation2 + $0x58] sm:$0xff]
        %v2800 = vld [vmem:[#allocation2 + $0x60] sm:$0xff]
        %v2801 = vld [vmem:[#allocation2 + $0x68] sm:$0xff]
        %v2802 = vld [vmem:[#allocation2 + $0x70] sm:$0xff]
        %v2803 = vld [vmem:[#allocation2 + $0x78] sm:$0xff]
        %v2804 = vld [vmem:[#allocation2 + $0x80] sm:$0xff]
        %v2805 = vld [vmem:[#allocation2 + $0x88] sm:$0xff]
        %v2806 = vpack.c.bf16 %v2790, %v2788
        %v2807 = vpack.c.bf16 %v2791, %v2789
        %v2808 = vpack.c.bf16 %v2794, %v2792
        %v2809 = vpack.c.bf16 %v2795, %v2793
        %v2810 = vpack.c.bf16 %v2798, %v2796
        %v2811 = vpack.c.bf16 %v2799, %v2797
        %v2812 = vpack.c.bf16 %v2802, %v2800
        %v2813 = vpack.c.bf16 %v2803, %v2801
        %v2814 = vpack.c.bf16 %v2804, %v2804
        %v2815 = vpack.c.bf16 %v2805, %v2805
        %v2817 = vsel %vm375, %v2705, 0
        %v2820 = vsel %vm379, %v2814, 0
        %v2823 = vsel %vm379, %v2815, 0
        %2825 = vmatprep.subr.bf16.mxu0 0
        %2826 = vmatpush1.bf16.msra.mxu0 0
        %2827 = vmatprep.subr.bf16.mxu0 0
        %2828 = vmatpush1.bf16.msra.mxu0 0
        %2829 = vmatprep.subr.bf16.mxu0 0
        %2830 = vmatpush1.bf16.msra.mxu0 0
        %2831 = vmatprep.subr.bf16.mxu0 %v2823
        %2832 = vmatpush1.bf16.msra.mxu0 %v2820
        %2833 = vmatprep.subr.bf16.mxu0 %v2813
        %2834 = vmatpush1.bf16.msra.mxu0 %v2812
        %2835 = vmatprep.subr.bf16.mxu0 %v2811
        %2836 = vmatpush1.bf16.msra.mxu0 %v2810
        %2837 = vmatprep.subr.bf16.mxu0 %v2809
        %2838 = vmatpush1.bf16.msra.mxu0 %v2808
        %2839 = vmatprep.subr.bf16.mxu0 %v2807
        %2840 = vmatpush1.bf16.msra.mxu0 %v2806
        %2841 = vmatprep.subr.bf16.mxu0 0
        %2842 = vmatpush2.bf16.msra.mxu0 0
        %2843 = vmatprep.subr.bf16.mxu0 0
        %2844 = vmatpush2.bf16.msra.mxu0 0
        %2845 = vmatprep.subr.bf16.mxu0 0
        %2846 = vmatpush2.bf16.msra.mxu0 0
        %2847 = vmatprep.subr.bf16.mxu0 0
        %2848 = vmatpush2.bf16.msra.mxu0 0
        %2849 = vmatprep.subr.bf16.mxu0 0
        %2850 = vmatpush2.bf16.msra.mxu0 0
        %2851 = vmatprep.subr.bf16.mxu0 0
        %2852 = vmatpush2.bf16.msra.mxu0 0
        %2853 = vmatprep.subr.bf16.mxu0 0
        %2854 = vmatpush2.bf16.msra.mxu0 0
        %2855 = vmatprep.subr.bf16.mxu0 0
        %2856 = vmatpush2.bf16.msra.mxu0 0
        %2857 = vmatprep.mubr.bf16.mxu0 0
        %2858 = vmatmul.mubr.bf16.gmra.mxu0 %v2817
        %v2859 = vpop.f32.mrf.mxu0
        %v2860 = vadd.f32 0.0, %v2859
        %v2861 = vpop.f32.mrf.mxu0
        %v2862 = vadd.f32 0.0, %v2861
        %v2863 = vpop.f32.mrf.mxu0
        %v2864 = vpop.f32.mrf.mxu0
        %2865 = vdwg.mxu0
        %v2866 = vadd.f32 %v2860, %v2862
        %2867 = vadd.xlane.f32.xlu0 %v2866
        %v2868 = vpop.xlane.xlu0 %2867
        %v2869 = vmul.f32 %v2868, 0.00390625
        %v2870 = vmul.f32 %v2860, %v2860
        %v2871 = vmul.f32 %v2862, %v2862
        %v2872 = vadd.f32 %v2870, %v2871
        %2873 = vadd.xlane.f32.xlu0 %v2872
        %v2874 = vpop.xlane.xlu0 %2873
        %v2875 = vmul.f32 %v2874, 0.00390625
        %v2876 = vmul.f32 %v2869, %v2869
        %v2877 = vsub.f32 %v2875, %v2876
        %v2878 = vmax.f32 %v2877, 0.0
        %v2879 = vsub.f32 %v2860, %v2869
        %v2880 = vsub.f32 %v2862, %v2869
        %v2881 = vadd.f32 %v2878, 1e-05
        %v2882 = vrsqrt.pop %v2881
        %v2883 = vmul.f32 %v2879, %v2882
        %v2884 = vmul.f32 %v2880, %v2882
        %v2885 = vadd.f32 %v2517, %v2883
        %v2886 = vadd.f32 %v2518, %v2884
        %v2887 = vadd.f32 %v1781, %v2885
        %v2888 = vadd.f32 %v1782, %v2886
        %v2889 = vadd.f32 %v2887, %v2888
        %2890 = vadd.xlane.f32.xlu0 %v2889
        %v2891 = vpop.xlane.xlu0 %2890
        %v2892 = vmul.f32 %v2891, 0.00390625
        %v2893 = vmul.f32 %v2887, %v2887
        %v2894 = vmul.f32 %v2888, %v2888
        %v2895 = vadd.f32 %v2893, %v2894
        %2896 = vadd.xlane.f32.xlu0 %v2895
        %v2897 = vpop.xlane.xlu0 %2896
        %v2898 = vmul.f32 %v2897, 0.00390625
        %v2899 = vmul.f32 %v2892, %v2892
        %v2900 = vsub.f32 %v2898, %v2899
        %v2901 = vmax.f32 %v2900, 0.0
        %v2902 = vsub.f32 %v2887, %v2892
        %v2903 = vsub.f32 %v2888, %v2892
        %v2904 = vadd.f32 %v2901, 1e-06
        %v2905 = vrsqrt.pop %v2904
        %v2906 = vmul.f32 %v2902, %v2905
        %v2907 = vmul.f32 %v2903, %v2905
        %2908 = vrot.lane.b32.xlu0 %v2906, 1
        %v2909 = vpop.permute.xlu0 %2908
        %2910 = vrot.lane.b32.xlu0 %v2907, 1
        %v2911 = vpop.permute.xlu0 %2910
        %v2912 = vsel %vm250, %v2909, %v2911
        %v2913 = vsel %vm250, %v2911, %v2909
        %2914 = vrot.lane.b32.xlu0 %v2906, 127
        %v2915 = vpop.permute.xlu0 %2914
        %2916 = vrot.lane.b32.xlu0 %v2907, 127
        %v2917 = vpop.permute.xlu0 %2916
        %v2918 = vsel %vm257, %v2915, %v2917
        %v2919 = vsel %vm257, %v2917, %v2915
        %v2920 = vsel %vm262, %v2918, %v2913
        %v2921 = vsel %vm263, %v2919, %v2912
        %v2922 = vsel %vm268, %v2913, %v2918
        %v2923 = vsel %vm269, %v2912, %v2919
        %2924 = vrot.lane.b32.xlu0 %v2920, 16
        %v2925 = vpop.permute.xlu0 %2924
        %2926 = vrot.lane.b32.xlu0 %v2921, 16
        %v2927 = vpop.permute.xlu0 %2926
        %v2928 = vsel %vm239, %v2925, %v2927
        %v2929 = vsel %vm239, %v2927, %v2925
        %2930 = vrot.lane.b32.xlu0 %v2920, 112
        %v2931 = vpop.permute.xlu0 %2930
        %2932 = vrot.lane.b32.xlu0 %v2921, 112
        %v2933 = vpop.permute.xlu0 %2932
        %v2934 = vsel %vm282, %v2931, %v2933
        %v2935 = vsel %vm282, %v2933, %v2931
        %v2936 = vsel %vm287, %v2934, %v2929
        %v2937 = vsel %vm288, %v2935, %v2928
        %v2938 = vsel %vm293, %v2929, %v2934
        %v2939 = vsel %vm294, %v2928, %v2935
        %2940 = vst [vmem:[#allocation2] sm:$0xff] %v2936
        %2941 = vst [vmem:[#allocation2 + $0x8] sm:$0xff] %v2937
        %2942 = vst [vmem:[#allocation2 + $0x30] sm:$0xff] %v2920
        %2943 = vst [vmem:[#allocation2 + $0x38] sm:$0xff] %v2921
        %2944 = vst [vmem:[#allocation2 + $0x60] sm:$0xff] %v2938
        %2945 = vst [vmem:[#allocation2 + $0x68] sm:$0xff] %v2939
        %2946 = vrot.lane.b32.xlu0 %v2906, 16
        %v2947 = vpop.permute.xlu0 %2946
        %2948 = vrot.lane.b32.xlu0 %v2907, 16
        %v2949 = vpop.permute.xlu0 %2948
        %v2950 = vsel %vm239, %v2947, %v2949
        %v2951 = vsel %vm239, %v2949, %v2947
        %2952 = vrot.lane.b32.xlu0 %v2906, 112
        %v2953 = vpop.permute.xlu0 %2952
        %2954 = vrot.lane.b32.xlu0 %v2907, 112
        %v2955 = vpop.permute.xlu0 %2954
        %v2956 = vsel %vm282, %v2953, %v2955
        %v2957 = vsel %vm282, %v2955, %v2953
        %v2958 = vsel %vm287, %v2956, %v2951
        %v2959 = vsel %vm288, %v2957, %v2950
        %v2960 = vsel %vm293, %v2951, %v2956
        %v2961 = vsel %vm294, %v2950, %v2957
        %2962 = vst [vmem:[#allocation2 + $0x10] sm:$0xff] %v2958
        %2963 = vst [vmem:[#allocation2 + $0x18] sm:$0xff] %v2959
        %2964 = vst [vmem:[#allocation2 + $0x40] sm:$0xff] %v2906
        %2965 = vst [vmem:[#allocation2 + $0x48] sm:$0xff] %v2907
        %2966 = vst [vmem:[#allocation2 + $0x70] sm:$0xff] %v2960
        %2967 = vst [vmem:[#allocation2 + $0x78] sm:$0xff] %v2961
        %2968 = vrot.lane.b32.xlu0 %v2922, 16
        %v2969 = vpop.permute.xlu0 %2968
        %2970 = vrot.lane.b32.xlu0 %v2923, 16
        %v2971 = vpop.permute.xlu0 %2970
        %v2972 = vsel %vm239, %v2969, %v2971
        %v2973 = vsel %vm239, %v2971, %v2969
        %2974 = vrot.lane.b32.xlu0 %v2922, 112
        %v2975 = vpop.permute.xlu0 %2974
        %2976 = vrot.lane.b32.xlu0 %v2923, 112
        %v2977 = vpop.permute.xlu0 %2976
        %v2978 = vsel %vm282, %v2975, %v2977
        %v2979 = vsel %vm282, %v2977, %v2975
        %v2980 = vsel %vm287, %v2978, %v2973
        %v2981 = vsel %vm288, %v2979, %v2972
        %v2982 = vsel %vm293, %v2973, %v2978
        %v2983 = vsel %vm294, %v2972, %v2979
        %2984 = vst [vmem:[#allocation2 + $0x20] sm:$0xff] %v2980
        %2985 = vst [vmem:[#allocation2 + $0x28] sm:$0xff] %v2981
        %2986 = vst [vmem:[#allocation2 + $0x50] sm:$0xff] %v2922
        %2987 = vst [vmem:[#allocation2 + $0x58] sm:$0xff] %v2923
        %2988 = vst [vmem:[#allocation2 + $0x80] sm:$0xff] %v2982
        %2989 = vst [vmem:[#allocation2 + $0x88] sm:$0xff] %v2983
        %v2990 = vld [vmem:[#allocation2] sm:$0xff]
        %v2991 = vld [vmem:[#allocation2 + $0x8] sm:$0xff]
        %v2992 = vld [vmem:[#allocation2 + $0x10] sm:$0xff]
        %v2993 = vld [vmem:[#allocation2 + $0x18] sm:$0xff]
        %v2994 = vld [vmem:[#allocation2 + $0x20] sm:$0xff]
        %v2995 = vld [vmem:[#allocation2 + $0x28] sm:$0xff]
        %v2996 = vld [vmem:[#allocation2 + $0x30] sm:$0xff]
        %v2997 = vld [vmem:[#allocation2 + $0x38] sm:$0xff]
        %v2998 = vld [vmem:[#allocation2 + $0x40] sm:$0xff]
        %v2999 = vld [vmem:[#allocation2 + $0x48] sm:$0xff]
        %v3000 = vld [vmem:[#allocation2 + $0x50] sm:$0xff]
        %v3001 = vld [vmem:[#allocation2 + $0x58] sm:$0xff]
        %v3002 = vld [vmem:[#allocation2 + $0x60] sm:$0xff]
        %v3003 = vld [vmem:[#allocation2 + $0x68] sm:$0xff]
        %v3004 = vld [vmem:[#allocation2 + $0x70] sm:$0xff]
        %v3005 = vld [vmem:[#allocation2 + $0x78] sm:$0xff]
        %v3006 = vld [vmem:[#allocation2 + $0x80] sm:$0xff]
        %v3007 = vld [vmem:[#allocation2 + $0x88] sm:$0xff]
        %v3008 = vpack.c.bf16 %v2992, %v2990
        %v3009 = vpack.c.bf16 %v2993, %v2991
        %v3010 = vpack.c.bf16 %v2996, %v2994
        %v3011 = vpack.c.bf16 %v2997, %v2995
        %v3012 = vpack.c.bf16 %v3000, %v2998
        %v3013 = vpack.c.bf16 %v3001, %v2999
        %v3014 = vpack.c.bf16 %v3004, %v3002
        %v3015 = vpack.c.bf16 %v3005, %v3003
        %v3016 = vpack.c.bf16 %v3006, %v3006
        %v3017 = vpack.c.bf16 %v3007, %v3007
        %v3018 = vld [vmem:[%s4] sm:$0xf]
        %v3019 = vld [vmem:[%s4 + $0x4] sm:$0xf]
        %v3020 = vld [vmem:[%s4 + $0x8] sm:$0xf]
        %v3021 = vld [vmem:[%s4 + $0xc] sm:$0xf]
        %v3022 = vld [vmem:[%s4 + $0x10] sm:$0xf]
        %v3023 = vld [vmem:[%s4 + $0x14] sm:$0xf]
        %v3024 = vld [vmem:[%s4 + $0x18] sm:$0xf]
        %v3025 = vld [vmem:[%s4 + $0x1c] sm:$0xf]
        %v3026 = vld [vmem:[%s4 + $0x20] sm:$0xf]
        %v3027 = vld [vmem:[%s4 + $0x24] sm:$0xf]
        %v3028 = vld [vmem:[%s4 + $0x28] sm:$0xf]
        %v3029 = vld [vmem:[%s4 + $0x2c] sm:$0xf]
        %v3030 = vld [vmem:[%s4 + $0x30] sm:$0xf]
        %v3031 = vld [vmem:[%s4 + $0x34] sm:$0xf]
        %v3032 = vld [vmem:[%s4 + $0x38] sm:$0xf]
        %v3033 = vld [vmem:[%s4 + $0x3c] sm:$0xf]
        %v3034 = vld [vmem:[%s4 + $0x40] sm:$0xf]
        %v3035 = vld [vmem:[%s4 + $0x44] sm:$0xf]
        %v3036 = vld [vmem:[%s4 + $0x48] sm:$0xf]
        %v3037 = vld [vmem:[%s4 + $0x4c] sm:$0xf]
        %v3038 = vld [vmem:[%s4 + $0x50] sm:$0xf]
        %v3039 = vld [vmem:[%s4 + $0x54] sm:$0xf]
        %v3040 = vld [vmem:[%s4 + $0x58] sm:$0xf]
        %v3041 = vld [vmem:[%s4 + $0x5c] sm:$0xf]
        %v3042 = vld [vmem:[%s4 + $0x60] sm:$0xf]
        %v3043 = vld [vmem:[%s4 + $0x64] sm:$0xf]
        %v3044 = vld [vmem:[%s4 + $0x68] sm:$0xf]
        %v3045 = vld [vmem:[%s4 + $0x6c] sm:$0xf]
        %v3046 = vld [vmem:[%s4 + $0x70] sm:$0xf]
        %v3047 = vld [vmem:[%s4 + $0x74] sm:$0xf]
        %v3048 = vld [vmem:[%s4 + $0x78] sm:$0xf]
        %v3049 = vld [vmem:[%s4 + $0x7c] sm:$0xf]
        %v3082 = vunpack.c.l.b16 %v3018
        %v3083 = vunpack.c.l.b16 %v3019
        %v3084 = vunpack.c.l.b16 %v3020
        %v3085 = vunpack.c.l.b16 %v3021
        %v3086 = vunpack.c.l.b16 %v3022
        %v3087 = vunpack.c.l.b16 %v3023
        %v3088 = vunpack.c.l.b16 %v3024
        %v3089 = vunpack.c.l.b16 %v3025
        %v3090 = vunpack.c.l.b16 %v3026
        %v3091 = vunpack.c.l.b16 %v3027
        %v3092 = vunpack.c.l.b16 %v3028
        %v3093 = vunpack.c.l.b16 %v3029
        %v3094 = vunpack.c.l.b16 %v3030
        %v3095 = vunpack.c.l.b16 %v3031
        %v3096 = vunpack.c.l.b16 %v3032
        %v3097 = vunpack.c.l.b16 %v3033
        %v3098 = vunpack.c.l.b16 %v3034
        %v3099 = vunpack.c.l.b16 %v3035
        %v3100 = vunpack.c.l.b16 %v3036
        %v3101 = vunpack.c.l.b16 %v3037
        %v3102 = vunpack.c.l.b16 %v3038
        %v3103 = vunpack.c.l.b16 %v3039
        %v3104 = vunpack.c.l.b16 %v3040
        %v3105 = vunpack.c.l.b16 %v3041
        %v3106 = vunpack.c.l.b16 %v3042
        %v3107 = vunpack.c.l.b16 %v3043
        %v3108 = vunpack.c.l.b16 %v3044
        %v3109 = vunpack.c.l.b16 %v3045
        %v3110 = vunpack.c.l.b16 %v3046
        %v3111 = vunpack.c.l.b16 %v3047
        %v3112 = vunpack.c.l.b16 %v3048
        %v3113 = vunpack.c.l.b16 %v3049
        %v3114 = vpack.c.b16 %v3083, %v3082
        %v3115 = vpack.c.b16 %v3085, %v3084
        %v3116 = vpack.c.b16 %v3087, %v3086
        %v3117 = vpack.c.b16 %v3089, %v3088
        %v3118 = vpack.c.b16 %v3091, %v3090
        %v3119 = vpack.c.b16 %v3093, %v3092
        %v3120 = vpack.c.b16 %v3095, %v3094
        %v3121 = vpack.c.b16 %v3097, %v3096
        %v3122 = vpack.c.b16 %v3099, %v3098
        %v3123 = vpack.c.b16 %v3101, %v3100
        %v3124 = vpack.c.b16 %v3103, %v3102
        %v3125 = vpack.c.b16 %v3105, %v3104
        %v3126 = vpack.c.b16 %v3107, %v3106
        %v3127 = vpack.c.b16 %v3109, %v3108
        %v3128 = vpack.c.b16 %v3111, %v3110
        %v3129 = vpack.c.b16 %v3113, %v3112
        %3146 = vmatprep.subr.bf16.mxu0 0
        %3147 = vmatpush1.bf16.msra.mxu0 %v3121
        %3148 = vmatprep.subr.bf16.mxu0 0
        %3149 = vmatpush1.bf16.msra.mxu0 %v3120
        %3150 = vmatprep.subr.bf16.mxu0 0
        %3151 = vmatpush1.bf16.msra.mxu0 %v3119
        %3152 = vmatprep.subr.bf16.mxu0 0
        %3153 = vmatpush1.bf16.msra.mxu0 %v3118
        %3154 = vmatprep.subr.bf16.mxu0 0
        %3155 = vmatpush1.bf16.msra.mxu0 %v3117
        %3156 = vmatprep.subr.bf16.mxu0 0
        %3157 = vmatpush1.bf16.msra.mxu0 %v3116
        %3158 = vmatprep.subr.bf16.mxu0 0
        %3159 = vmatpush1.bf16.msra.mxu0 %v3115
        %3160 = vmatprep.subr.bf16.mxu0 0
        %3161 = vmatpush1.bf16.msra.mxu0 %v3114
        %3162 = vmatprep.subr.bf16.mxu0 0
        %3163 = vmatpush2.bf16.msra.mxu0 %v3129
        %3164 = vmatprep.subr.bf16.mxu0 0
        %3165 = vmatpush2.bf16.msra.mxu0 %v3128
        %3166 = vmatprep.subr.bf16.mxu0 0
        %3167 = vmatpush2.bf16.msra.mxu0 %v3127
        %3168 = vmatprep.subr.bf16.mxu0 0
        %3169 = vmatpush2.bf16.msra.mxu0 %v3126
        %3170 = vmatprep.subr.bf16.mxu0 0
        %3171 = vmatpush2.bf16.msra.mxu0 %v3125
        %3172 = vmatprep.subr.bf16.mxu0 0
        %3173 = vmatpush2.bf16.msra.mxu0 %v3124
        %3174 = vmatprep.subr.bf16.mxu0 0
        %3175 = vmatpush2.bf16.msra.mxu0 %v3123
        %3176 = vmatprep.subr.bf16.mxu0 0
        %3177 = vmatpush2.bf16.msra.mxu0 %v3122
        %3178 = vmatprep.mubr.bf16.mxu0 %v3009
        %3179 = vmatmul.mubr.bf16.gmra.mxu0 %v3008
        %v3180 = vpop.f32.mrf.mxu0
        %v3181 = vadd.f32 0.0, %v3180
        %v3182 = vpop.f32.mrf.mxu0
        %v3183 = vpop.f32.mrf.mxu0
        %v3184 = vadd.f32 0.0, %v3183
        %v3185 = vpop.f32.mrf.mxu0
        %3186 = vmatprep.mubr.bf16.mxu0 %v3011
        %3187 = vmatmul.mubr.bf16.gmra.mxu0 %v3010
        %v3188 = vpop.f32.mrf.mxu0
        %v3189 = vadd.f32 0.0, %v3188
        %v3190 = vpop.f32.mrf.mxu0
        %v3191 = vpop.f32.mrf.mxu0
        %v3192 = vadd.f32 0.0, %v3191
        %v3193 = vpop.f32.mrf.mxu0
        %3194 = vmatprep.mubr.bf16.mxu0 %v3013
        %3195 = vmatmul.mubr.bf16.gmra.mxu0 %v3012
        %v3196 = vpop.f32.mrf.mxu0
        %v3197 = vadd.f32 0.0, %v3196
        %v3198 = vpop.f32.mrf.mxu0
        %v3199 = vpop.f32.mrf.mxu0
        %v3200 = vadd.f32 0.0, %v3199
        %v3201 = vpop.f32.mrf.mxu0
        %3202 = vmatprep.mubr.bf16.mxu0 %v3015
        %3203 = vmatmul.mubr.bf16.gmra.mxu0 %v3014
        %v3204 = vpop.f32.mrf.mxu0
        %v3205 = vadd.f32 0.0, %v3204
        %v3206 = vpop.f32.mrf.mxu0
        %v3207 = vpop.f32.mrf.mxu0
        %v3208 = vadd.f32 0.0, %v3207
        %v3209 = vpop.f32.mrf.mxu0
        %3210 = vmatprep.mubr.bf16.mxu0 %v3017
        %3211 = vmatmul.mubr.bf16.gmra.mxu0 %v3016
        %v3212 = vpop.f32.mrf.mxu0
        %v3213 = vadd.f32 0.0, %v3212
        %v3214 = vpop.f32.mrf.mxu0
        %v3215 = vpop.f32.mrf.mxu0
        %v3216 = vpop.f32.mrf.mxu0
        %3217 = vdwg.mxu0
        %v3218 = vld [vmem:[%s2] sm:$0xf]
        %v3219 = vld [vmem:[%s2 + $0x4] sm:$0xf]
        %v3220 = vpack.c.bf16 %v3184, %v3181
        %v3221 = vpack.c.bf16 %v3192, %v3189
        %v3222 = vpack.c.bf16 %v3200, %v3197
        %v3223 = vpack.c.bf16 %v3208, %v3205
        %v3224 = vpack.c.bf16 %v3213, %v3213
        %v3225 = vld [vmem:[%s3] sm:$0xff]
        %v3226 = vld [vmem:[%s3 + $0x8] sm:$0xff]
        %3228 = vset.pattern.permute.xlu0 0
        %3229 = vperm.xlu0 %3228, %v3225
        %v3230 = vpop.permute.xlu0 %3229
        %3233 = vset.pattern.permute.xlu0 0
        %3234 = vperm.xlu0 %3233, %v3226
        %v3235 = vpop.permute.xlu0 %3234
        %v3239 = vunpack.c.l.b16 %v3218
        %v3240 = vunpack.c.l.b16 %v3219
        %v3241 = vpack.c.b16 %v3240, %v3239
        %v3243 = vsel %vm375, %v3241, 0
        %v3246 = vsel %vm379, %v3224, 0
        %3248 = vmatprep.subr.bf16.mxu0 0
        %3249 = vmatpush1.bf16.msra.mxu0 0
        %3250 = vmatprep.subr.bf16.mxu0 0
        %3251 = vmatpush1.bf16.msra.mxu0 0
        %3252 = vmatprep.subr.bf16.mxu0 0
        %3253 = vmatpush1.bf16.msra.mxu0 0
        %3254 = vmatprep.subr.bf16.mxu0 0
        %3255 = vmatpush1.bf16.msra.mxu0 %v3246
        %3256 = vmatprep.subr.bf16.mxu0 0
        %3257 = vmatpush1.bf16.msra.mxu0 %v3223
        %3258 = vmatprep.subr.bf16.mxu0 0
        %3259 = vmatpush1.bf16.msra.mxu0 %v3222
        %3260 = vmatprep.subr.bf16.mxu0 0
        %3261 = vmatpush1.bf16.msra.mxu0 %v3221
        %3262 = vmatprep.subr.bf16.mxu0 0
        %3263 = vmatpush1.bf16.msra.mxu0 %v3220
        %3264 = vmatprep.subr.bf16.mxu0 0
        %3265 = vmatpush2.bf16.msra.mxu0 0
        %3266 = vmatprep.subr.bf16.mxu0 0
        %3267 = vmatpush2.bf16.msra.mxu0 0
        %3268 = vmatprep.subr.bf16.mxu0 0
        %3269 = vmatpush2.bf16.msra.mxu0 0
        %3270 = vmatprep.subr.bf16.mxu0 0
        %3271 = vmatpush2.bf16.msra.mxu0 0
        %3272 = vmatprep.subr.bf16.mxu0 0
        %3273 = vmatpush2.bf16.msra.mxu0 0
        %3274 = vmatprep.subr.bf16.mxu0 0
        %3275 = vmatpush2.bf16.msra.mxu0 0
        %3276 = vmatprep.subr.bf16.mxu0 0
        %3277 = vmatpush2.bf16.msra.mxu0 0
        %3278 = vmatprep.subr.bf16.mxu0 0
        %3279 = vmatpush2.bf16.msra.mxu0 0
        %3280 = vmatprep.mubr.bf16.mxu0 0
        %3281 = vmatmul.mubr.bf16.gmra.mxu0 %v3243
        %v3282 = vpop.f32.mrf.mxu0
        %v3283 = vadd.f32 %v3230, %v3282
        %v3284 = vpop.f32.mrf.mxu0
        %v3285 = vpop.f32.mrf.mxu0
        %v3286 = vadd.f32 %v3235, %v3285
        %v3287 = vpop.f32.mrf.mxu0
        %3288 = vdwg.mxu0
        %s3289 = scalar_lea.vmem %s220, 16 [#allocation3]
        %3290 = vst.msk [vmem:[%s3289] sm:$0xff] %vm1777, %v3283
        %3291 = vst.msk [vmem:[%s3289 + $0x8] sm:$0xff] %vm1777, %v3286
        %s3292 = sand.u32 %s137, 1
        %s3293 = scalar_lea.sflag [#allocation4], %s3292
        %s3294 = sand.u32 %s137, 1
        %s3295 = smul.addr %s3294, 32
        %s3296 = scalar_lea.vmem [#allocation3], %s3295
        // Predicated region
        $region41: #{tpu_custom_call.1} parent=39 // pred_check
          %p3297 = pneg %p147
        $region42: #{tpu_custom_call.1} parent=39 // pred_check_branch
          %3299 = sbr.rel (%p3297) target = $region44
        $region43: #{tpu_custom_call.1} parent=39 // pred_region
          %s3300 = smul.u32 2, %s19
          %s3302 = ssub.s32 512, 512
          %3303 = vsyncadd %s3293, %s3302
          %s3304 = smul.addr %s3300, 2
          %s3305 = smul.addr %s3304, 128
          %s3306 = scalar_lea.hbm %s5, %s3305
          %s3307 = sshll.u32 %s3296, 4
          %s3308 = int_to_ptr.vmem [resolvable:$true] %s3307
          %3313 = dma.vmem_to_hbm [thread:$0]  %s3308, 512, %s3306, %s3293, 128, 128, 8
        $region44: #{tpu_custom_call.1} parent=39 // pred_fallthru
          _
      $region40: #{tpu_custom_call.1} parent=5 // pred_fallthru
        _
      %p3314 = scmp.le.s32.totalorder 2, %s14
      // Predicated region
      $region45: #{tpu_custom_call.1} parent=5 // pred_check
        %p3315 = pneg %p3314
      $region46: #{tpu_custom_call.1} parent=5 // pred_check_branch
        %3317 = sbr.rel (%p3315) target = $region48
      $region47: #{tpu_custom_call.1} parent=5 // pred_region
        %s3318 = ssub.s32 %s14, 2
        // Predicated region
        $region49: #{tpu_custom_call.1} parent=47 // pred_check
          %p3319 = pneg %p153
        $region50: #{tpu_custom_call.1} parent=47 // pred_check_branch
          %3321 = sbr.rel (%p3319) target = $region52
        $region51: #{tpu_custom_call.1} parent=47 // pred_region
          %s3322 = sand.u32 %s138, 1
          %s3323 = scalar_lea.sflag [#allocation4], %s3322
          %s3324 = sand.u32 %s138, 1
          %s3325 = smul.addr %s3324, 32
          %s3326 = scalar_lea.vmem [#allocation3], %s3325
          %3327 = dma.done %s3323, 512
        $region52: #{tpu_custom_call.1} parent=47 // pred_fallthru
          _
      $region48: #{tpu_custom_call.1} parent=5 // pred_fallthru
        _
    $region6: #{tpu_custom_call.1} parent=1 // loop_footer
      %s18 = sadd.s32 1, %s14
    $region7: #{tpu_custom_call.1} parent=1 // loop_footer_branch
      %13 = sbr.rel target = $region3
    $region8: #{tpu_custom_call.1} parent=1 // loop_exit
      _
    %3328 = vsyncpa [#allocation4], 1
    %s3329 = scalar_lea.sflag [#allocation4], 1
    %3330 = vsyncpa %s3329, 1

</llo_original>
